<compile_context>
chip_gen: v7x
topology: tpu7x:2x2x1
jax: 0.10.0
libtpu: 0.0.40
codegen_flags: <defaults>
</compile_context>

<pallas_src>
import math
import functools

import jax
import jax.numpy as jnp
from jax import lax
from jax.experimental import pallas as pl

F32 = jnp.float32
LN_EPS = 1e-5


# ----------------------- in-kernel helpers (values) -----------------------

def _layer_norm_bsd(x):
    # F.layer_norm(x, x.shape[1:]) on (B, S, D): joint (S, D) stats per batch,
    # no affine, eps=1e-5 (PyTorch default).
    mean = jnp.mean(jnp.mean(x, axis=2, keepdims=True), axis=1, keepdims=True)
    d = x - mean
    var = jnp.mean(jnp.mean(d * d, axis=2, keepdims=True), axis=1, keepdims=True)
    return d * lax.rsqrt(var + LN_EPS)


def _attn_heads(q2, k2, v2, B, Sq, Skv, num_heads, dk):
    # q2: (B*Sq, D), k2/v2: (B*Skv, D)  ->  (B, H*dk, Sq)
    # Per-head softmax(Q K^T / sqrt(dk)) V, emitted already transposed per head
    # ((dk, Sq) layout) so the torch `transpose(-1,-2).contiguous()` is free.
    scale = 1.0 / math.sqrt(dk)
    pieces = []
    for h in range(num_heads):
        qh = q2[:, h * dk:(h + 1) * dk].reshape(B, Sq, dk)
        kh = k2[:, h * dk:(h + 1) * dk].reshape(B, Skv, dk)
        vh = v2[:, h * dk:(h + 1) * dk].reshape(B, Skv, dk)
        # scores[b,q,k] = sum_d qh[b,q,d] * kh[b,k,d]  (no K transpose)
        s = lax.dot_general(qh, kh, (((2,), (2,)), ((0,), (0,))),
                            preferred_element_type=F32) * scale
        s = s - jnp.max(s, axis=-1, keepdims=True)
        e = jnp.exp(s)
        p = e * pl.reciprocal(jnp.sum(e, axis=-1, keepdims=True), approx=True)
        # a_t[b,d,q] = sum_k vh[b,k,d] * p[b,q,k]  (per-head output, transposed)
        a_t = lax.dot_general(vh, p, (((1,), (2,)), ((0,), (0,))),
                              preferred_element_type=F32)
        pieces.append(a_t)
    return jnp.concatenate(pieces, axis=1)          # (B, H*dk, Sq)


# ------------------------------- kernels -------------------------------

def _self_attn_heads_kernel(x_ref, w_qkv_ref, b_qkv_ref, heads_ref, *, num_heads):
    B, S, D = x_ref.shape
    dk = D // num_heads
    x2 = x_ref[...].reshape(B * S, D)
    qkv = jnp.dot(x2, w_qkv_ref[...], preferred_element_type=F32) + b_qkv_ref[...]
    heads_ref[...] = _attn_heads(qkv[:, 0:D], qkv[:, D:2 * D], qkv[:, 2 * D:3 * D],
                                 B, S, S, num_heads, dk)


def _proj_res_ln_ffn_kernel(scr_ref, res_ref, w_o_ref, b_o_ref,
                            w1_ref, b1_ref, w2_ref, b2_ref, o_ref):
    # W_o projection + residual + LayerNorm, then FFN + residual + LayerNorm.
    B, S, D = res_ref.shape
    t = jnp.dot(scr_ref[...].reshape(B * S, D), w_o_ref[...],
                preferred_element_type=F32) + b_o_ref[...]
    x1 = _layer_norm_bsd(t.reshape(B, S, D) + res_ref[...])
    h = jnp.dot(x1.reshape(B * S, D), w1_ref[...],
                preferred_element_type=F32) + b1_ref[...]
    h = jnp.maximum(h, 0.0)
    y = jnp.dot(h, w2_ref[...], preferred_element_type=F32) + b2_ref[...]
    o_ref[...] = _layer_norm_bsd(y.reshape(B, S, D) + x1)


def _proj_res_ln_cross_heads_kernel(scr_ref, res_ref, w_o_ref, b_o_ref,
                                    enc_ref, w_q_ref, b_q_ref, w_kv_ref, b_kv_ref,
                                    x1_ref, heads_ref, *, num_heads):
    # Self-attn W_o projection + residual + LayerNorm, then cross-attention
    # Q projection (from the new state) + fused KV projection (from enc_out)
    # + per-head attention.
    B, S, D = res_ref.shape
    Se = enc_ref.shape[1]
    dk = D // num_heads
    t = jnp.dot(scr_ref[...].reshape(B * S, D), w_o_ref[...],
                preferred_element_type=F32) + b_o_ref[...]
    x1 = _layer_norm_bsd(t.reshape(B, S, D) + res_ref[...])
    x1_ref[...] = x1
    q2 = jnp.dot(x1.reshape(B * S, D), w_q_ref[...],
                 preferred_element_type=F32) + b_q_ref[...]
    kv = jnp.dot(enc_ref[...].reshape(B * Se, D), w_kv_ref[...],
                 preferred_element_type=F32) + b_kv_ref[...]
    heads_ref[...] = _attn_heads(q2, kv[:, 0:D], kv[:, D:2 * D],
                                 B, S, Se, num_heads, dk)


def _out_proj_softmax_kernel(x_ref, w_ref, b_ref, o_ref):
    B, S, D = x_ref.shape
    V = w_ref.shape[1]
    logits = jnp.dot(x_ref[...].reshape(B * S, D), w_ref[...],
                     preferred_element_type=F32) + b_ref[...]
    logits = logits - jnp.max(logits, axis=-1, keepdims=True)
    e = jnp.exp(logits)
    p = e / jnp.sum(e, axis=-1, keepdims=True)   # exact divide for final probs
    o_ref[...] = p.reshape(B, S, V)


# ------------------------------ call helper ------------------------------

def _pcall(kernel, out_shapes, *inputs):
    multi = isinstance(out_shapes, (list, tuple))
    outs = tuple(out_shapes) if multi else (out_shapes,)

    def _spec(a):
        zero = (0,) * len(a.shape)
        return pl.BlockSpec(a.shape, lambda i, _z=zero: _z)

    return pl.pallas_call(
        kernel,
        out_shape=tuple(outs) if multi else out_shapes,
        grid=(1,),
        in_specs=[_spec(x) for x in inputs],
        out_specs=tuple(_spec(o) for o in outs) if multi else _spec(out_shapes),
    )(*inputs)


# ------------------------------ model glue ------------------------------

def encoder_layer(lp, x, num_heads):
    B, S, D = x.shape
    heads = _pcall(functools.partial(_self_attn_heads_kernel, num_heads=num_heads),
                   jax.ShapeDtypeStruct((B, D, S), F32),
                   x, lp["w_qkv"], lp["b_qkv"])
    # torch: attn.transpose(-1,-2).contiguous().view(B, S, D)  (free reshape here)
    scr = heads.reshape(B, S, D)
    return _pcall(_proj_res_ln_ffn_kernel,
                  jax.ShapeDtypeStruct((B, S, D), F32),
                  scr, x, lp["w_o"], lp["b_o"],
                  lp["w1"], lp["b1"], lp["w2"], lp["b2"])


def decoder_layer(lp, x, enc_out, num_heads):
    B, S, D = x.shape
    heads = _pcall(functools.partial(_self_attn_heads_kernel, num_heads=num_heads),
                   jax.ShapeDtypeStruct((B, D, S), F32),
                   x, lp["sa_w_qkv"], lp["sa_b_qkv"])
    scr = heads.reshape(B, S, D)
    x1, cheads = _pcall(
        functools.partial(_proj_res_ln_cross_heads_kernel, num_heads=num_heads),
        (jax.ShapeDtypeStruct((B, S, D), F32),
         jax.ShapeDtypeStruct((B, D, S), F32)),
        scr, x, lp["sa_w_o"], lp["sa_b_o"],
        enc_out, lp["ca_w_q"], lp["ca_b_q"], lp["ca_w_kv"], lp["ca_b_kv"])
    cscr = cheads.reshape(B, S, D)
    return _pcall(_proj_res_ln_ffn_kernel,
                  jax.ShapeDtypeStruct((B, S, D), F32),
                  cscr, x1, lp["ca_w_o"], lp["ca_b_o"],
                  lp["w1"], lp["b1"], lp["w2"], lp["b2"])


def transformer_forward(params, src, tgt, *, num_heads):
    d_model = params["src_emb"].shape[1]
    scale = math.sqrt(d_model)
    pe = params["pe"]

    x = params["src_emb"][src] * scale + pe[:, :src.shape[1], :]   # dropout = id
    for lp in params["encoder"]:
        x = encoder_layer(lp, x, num_heads)
    enc_out = x

    y = params["tgt_emb"][tgt] * scale + pe[:, :tgt.shape[1], :]
    for lp in params["decoder"]:
        y = decoder_layer(lp, y, enc_out, num_heads)

    B, S, _ = y.shape
    V = params["out_w"].shape[1]
    return _pcall(_out_proj_softmax_kernel,
                  jax.ShapeDtypeStruct((B, S, V), F32),
                  y, params["out_w"], params["out_b"])


# --------------------------------- init ---------------------------------

def make_positional_encoding(seq_length, d_model):
    denom = jnp.power(10000.0,
                      jnp.arange(0, d_model, 2, dtype=F32) / d_model)
    positions = jnp.arange(seq_length, dtype=F32)[:, None]
    values = positions / denom
    pe = jnp.zeros((seq_length, d_model), dtype=F32)
    pe = pe.at[:, 0::2].set(jnp.sin(values))
    pe = pe.at[:, 1::2].set(jnp.cos(values))
    return pe[None]                          # (1, seq_length, d_model)


def _init_linear(key, in_dim, out_dim, scale=0.05):
    # Stored pre-transposed: [in_features, out_features]; bias as (1, out).
    kw, kb = jax.random.split(key)
    w = scale * jax.random.normal(kw, (in_dim, out_dim), dtype=F32)
    b = scale * jax.random.normal(kb, (1, out_dim), dtype=F32)
    return w, b


def _init_self_mha(key, d_model, prefix=""):
    kq, kk, kv, ko = jax.random.split(key, 4)
    wq, bq = _init_linear(kq, d_model, d_model)
    wk, bk = _init_linear(kk, d_model, d_model)
    wv, bv = _init_linear(kv, d_model, d_model)
    wo, bo = _init_linear(ko, d_model, d_model)
    return {prefix + "w_qkv": jnp.concatenate([wq, wk, wv], axis=1),
            prefix + "b_qkv": jnp.concatenate([bq, bk, bv], axis=1),
            prefix + "w_o": wo, prefix + "b_o": bo}


def _init_cross_mha(key, d_model, prefix="ca_"):
    kq, kk, kv, ko = jax.random.split(key, 4)
    wq, bq = _init_linear(kq, d_model, d_model)
    wk, bk = _init_linear(kk, d_model, d_model)
    wv, bv = _init_linear(kv, d_model, d_model)
    wo, bo = _init_linear(ko, d_model, d_model)
    return {prefix + "w_q": wq, prefix + "b_q": bq,
            prefix + "w_kv": jnp.concatenate([wk, wv], axis=1),
            prefix + "b_kv": jnp.concatenate([bk, bv], axis=1),
            prefix + "w_o": wo, prefix + "b_o": bo}


def _init_ff(key, d_model, d_ff):
    k1, k2 = jax.random.split(key)
    w1, b1 = _init_linear(k1, d_model, d_ff)
    w2, b2 = _init_linear(k2, d_ff, d_model)
    return {"w1": w1, "b1": b1, "w2": w2, "b2": b2}


def init_transformer(key, src_vocab, tgt_vocab, d_model, num_heads,
                     seq_length, num_layers, d_ff):
    del num_heads  # static, passed to forward
    keys = jax.random.split(key, 5 + 2 * num_layers)
    params = {
        "pe": make_positional_encoding(seq_length, d_model),
        "src_emb": 0.05 * jax.random.normal(keys[0], (src_vocab, d_model), dtype=F32),
        "tgt_emb": 0.05 * jax.random.normal(keys[1], (tgt_vocab, d_model), dtype=F32),
    }
    enc_layers, dec_layers = [], []
    for i in range(num_layers):
        ka, kf = jax.random.split(keys[2 + i])
        lp = _init_self_mha(ka, d_model)
        lp.update(_init_ff(kf, d_model, d_ff))
        enc_layers.append(lp)
    for i in range(num_layers):
        ks, kc, kf = jax.random.split(keys[2 + num_layers + i], 3)
        lp = _init_self_mha(ks, d_model, prefix="sa_")
        lp.update(_init_cross_mha(kc, d_model, prefix="ca_"))
        lp.update(_init_ff(kf, d_model, d_ff))
        dec_layers.append(lp)
    params["encoder"] = enc_layers
    params["decoder"] = dec_layers
    w_out, b_out = _init_linear(keys[-1], d_model, tgt_vocab)
    params["out_w"], params["out_b"] = w_out, b_out
    return params


# --------------------------------- main ---------------------------------

if __name__ == "__main__":
    SRC_VOCAB, TGT_VOCAB = 50, 60
    D_MODEL, NUM_HEADS = 32, 4
    SEQ_LEN, NUM_LAYERS, D_FF = 8, 2, 64
    BATCH = 2

    key = jax.random.PRNGKey(0)
    kp, ks, kt = jax.random.split(key, 3)
    params = init_transformer(kp, SRC_VOCAB, TGT_VOCAB, D_MODEL, NUM_HEADS,
                              SEQ_LEN, NUM_LAYERS, D_FF)

    src = jax.random.randint(ks, (BATCH, SEQ_LEN), 0, SRC_VOCAB)
    tgt = jax.random.randint(kt, (BATCH, SEQ_LEN), 0, TGT_VOCAB)

    fwd = jax.jit(functools.partial(transformer_forward, num_heads=NUM_HEADS))
    out = fwd(params, src, tgt)
    out = jax.block_until_ready(out)

    assert out.shape == (BATCH, SEQ_LEN, TGT_VOCAB)
    assert bool(jnp.all(jnp.isfinite(out)))
    row_sums = jnp.sum(out, axis=-1)        # final softmax rows must sum to 1
    assert bool(jnp.all(jnp.abs(row_sums - 1.0) < 1e-4))
    print("KERNEL_OK")
</pallas_src>

<mosaic_0001>
module attributes {stable_mosaic.version = 11 : i64} {
  func.func @_self_attn_heads_kernel(%arg0: i32, %arg1: memref<2x8x32xf32, #tpu.memory_space<vmem>>, %arg2: memref<32x96xf32, #tpu.memory_space<vmem>>, %arg3: memref<1x96xf32, #tpu.memory_space<vmem>>, %arg4: memref<2x32x8xf32, #tpu.memory_space<vmem>>) attributes {dimension_semantics = [#tpu.dimension_semantics<arbitrary>], iteration_bounds = array<i64: 1>, scalar_prefetch = 0 : i64, scratch_operands = 0 : i64, tpu.core_type = #tpu.core_type<tc>, window_params = [{pipeline_mode = #tpu.pipeline_mode<synchronous>, transform_indices = @transform_0, window_bounds = array<i64: 2, 8, 32>}, {pipeline_mode = #tpu.pipeline_mode<synchronous>, transform_indices = @transform_1, window_bounds = array<i64: 32, 96>}, {pipeline_mode = #tpu.pipeline_mode<synchronous>, transform_indices = @transform_2, window_bounds = array<i64: 1, 96>}, {pipeline_mode = #tpu.pipeline_mode<synchronous>, transform_indices = @transform_3, window_bounds = array<i64: 2, 32, 8>}]} {
    %c0 = arith.constant 0 : index
    %c0_0 = arith.constant 0 : index
    %c0_1 = arith.constant 0 : index
    %0 = vector.load %arg1[%c0, %c0_0, %c0_1] : memref<2x8x32xf32, #tpu.memory_space<vmem>>, vector<2x8x32xf32>
    %1 = vector.shape_cast %0 : vector<2x8x32xf32> to vector<16x32xf32>
    %c0_2 = arith.constant 0 : index
    %c0_3 = arith.constant 0 : index
    %2 = vector.load %arg2[%c0_2, %c0_3] : memref<32x96xf32, #tpu.memory_space<vmem>>, vector<32x96xf32>
    %cst = arith.constant dense<0.000000e+00> : vector<16x96xf32>
    %3 = tpu.matmul %1, %2, %cst {dimension_numbers = #tpu.dot_dimension_numbers<[1], [0], [0], [1], [0, 0, 1, 1], [], []>} : vector<16x32xf32>, vector<32x96xf32>, vector<16x96xf32> -> vector<16x96xf32>
    %c0_4 = arith.constant 0 : index
    %c0_5 = arith.constant 0 : index
    %4 = vector.load %arg3[%c0_4, %c0_5] : memref<1x96xf32, #tpu.memory_space<vmem>>, vector<1x96xf32>
    %5 = vector.broadcast %4 : vector<1x96xf32> to vector<16x96xf32>
    %6 = arith.addf %3, %5 : vector<16x96xf32>
    %7 = vector.extract_strided_slice %6 {offsets = [0, 0], sizes = [16, 32], strides = [1, 1]} : vector<16x96xf32> to vector<16x32xf32>
    %8 = vector.extract_strided_slice %6 {offsets = [0, 32], sizes = [16, 32], strides = [1, 1]} : vector<16x96xf32> to vector<16x32xf32>
    %9 = vector.extract_strided_slice %6 {offsets = [0, 64], sizes = [16, 32], strides = [1, 1]} : vector<16x96xf32> to vector<16x32xf32>
    %10 = vector.extract_strided_slice %7 {offsets = [0, 0], sizes = [16, 8], strides = [1, 1]} : vector<16x32xf32> to vector<16x8xf32>
    %11 = vector.shape_cast %10 : vector<16x8xf32> to vector<2x8x8xf32>
    %12 = vector.extract_strided_slice %8 {offsets = [0, 0], sizes = [16, 8], strides = [1, 1]} : vector<16x32xf32> to vector<16x8xf32>
    %13 = vector.shape_cast %12 : vector<16x8xf32> to vector<2x8x8xf32>
    %14 = vector.extract_strided_slice %9 {offsets = [0, 0], sizes = [16, 8], strides = [1, 1]} : vector<16x32xf32> to vector<16x8xf32>
    %15 = vector.shape_cast %14 : vector<16x8xf32> to vector<2x8x8xf32>
    %cst_6 = arith.constant dense<0.000000e+00> : vector<2x8x8xf32>
    %16 = tpu.matmul %11, %13, %cst_6 {dimension_numbers = #tpu.dot_dimension_numbers<[2], [2], [1], [1], [0, 0, 0, 1, 1, 1], [0], [0]>} : vector<2x8x8xf32>, vector<2x8x8xf32>, vector<2x8x8xf32> -> vector<2x8x8xf32>
    %cst_7 = arith.constant 0.353553385 : f32
    %17 = vector.broadcast %cst_7 : f32 to vector<2x8x8xf32>
    %18 = arith.mulf %16, %17 : vector<2x8x8xf32>
    %cst_8 = arith.constant dense<0xFF800000> : vector<2x8xf32>
    %19 = vector.multi_reduction <maximumf>, %18, %cst_8 [2] : vector<2x8x8xf32> to vector<2x8xf32>
    %20 = vector.shape_cast %19 : vector<2x8xf32> to vector<2x8x1xf32>
    %21 = vector.broadcast %20 : vector<2x8x1xf32> to vector<2x8x8xf32>
    %22 = arith.subf %18, %21 : vector<2x8x8xf32>
    %23 = math.exp %22 : vector<2x8x8xf32>
    %cst_9 = arith.constant dense<0.000000e+00> : vector<2x8xf32>
    %24 = vector.multi_reduction <add>, %23, %cst_9 [2] : vector<2x8x8xf32> to vector<2x8xf32>
    %25 = vector.shape_cast %24 : vector<2x8xf32> to vector<2x8x1xf32>
    %26 = tpu.reciprocal %25 {approx = true} : vector<2x8x1xf32> -> vector<2x8x1xf32>
    %27 = vector.broadcast %26 : vector<2x8x1xf32> to vector<2x8x8xf32>
    %28 = arith.mulf %23, %27 : vector<2x8x8xf32>
    %cst_10 = arith.constant dense<0.000000e+00> : vector<2x8x8xf32>
    %29 = tpu.matmul %15, %28, %cst_10 {dimension_numbers = #tpu.dot_dimension_numbers<[1], [2], [2], [1], [0, 0, 0, 2, 1, 1], [0], [0]>} : vector<2x8x8xf32>, vector<2x8x8xf32>, vector<2x8x8xf32> -> vector<2x8x8xf32>
    %30 = vector.extract_strided_slice %7 {offsets = [0, 8], sizes = [16, 8], strides = [1, 1]} : vector<16x32xf32> to vector<16x8xf32>
    %31 = vector.shape_cast %30 : vector<16x8xf32> to vector<2x8x8xf32>
    %32 = vector.extract_strided_slice %8 {offsets = [0, 8], sizes = [16, 8], strides = [1, 1]} : vector<16x32xf32> to vector<16x8xf32>
    %33 = vector.shape_cast %32 : vector<16x8xf32> to vector<2x8x8xf32>
    %34 = vector.extract_strided_slice %9 {offsets = [0, 8], sizes = [16, 8], strides = [1, 1]} : vector<16x32xf32> to vector<16x8xf32>
    %35 = vector.shape_cast %34 : vector<16x8xf32> to vector<2x8x8xf32>
    %cst_11 = arith.constant dense<0.000000e+00> : vector<2x8x8xf32>
    %36 = tpu.matmul %31, %33, %cst_11 {dimension_numbers = #tpu.dot_dimension_numbers<[2], [2], [1], [1], [0, 0, 0, 1, 1, 1], [0], [0]>} : vector<2x8x8xf32>, vector<2x8x8xf32>, vector<2x8x8xf32> -> vector<2x8x8xf32>
    %cst_12 = arith.constant 0.353553385 : f32
    %37 = vector.broadcast %cst_12 : f32 to vector<2x8x8xf32>
    %38 = arith.mulf %36, %37 : vector<2x8x8xf32>
    %cst_13 = arith.constant dense<0xFF800000> : vector<2x8xf32>
    %39 = vector.multi_reduction <maximumf>, %38, %cst_13 [2] : vector<2x8x8xf32> to vector<2x8xf32>
    %40 = vector.shape_cast %39 : vector<2x8xf32> to vector<2x8x1xf32>
    %41 = vector.broadcast %40 : vector<2x8x1xf32> to vector<2x8x8xf32>
    %42 = arith.subf %38, %41 : vector<2x8x8xf32>
    %43 = math.exp %42 : vector<2x8x8xf32>
    %cst_14 = arith.constant dense<0.000000e+00> : vector<2x8xf32>
    %44 = vector.multi_reduction <add>, %43, %cst_14 [2] : vector<2x8x8xf32> to vector<2x8xf32>
    %45 = vector.shape_cast %44 : vector<2x8xf32> to vector<2x8x1xf32>
    %46 = tpu.reciprocal %45 {approx = true} : vector<2x8x1xf32> -> vector<2x8x1xf32>
    %47 = vector.broadcast %46 : vector<2x8x1xf32> to vector<2x8x8xf32>
    %48 = arith.mulf %43, %47 : vector<2x8x8xf32>
    %cst_15 = arith.constant dense<0.000000e+00> : vector<2x8x8xf32>
    %49 = tpu.matmul %35, %48, %cst_15 {dimension_numbers = #tpu.dot_dimension_numbers<[1], [2], [2], [1], [0, 0, 0, 2, 1, 1], [0], [0]>} : vector<2x8x8xf32>, vector<2x8x8xf32>, vector<2x8x8xf32> -> vector<2x8x8xf32>
    %50 = vector.extract_strided_slice %7 {offsets = [0, 16], sizes = [16, 8], strides = [1, 1]} : vector<16x32xf32> to vector<16x8xf32>
    %51 = vector.shape_cast %50 : vector<16x8xf32> to vector<2x8x8xf32>
    %52 = vector.extract_strided_slice %8 {offsets = [0, 16], sizes = [16, 8], strides = [1, 1]} : vector<16x32xf32> to vector<16x8xf32>
    %53 = vector.shape_cast %52 : vector<16x8xf32> to vector<2x8x8xf32>
    %54 = vector.extract_strided_slice %9 {offsets = [0, 16], sizes = [16, 8], strides = [1, 1]} : vector<16x32xf32> to vector<16x8xf32>
    %55 = vector.shape_cast %54 : vector<16x8xf32> to vector<2x8x8xf32>
    %cst_16 = arith.constant dense<0.000000e+00> : vector<2x8x8xf32>
    %56 = tpu.matmul %51, %53, %cst_16 {dimension_numbers = #tpu.dot_dimension_numbers<[2], [2], [1], [1], [0, 0, 0, 1, 1, 1], [0], [0]>} : vector<2x8x8xf32>, vector<2x8x8xf32>, vector<2x8x8xf32> -> vector<2x8x8xf32>
    %cst_17 = arith.constant 0.353553385 : f32
    %57 = vector.broadcast %cst_17 : f32 to vector<2x8x8xf32>
    %58 = arith.mulf %56, %57 : vector<2x8x8xf32>
    %cst_18 = arith.constant dense<0xFF800000> : vector<2x8xf32>
    %59 = vector.multi_reduction <maximumf>, %58, %cst_18 [2] : vector<2x8x8xf32> to vector<2x8xf32>
    %60 = vector.shape_cast %59 : vector<2x8xf32> to vector<2x8x1xf32>
    %61 = vector.broadcast %60 : vector<2x8x1xf32> to vector<2x8x8xf32>
    %62 = arith.subf %58, %61 : vector<2x8x8xf32>
    %63 = math.exp %62 : vector<2x8x8xf32>
    %cst_19 = arith.constant dense<0.000000e+00> : vector<2x8xf32>
    %64 = vector.multi_reduction <add>, %63, %cst_19 [2] : vector<2x8x8xf32> to vector<2x8xf32>
    %65 = vector.shape_cast %64 : vector<2x8xf32> to vector<2x8x1xf32>
    %66 = tpu.reciprocal %65 {approx = true} : vector<2x8x1xf32> -> vector<2x8x1xf32>
    %67 = vector.broadcast %66 : vector<2x8x1xf32> to vector<2x8x8xf32>
    %68 = arith.mulf %63, %67 : vector<2x8x8xf32>
    %cst_20 = arith.constant dense<0.000000e+00> : vector<2x8x8xf32>
    %69 = tpu.matmul %55, %68, %cst_20 {dimension_numbers = #tpu.dot_dimension_numbers<[1], [2], [2], [1], [0, 0, 0, 2, 1, 1], [0], [0]>} : vector<2x8x8xf32>, vector<2x8x8xf32>, vector<2x8x8xf32> -> vector<2x8x8xf32>
    %70 = vector.extract_strided_slice %7 {offsets = [0, 24], sizes = [16, 8], strides = [1, 1]} : vector<16x32xf32> to vector<16x8xf32>
    %71 = vector.shape_cast %70 : vector<16x8xf32> to vector<2x8x8xf32>
    %72 = vector.extract_strided_slice %8 {offsets = [0, 24], sizes = [16, 8], strides = [1, 1]} : vector<16x32xf32> to vector<16x8xf32>
    %73 = vector.shape_cast %72 : vector<16x8xf32> to vector<2x8x8xf32>
    %74 = vector.extract_strided_slice %9 {offsets = [0, 24], sizes = [16, 8], strides = [1, 1]} : vector<16x32xf32> to vector<16x8xf32>
    %75 = vector.shape_cast %74 : vector<16x8xf32> to vector<2x8x8xf32>
    %cst_21 = arith.constant dense<0.000000e+00> : vector<2x8x8xf32>
    %76 = tpu.matmul %71, %73, %cst_21 {dimension_numbers = #tpu.dot_dimension_numbers<[2], [2], [1], [1], [0, 0, 0, 1, 1, 1], [0], [0]>} : vector<2x8x8xf32>, vector<2x8x8xf32>, vector<2x8x8xf32> -> vector<2x8x8xf32>
    %cst_22 = arith.constant 0.353553385 : f32
    %77 = vector.broadcast %cst_22 : f32 to vector<2x8x8xf32>
    %78 = arith.mulf %76, %77 : vector<2x8x8xf32>
    %cst_23 = arith.constant dense<0xFF800000> : vector<2x8xf32>
    %79 = vector.multi_reduction <maximumf>, %78, %cst_23 [2] : vector<2x8x8xf32> to vector<2x8xf32>
    %80 = vector.shape_cast %79 : vector<2x8xf32> to vector<2x8x1xf32>
    %81 = vector.broadcast %80 : vector<2x8x1xf32> to vector<2x8x8xf32>
    %82 = arith.subf %78, %81 : vector<2x8x8xf32>
    %83 = math.exp %82 : vector<2x8x8xf32>
    %cst_24 = arith.constant dense<0.000000e+00> : vector<2x8xf32>
    %84 = vector.multi_reduction <add>, %83, %cst_24 [2] : vector<2x8x8xf32> to vector<2x8xf32>
    %85 = vector.shape_cast %84 : vector<2x8xf32> to vector<2x8x1xf32>
    %86 = tpu.reciprocal %85 {approx = true} : vector<2x8x1xf32> -> vector<2x8x1xf32>
    %87 = vector.broadcast %86 : vector<2x8x1xf32> to vector<2x8x8xf32>
    %88 = arith.mulf %83, %87 : vector<2x8x8xf32>
    %cst_25 = arith.constant dense<0.000000e+00> : vector<2x8x8xf32>
    %89 = tpu.matmul %75, %88, %cst_25 {dimension_numbers = #tpu.dot_dimension_numbers<[1], [2], [2], [1], [0, 0, 0, 2, 1, 1], [0], [0]>} : vector<2x8x8xf32>, vector<2x8x8xf32>, vector<2x8x8xf32> -> vector<2x8x8xf32>
    %90 = tpu.concatenate %29, %49, %69, %89 in 1 : vector<2x8x8xf32>, vector<2x8x8xf32>, vector<2x8x8xf32>, vector<2x8x8xf32> -> vector<2x32x8xf32>
    %c0_26 = arith.constant 0 : index
    %c0_27 = arith.constant 0 : index
    %c0_28 = arith.constant 0 : index
    %91 = vector.load %arg4[%c0_26, %c0_27, %c0_28] : memref<2x32x8xf32, #tpu.memory_space<vmem>>, vector<2x32x8xf32>
    tpu.vector_store %arg4[%c0_26, %c0_27, %c0_28], %90 {strides = array<i32>} : memref<2x32x8xf32, #tpu.memory_space<vmem>>, vector<2x32x8xf32>,
    return
  }
  func.func @transform_0(%arg0: i32) -> (i32, i32, i32) {
    %c0_i32 = arith.constant 0 : i32
    %c0_i32_0 = arith.constant 0 : i32
    %c0_i32_1 = arith.constant 0 : i32
    %c0_i32_2 = arith.constant 0 : i32
    return %c0_i32, %c0_i32_0, %c0_i32_1 : i32, i32, i32
  }
  func.func @transform_1(%arg0: i32) -> (i32, i32) {
    %c0_i32 = arith.constant 0 : i32
    %c0_i32_0 = arith.constant 0 : i32
    %c0_i32_1 = arith.constant 0 : i32
    return %c0_i32, %c0_i32_0 : i32, i32
  }
  func.func @transform_2(%arg0: i32) -> (i32, i32) {
    %c0_i32 = arith.constant 0 : i32
    %c0_i32_0 = arith.constant 0 : i32
    %c0_i32_1 = arith.constant 0 : i32
    return %c0_i32, %c0_i32_0 : i32, i32
  }
  func.func @transform_3(%arg0: i32) -> (i32, i32, i32) {
    %c0_i32 = arith.constant 0 : i32
    %c0_i32_0 = arith.constant 0 : i32
    %c0_i32_1 = arith.constant 0 : i32
    %c0_i32_2 = arith.constant 0 : i32
    return %c0_i32, %c0_i32_0, %c0_i32_1 : i32, i32, i32
  }
}

module attributes {stable_mosaic.version = 11 : i64} {
  func.func @_proj_res_ln_ffn_kernel(%arg0: i32, %arg1: memref<2x8x32xf32, #tpu.memory_space<vmem>>, %arg2: memref<2x8x32xf32, #tpu.memory_space<vmem>>, %arg3: memref<32x32xf32, #tpu.memory_space<vmem>>, %arg4: memref<1x32xf32, #tpu.memory_space<vmem>>, %arg5: memref<32x64xf32, #tpu.memory_space<vmem>>, %arg6: memref<1x64xf32, #tpu.memory_space<vmem>>, %arg7: memref<64x32xf32, #tpu.memory_space<vmem>>, %arg8: memref<1x32xf32, #tpu.memory_space<vmem>>, %arg9: memref<2x8x32xf32, #tpu.memory_space<vmem>>) attributes {dimension_semantics = [#tpu.dimension_semantics<arbitrary>], iteration_bounds = array<i64: 1>, scalar_prefetch = 0 : i64, scratch_operands = 0 : i64, tpu.core_type = #tpu.core_type<tc>, window_params = [{pipeline_mode = #tpu.pipeline_mode<synchronous>, transform_indices = @transform_0, window_bounds = array<i64: 2, 8, 32>}, {pipeline_mode = #tpu.pipeline_mode<synchronous>, transform_indices = @transform_1, window_bounds = array<i64: 2, 8, 32>}, {pipeline_mode = #tpu.pipeline_mode<synchronous>, transform_indices = @transform_2, window_bounds = array<i64: 32, 32>}, {pipeline_mode = #tpu.pipeline_mode<synchronous>, transform_indices = @transform_3, window_bounds = array<i64: 1, 32>}, {pipeline_mode = #tpu.pipeline_mode<synchronous>, transform_indices = @transform_4, window_bounds = array<i64: 32, 64>}, {pipeline_mode = #tpu.pipeline_mode<synchronous>, transform_indices = @transform_5, window_bounds = array<i64: 1, 64>}, {pipeline_mode = #tpu.pipeline_mode<synchronous>, transform_indices = @transform_6, window_bounds = array<i64: 64, 32>}, {pipeline_mode = #tpu.pipeline_mode<synchronous>, transform_indices = @transform_7, window_bounds = array<i64: 1, 32>}, {pipeline_mode = #tpu.pipeline_mode<synchronous>, transform_indices = @transform_8, window_bounds = array<i64: 2, 8, 32>}]} {
    %c0 = arith.constant 0 : index
    %c0_0 = arith.constant 0 : index
    %c0_1 = arith.constant 0 : index
    %0 = vector.load %arg1[%c0, %c0_0, %c0_1] : memref<2x8x32xf32, #tpu.memory_space<vmem>>, vector<2x8x32xf32>
    %1 = vector.shape_cast %0 : vector<2x8x32xf32> to vector<16x32xf32>
    %c0_2 = arith.constant 0 : index
    %c0_3 = arith.constant 0 : index
    %2 = vector.load %arg3[%c0_2, %c0_3] : memref<32x32xf32, #tpu.memory_space<vmem>>, vector<32x32xf32>
    %cst = arith.constant dense<0.000000e+00> : vector<16x32xf32>
    %3 = tpu.matmul %1, %2, %cst {dimension_numbers = #tpu.dot_dimension_numbers<[1], [0], [0], [1], [0, 0, 1, 1], [], []>} : vector<16x32xf32>, vector<32x32xf32>, vector<16x32xf32> -> vector<16x32xf32>
    %c0_4 = arith.constant 0 : index
    %c0_5 = arith.constant 0 : index
    %4 = vector.load %arg4[%c0_4, %c0_5] : memref<1x32xf32, #tpu.memory_space<vmem>>, vector<1x32xf32>
    %5 = vector.broadcast %4 : vector<1x32xf32> to vector<16x32xf32>
    %6 = arith.addf %3, %5 : vector<16x32xf32>
    %7 = vector.shape_cast %6 : vector<16x32xf32> to vector<2x8x32xf32>
    %c0_6 = arith.constant 0 : index
    %c0_7 = arith.constant 0 : index
    %c0_8 = arith.constant 0 : index
    %8 = vector.load %arg2[%c0_6, %c0_7, %c0_8] : memref<2x8x32xf32, #tpu.memory_space<vmem>>, vector<2x8x32xf32>
    %9 = arith.addf %7, %8 : vector<2x8x32xf32>
    %cst_9 = arith.constant dense<0.000000e+00> : vector<2x8xf32>
    %10 = vector.multi_reduction <add>, %9, %cst_9 [2] : vector<2x8x32xf32> to vector<2x8xf32>
    %11 = vector.shape_cast %10 : vector<2x8xf32> to vector<2x8x1xf32>
    %cst_10 = arith.constant 3.200000e+01 : f32
    %12 = vector.broadcast %cst_10 : f32 to vector<2x8x1xf32>
    %13 = arith.divf %11, %12 : vector<2x8x1xf32>
    %cst_11 = arith.constant dense<0.000000e+00> : vector<2x1xf32>
    %14 = vector.multi_reduction <add>, %13, %cst_11 [1] : vector<2x8x1xf32> to vector<2x1xf32>
    %15 = vector.shape_cast %14 : vector<2x1xf32> to vector<2x1x1xf32>
    %cst_12 = arith.constant 8.000000e+00 : f32
    %16 = vector.broadcast %cst_12 : f32 to vector<2x1x1xf32>
    %17 = arith.divf %15, %16 : vector<2x1x1xf32>
    %18 = vector.broadcast %17 : vector<2x1x1xf32> to vector<2x8x32xf32>
    %19 = arith.subf %9, %18 : vector<2x8x32xf32>
    %20 = arith.mulf %19, %19 : vector<2x8x32xf32>
    %cst_13 = arith.constant dense<0.000000e+00> : vector<2x8xf32>
    %21 = vector.multi_reduction <add>, %20, %cst_13 [2] : vector<2x8x32xf32> to vector<2x8xf32>
    %22 = vector.shape_cast %21 : vector<2x8xf32> to vector<2x8x1xf32>
    %cst_14 = arith.constant 3.200000e+01 : f32
    %23 = vector.broadcast %cst_14 : f32 to vector<2x8x1xf32>
    %24 = arith.divf %22, %23 : vector<2x8x1xf32>
    %cst_15 = arith.constant dense<0.000000e+00> : vector<2x1xf32>
    %25 = vector.multi_reduction <add>, %24, %cst_15 [1] : vector<2x8x1xf32> to vector<2x1xf32>
    %26 = vector.shape_cast %25 : vector<2x1xf32> to vector<2x1x1xf32>
    %cst_16 = arith.constant 8.000000e+00 : f32
    %27 = vector.broadcast %cst_16 : f32 to vector<2x1x1xf32>
    %28 = arith.divf %26, %27 : vector<2x1x1xf32>
    %cst_17 = arith.constant 9.99999974E-6 : f32
    %29 = vector.broadcast %cst_17 : f32 to vector<2x1x1xf32>
    %30 = arith.addf %28, %29 : vector<2x1x1xf32>
    %31 = math.rsqrt %30 : vector<2x1x1xf32>
    %32 = vector.broadcast %31 : vector<2x1x1xf32> to vector<2x8x32xf32>
    %33 = arith.mulf %19, %32 : vector<2x8x32xf32>
    %34 = vector.shape_cast %33 : vector<2x8x32xf32> to vector<16x32xf32>
    %c0_18 = arith.constant 0 : index
    %c0_19 = arith.constant 0 : index
    %35 = vector.load %arg5[%c0_18, %c0_19] : memref<32x64xf32, #tpu.memory_space<vmem>>, vector<32x64xf32>
    %cst_20 = arith.constant dense<0.000000e+00> : vector<16x64xf32>
    %36 = tpu.matmul %34, %35, %cst_20 {dimension_numbers = #tpu.dot_dimension_numbers<[1], [0], [0], [1], [0, 0, 1, 1], [], []>} : vector<16x32xf32>, vector<32x64xf32>, vector<16x64xf32> -> vector<16x64xf32>
    %c0_21 = arith.constant 0 : index
    %c0_22 = arith.constant 0 : index
    %37 = vector.load %arg6[%c0_21, %c0_22] : memref<1x64xf32, #tpu.memory_space<vmem>>, vector<1x64xf32>
    %38 = vector.broadcast %37 : vector<1x64xf32> to vector<16x64xf32>
    %39 = arith.addf %36, %38 : vector<16x64xf32>
    %cst_23 = arith.constant 0.000000e+00 : f32
    %40 = vector.broadcast %cst_23 : f32 to vector<16x64xf32>
    %41 = arith.maximumf %39, %40 : vector<16x64xf32>
    %c0_24 = arith.constant 0 : index
    %c0_25 = arith.constant 0 : index
    %42 = vector.load %arg7[%c0_24, %c0_25] : memref<64x32xf32, #tpu.memory_space<vmem>>, vector<64x32xf32>
    %cst_26 = arith.constant dense<0.000000e+00> : vector<16x32xf32>
    %43 = tpu.matmul %41, %42, %cst_26 {dimension_numbers = #tpu.dot_dimension_numbers<[1], [0], [0], [1], [0, 0, 1, 1], [], []>} : vector<16x64xf32>, vector<64x32xf32>, vector<16x32xf32> -> vector<16x32xf32>
    %c0_27 = arith.constant 0 : index
    %c0_28 = arith.constant 0 : index
    %44 = vector.load %arg8[%c0_27, %c0_28] : memref<1x32xf32, #tpu.memory_space<vmem>>, vector<1x32xf32>
    %45 = vector.broadcast %44 : vector<1x32xf32> to vector<16x32xf32>
    %46 = arith.addf %43, %45 : vector<16x32xf32>
    %47 = vector.shape_cast %46 : vector<16x32xf32> to vector<2x8x32xf32>
    %48 = arith.addf %47, %33 : vector<2x8x32xf32>
    %cst_29 = arith.constant dense<0.000000e+00> : vector<2x8xf32>
    %49 = vector.multi_reduction <add>, %48, %cst_29 [2] : vector<2x8x32xf32> to vector<2x8xf32>
    %50 = vector.shape_cast %49 : vector<2x8xf32> to vector<2x8x1xf32>
    %cst_30 = arith.constant 3.200000e+01 : f32
    %51 = vector.broadcast %cst_30 : f32 to vector<2x8x1xf32>
    %52 = arith.divf %50, %51 : vector<2x8x1xf32>
    %cst_31 = arith.constant dense<0.000000e+00> : vector<2x1xf32>
    %53 = vector.multi_reduction <add>, %52, %cst_31 [1] : vector<2x8x1xf32> to vector<2x1xf32>
    %54 = vector.shape_cast %53 : vector<2x1xf32> to vector<2x1x1xf32>
    %cst_32 = arith.constant 8.000000e+00 : f32
    %55 = vector.broadcast %cst_32 : f32 to vector<2x1x1xf32>
    %56 = arith.divf %54, %55 : vector<2x1x1xf32>
    %57 = vector.broadcast %56 : vector<2x1x1xf32> to vector<2x8x32xf32>
    %58 = arith.subf %48, %57 : vector<2x8x32xf32>
    %59 = arith.mulf %58, %58 : vector<2x8x32xf32>
    %cst_33 = arith.constant dense<0.000000e+00> : vector<2x8xf32>
    %60 = vector.multi_reduction <add>, %59, %cst_33 [2] : vector<2x8x32xf32> to vector<2x8xf32>
    %61 = vector.shape_cast %60 : vector<2x8xf32> to vector<2x8x1xf32>
    %cst_34 = arith.constant 3.200000e+01 : f32
    %62 = vector.broadcast %cst_34 : f32 to vector<2x8x1xf32>
    %63 = arith.divf %61, %62 : vector<2x8x1xf32>
    %cst_35 = arith.constant dense<0.000000e+00> : vector<2x1xf32>
    %64 = vector.multi_reduction <add>, %63, %cst_35 [1] : vector<2x8x1xf32> to vector<2x1xf32>
    %65 = vector.shape_cast %64 : vector<2x1xf32> to vector<2x1x1xf32>
    %cst_36 = arith.constant 8.000000e+00 : f32
    %66 = vector.broadcast %cst_36 : f32 to vector<2x1x1xf32>
    %67 = arith.divf %65, %66 : vector<2x1x1xf32>
    %cst_37 = arith.constant 9.99999974E-6 : f32
    %68 = vector.broadcast %cst_37 : f32 to vector<2x1x1xf32>
    %69 = arith.addf %67, %68 : vector<2x1x1xf32>
    %70 = math.rsqrt %69 : vector<2x1x1xf32>
    %71 = vector.broadcast %70 : vector<2x1x1xf32> to vector<2x8x32xf32>
    %72 = arith.mulf %58, %71 : vector<2x8x32xf32>
    %c0_38 = arith.constant 0 : index
    %c0_39 = arith.constant 0 : index
    %c0_40 = arith.constant 0 : index
    %73 = vector.load %arg9[%c0_38, %c0_39, %c0_40] : memref<2x8x32xf32, #tpu.memory_space<vmem>>, vector<2x8x32xf32>
    tpu.vector_store %arg9[%c0_38, %c0_39, %c0_40], %72 {strides = array<i32>} : memref<2x8x32xf32, #tpu.memory_space<vmem>>, vector<2x8x32xf32>,
    return
  }
  func.func @transform_0(%arg0: i32) -> (i32, i32, i32) {
    %c0_i32 = arith.constant 0 : i32
    %c0_i32_0 = arith.constant 0 : i32
    %c0_i32_1 = arith.constant 0 : i32
    %c0_i32_2 = arith.constant 0 : i32
    return %c0_i32, %c0_i32_0, %c0_i32_1 : i32, i32, i32
  }
  func.func @transform_1(%arg0: i32) -> (i32, i32, i32) {
    %c0_i32 = arith.constant 0 : i32
    %c0_i32_0 = arith.constant 0 : i32
    %c0_i32_1 = arith.constant 0 : i32
    %c0_i32_2 = arith.constant 0 : i32
    return %c0_i32, %c0_i32_0, %c0_i32_1 : i32, i32, i32
  }
  func.func @transform_2(%arg0: i32) -> (i32, i32) {
    %c0_i32 = arith.constant 0 : i32
    %c0_i32_0 = arith.constant 0 : i32
    %c0_i32_1 = arith.constant 0 : i32
    return %c0_i32, %c0_i32_0 : i32, i32
  }
  func.func @transform_3(%arg0: i32) -> (i32, i32) {
    %c0_i32 = arith.constant 0 : i32
    %c0_i32_0 = arith.constant 0 : i32
    %c0_i32_1 = arith.constant 0 : i32
    return %c0_i32, %c0_i32_0 : i32, i32
  }
  func.func @transform_4(%arg0: i32) -> (i32, i32) {
    %c0_i32 = arith.constant 0 : i32
    %c0_i32_0 = arith.constant 0 : i32
    %c0_i32_1 = arith.constant 0 : i32
    return %c0_i32, %c0_i32_0 : i32, i32
  }
  func.func @transform_5(%arg0: i32) -> (i32, i32) {
    %c0_i32 = arith.constant 0 : i32
    %c0_i32_0 = arith.constant 0 : i32
    %c0_i32_1 = arith.constant 0 : i32
    return %c0_i32, %c0_i32_0 : i32, i32
  }
  func.func @transform_6(%arg0: i32) -> (i32, i32) {
    %c0_i32 = arith.constant 0 : i32
    %c0_i32_0 = arith.constant 0 : i32
    %c0_i32_1 = arith.constant 0 : i32
    return %c0_i32, %c0_i32_0 : i32, i32
  }
  func.func @transform_7(%arg0: i32) -> (i32, i32) {
    %c0_i32 = arith.constant 0 : i32
    %c0_i32_0 = arith.constant 0 : i32
    %c0_i32_1 = arith.constant 0 : i32
    return %c0_i32, %c0_i32_0 : i32, i32
  }
  func.func @transform_8(%arg0: i32) -> (i32, i32, i32) {
    %c0_i32 = arith.constant 0 : i32
    %c0_i32_0 = arith.constant 0 : i32
    %c0_i32_1 = arith.constant 0 : i32
    %c0_i32_2 = arith.constant 0 : i32
    return %c0_i32, %c0_i32_0, %c0_i32_1 : i32, i32, i32
  }
}

module attributes {stable_mosaic.version = 11 : i64} {
  func.func @_out_proj_softmax_kernel(%arg0: i32, %arg1: memref<2x8x32xf32, #tpu.memory_space<vmem>>, %arg2: memref<32x60xf32, #tpu.memory_space<vmem>>, %arg3: memref<1x60xf32, #tpu.memory_space<vmem>>, %arg4: memref<2x8x60xf32, #tpu.memory_space<vmem>>) attributes {dimension_semantics = [#tpu.dimension_semantics<arbitrary>], iteration_bounds = array<i64: 1>, scalar_prefetch = 0 : i64, scratch_operands = 0 : i64, tpu.core_type = #tpu.core_type<tc>, window_params = [{pipeline_mode = #tpu.pipeline_mode<synchronous>, transform_indices = @transform_0, window_bounds = array<i64: 2, 8, 32>}, {pipeline_mode = #tpu.pipeline_mode<synchronous>, transform_indices = @transform_1, window_bounds = array<i64: 32, 60>}, {pipeline_mode = #tpu.pipeline_mode<synchronous>, transform_indices = @transform_2, window_bounds = array<i64: 1, 60>}, {pipeline_mode = #tpu.pipeline_mode<synchronous>, transform_indices = @transform_3, window_bounds = array<i64: 2, 8, 60>}]} {
    %c0 = arith.constant 0 : index
    %c0_0 = arith.constant 0 : index
    %c0_1 = arith.constant 0 : index
    %0 = vector.load %arg1[%c0, %c0_0, %c0_1] : memref<2x8x32xf32, #tpu.memory_space<vmem>>, vector<2x8x32xf32>
    %1 = vector.shape_cast %0 : vector<2x8x32xf32> to vector<16x32xf32>
    %c0_2 = arith.constant 0 : index
    %c0_3 = arith.constant 0 : index
    %2 = vector.load %arg2[%c0_2, %c0_3] : memref<32x60xf32, #tpu.memory_space<vmem>>, vector<32x60xf32>
    %cst = arith.constant dense<0.000000e+00> : vector<16x60xf32>
    %3 = tpu.matmul %1, %2, %cst {dimension_numbers = #tpu.dot_dimension_numbers<[1], [0], [0], [1], [0, 0, 1, 1], [], []>} : vector<16x32xf32>, vector<32x60xf32>, vector<16x60xf32> -> vector<16x60xf32>
    %c0_4 = arith.constant 0 : index
    %c0_5 = arith.constant 0 : index
    %4 = vector.load %arg3[%c0_4, %c0_5] : memref<1x60xf32, #tpu.memory_space<vmem>>, vector<1x60xf32>
    %5 = vector.broadcast %4 : vector<1x60xf32> to vector<16x60xf32>
    %6 = arith.addf %3, %5 : vector<16x60xf32>
    %cst_6 = arith.constant dense<0xFF800000> : vector<16xf32>
    %7 = vector.multi_reduction <maximumf>, %6, %cst_6 [1] : vector<16x60xf32> to vector<16xf32>
    %8 = vector.shape_cast %7 : vector<16xf32> to vector<16x1xf32>
    %9 = vector.broadcast %8 : vector<16x1xf32> to vector<16x60xf32>
    %10 = arith.subf %6, %9 : vector<16x60xf32>
    %11 = math.exp %10 : vector<16x60xf32>
    %cst_7 = arith.constant dense<0.000000e+00> : vector<16xf32>
    %12 = vector.multi_reduction <add>, %11, %cst_7 [1] : vector<16x60xf32> to vector<16xf32>
    %13 = vector.shape_cast %12 : vector<16xf32> to vector<16x1xf32>
    %14 = vector.broadcast %13 : vector<16x1xf32> to vector<16x60xf32>
    %15 = arith.divf %11, %14 : vector<16x60xf32>
    %16 = vector.shape_cast %15 : vector<16x60xf32> to vector<2x8x60xf32>
    %c0_8 = arith.constant 0 : index
    %c0_9 = arith.constant 0 : index
    %c0_10 = arith.constant 0 : index
    %17 = vector.load %arg4[%c0_8, %c0_9, %c0_10] : memref<2x8x60xf32, #tpu.memory_space<vmem>>, vector<2x8x60xf32>
    tpu.vector_store %arg4[%c0_8, %c0_9, %c0_10], %16 {strides = array<i32>} : memref<2x8x60xf32, #tpu.memory_space<vmem>>, vector<2x8x60xf32>,
    return
  }
  func.func @transform_0(%arg0: i32) -> (i32, i32, i32) {
    %c0_i32 = arith.constant 0 : i32
    %c0_i32_0 = arith.constant 0 : i32
    %c0_i32_1 = arith.constant 0 : i32
    %c0_i32_2 = arith.constant 0 : i32
    return %c0_i32, %c0_i32_0, %c0_i32_1 : i32, i32, i32
  }
  func.func @transform_1(%arg0: i32) -> (i32, i32) {
    %c0_i32 = arith.constant 0 : i32
    %c0_i32_0 = arith.constant 0 : i32
    %c0_i32_1 = arith.constant 0 : i32
    return %c0_i32, %c0_i32_0 : i32, i32
  }
  func.func @transform_2(%arg0: i32) -> (i32, i32) {
    %c0_i32 = arith.constant 0 : i32
    %c0_i32_0 = arith.constant 0 : i32
    %c0_i32_1 = arith.constant 0 : i32
    return %c0_i32, %c0_i32_0 : i32, i32
  }
  func.func @transform_3(%arg0: i32) -> (i32, i32, i32) {
    %c0_i32 = arith.constant 0 : i32
    %c0_i32_0 = arith.constant 0 : i32
    %c0_i32_1 = arith.constant 0 : i32
    %c0_i32_2 = arith.constant 0 : i32
    return %c0_i32, %c0_i32_0, %c0_i32_1 : i32, i32, i32
  }
}

module attributes {stable_mosaic.version = 11 : i64} {
  func.func @_proj_res_ln_cross_heads_kernel(%arg0: i32, %arg1: memref<2x8x32xf32, #tpu.memory_space<vmem>>, %arg2: memref<2x8x32xf32, #tpu.memory_space<vmem>>, %arg3: memref<32x32xf32, #tpu.memory_space<vmem>>, %arg4: memref<1x32xf32, #tpu.memory_space<vmem>>, %arg5: memref<2x8x32xf32, #tpu.memory_space<vmem>>, %arg6: memref<32x32xf32, #tpu.memory_space<vmem>>, %arg7: memref<1x32xf32, #tpu.memory_space<vmem>>, %arg8: memref<32x64xf32, #tpu.memory_space<vmem>>, %arg9: memref<1x64xf32, #tpu.memory_space<vmem>>, %arg10: memref<2x8x32xf32, #tpu.memory_space<vmem>>, %arg11: memref<2x32x8xf32, #tpu.memory_space<vmem>>) attributes {dimension_semantics = [#tpu.dimension_semantics<arbitrary>], iteration_bounds = array<i64: 1>, scalar_prefetch = 0 : i64, scratch_operands = 0 : i64, tpu.core_type = #tpu.core_type<tc>, window_params = [{pipeline_mode = #tpu.pipeline_mode<synchronous>, transform_indices = @transform_0, window_bounds = array<i64: 2, 8, 32>}, {pipeline_mode = #tpu.pipeline_mode<synchronous>, transform_indices = @transform_1, window_bounds = array<i64: 2, 8, 32>}, {pipeline_mode = #tpu.pipeline_mode<synchronous>, transform_indices = @transform_2, window_bounds = array<i64: 32, 32>}, {pipeline_mode = #tpu.pipeline_mode<synchronous>, transform_indices = @transform_3, window_bounds = array<i64: 1, 32>}, {pipeline_mode = #tpu.pipeline_mode<synchronous>, transform_indices = @transform_4, window_bounds = array<i64: 2, 8, 32>}, {pipeline_mode = #tpu.pipeline_mode<synchronous>, transform_indices = @transform_5, window_bounds = array<i64: 32, 32>}, {pipeline_mode = #tpu.pipeline_mode<synchronous>, transform_indices = @transform_6, window_bounds = array<i64: 1, 32>}, {pipeline_mode = #tpu.pipeline_mode<synchronous>, transform_indices = @transform_7, window_bounds = array<i64: 32, 64>}, {pipeline_mode = #tpu.pipeline_mode<synchronous>, transform_indices = @transform_8, window_bounds = array<i64: 1, 64>}, {pipeline_mode = #tpu.pipeline_mode<synchronous>, transform_indices = @transform_9, window_bounds = array<i64: 2, 8, 32>}, {pipeline_mode = #tpu.pipeline_mode<synchronous>, transform_indices = @transform_10, window_bounds = array<i64: 2, 32, 8>}]} {
    %c0 = arith.constant 0 : index
    %c0_0 = arith.constant 0 : index
    %c0_1 = arith.constant 0 : index
    %0 = vector.load %arg1[%c0, %c0_0, %c0_1] : memref<2x8x32xf32, #tpu.memory_space<vmem>>, vector<2x8x32xf32>
    %1 = vector.shape_cast %0 : vector<2x8x32xf32> to vector<16x32xf32>
    %c0_2 = arith.constant 0 : index
    %c0_3 = arith.constant 0 : index
    %2 = vector.load %arg3[%c0_2, %c0_3] : memref<32x32xf32, #tpu.memory_space<vmem>>, vector<32x32xf32>
    %cst = arith.constant dense<0.000000e+00> : vector<16x32xf32>
    %3 = tpu.matmul %1, %2, %cst {dimension_numbers = #tpu.dot_dimension_numbers<[1], [0], [0], [1], [0, 0, 1, 1], [], []>} : vector<16x32xf32>, vector<32x32xf32>, vector<16x32xf32> -> vector<16x32xf32>
    %c0_4 = arith.constant 0 : index
    %c0_5 = arith.constant 0 : index
    %4 = vector.load %arg4[%c0_4, %c0_5] : memref<1x32xf32, #tpu.memory_space<vmem>>, vector<1x32xf32>
    %5 = vector.broadcast %4 : vector<1x32xf32> to vector<16x32xf32>
    %6 = arith.addf %3, %5 : vector<16x32xf32>
    %7 = vector.shape_cast %6 : vector<16x32xf32> to vector<2x8x32xf32>
    %c0_6 = arith.constant 0 : index
    %c0_7 = arith.constant 0 : index
    %c0_8 = arith.constant 0 : index
    %8 = vector.load %arg2[%c0_6, %c0_7, %c0_8] : memref<2x8x32xf32, #tpu.memory_space<vmem>>, vector<2x8x32xf32>
    %9 = arith.addf %7, %8 : vector<2x8x32xf32>
    %cst_9 = arith.constant dense<0.000000e+00> : vector<2x8xf32>
    %10 = vector.multi_reduction <add>, %9, %cst_9 [2] : vector<2x8x32xf32> to vector<2x8xf32>
    %11 = vector.shape_cast %10 : vector<2x8xf32> to vector<2x8x1xf32>
    %cst_10 = arith.constant 3.200000e+01 : f32
    %12 = vector.broadcast %cst_10 : f32 to vector<2x8x1xf32>
    %13 = arith.divf %11, %12 : vector<2x8x1xf32>
    %cst_11 = arith.constant dense<0.000000e+00> : vector<2x1xf32>
    %14 = vector.multi_reduction <add>, %13, %cst_11 [1] : vector<2x8x1xf32> to vector<2x1xf32>
    %15 = vector.shape_cast %14 : vector<2x1xf32> to vector<2x1x1xf32>
    %cst_12 = arith.constant 8.000000e+00 : f32
    %16 = vector.broadcast %cst_12 : f32 to vector<2x1x1xf32>
    %17 = arith.divf %15, %16 : vector<2x1x1xf32>
    %18 = vector.broadcast %17 : vector<2x1x1xf32> to vector<2x8x32xf32>
    %19 = arith.subf %9, %18 : vector<2x8x32xf32>
    %20 = arith.mulf %19, %19 : vector<2x8x32xf32>
    %cst_13 = arith.constant dense<0.000000e+00> : vector<2x8xf32>
    %21 = vector.multi_reduction <add>, %20, %cst_13 [2] : vector<2x8x32xf32> to vector<2x8xf32>
    %22 = vector.shape_cast %21 : vector<2x8xf32> to vector<2x8x1xf32>
    %cst_14 = arith.constant 3.200000e+01 : f32
    %23 = vector.broadcast %cst_14 : f32 to vector<2x8x1xf32>
    %24 = arith.divf %22, %23 : vector<2x8x1xf32>
    %cst_15 = arith.constant dense<0.000000e+00> : vector<2x1xf32>
    %25 = vector.multi_reduction <add>, %24, %cst_15 [1] : vector<2x8x1xf32> to vector<2x1xf32>
    %26 = vector.shape_cast %25 : vector<2x1xf32> to vector<2x1x1xf32>
    %cst_16 = arith.constant 8.000000e+00 : f32
    %27 = vector.broadcast %cst_16 : f32 to vector<2x1x1xf32>
    %28 = arith.divf %26, %27 : vector<2x1x1xf32>
    %cst_17 = arith.constant 9.99999974E-6 : f32
    %29 = vector.broadcast %cst_17 : f32 to vector<2x1x1xf32>
    %30 = arith.addf %28, %29 : vector<2x1x1xf32>
    %31 = math.rsqrt %30 : vector<2x1x1xf32>
    %32 = vector.broadcast %31 : vector<2x1x1xf32> to vector<2x8x32xf32>
    %33 = arith.mulf %19, %32 : vector<2x8x32xf32>
    %c0_18 = arith.constant 0 : index
    %c0_19 = arith.constant 0 : index
    %c0_20 = arith.constant 0 : index
    %34 = vector.load %arg10[%c0_18, %c0_19, %c0_20] : memref<2x8x32xf32, #tpu.memory_space<vmem>>, vector<2x8x32xf32>
    tpu.vector_store %arg10[%c0_18, %c0_19, %c0_20], %33 {strides = array<i32>} : memref<2x8x32xf32, #tpu.memory_space<vmem>>, vector<2x8x32xf32>,
    %35 = vector.shape_cast %33 : vector<2x8x32xf32> to vector<16x32xf32>
    %c0_21 = arith.constant 0 : index
    %c0_22 = arith.constant 0 : index
    %36 = vector.load %arg6[%c0_21, %c0_22] : memref<32x32xf32, #tpu.memory_space<vmem>>, vector<32x32xf32>
    %cst_23 = arith.constant dense<0.000000e+00> : vector<16x32xf32>
    %37 = tpu.matmul %35, %36, %cst_23 {dimension_numbers = #tpu.dot_dimension_numbers<[1], [0], [0], [1], [0, 0, 1, 1], [], []>} : vector<16x32xf32>, vector<32x32xf32>, vector<16x32xf32> -> vector<16x32xf32>
    %c0_24 = arith.constant 0 : index
    %c0_25 = arith.constant 0 : index
    %38 = vector.load %arg7[%c0_24, %c0_25] : memref<1x32xf32, #tpu.memory_space<vmem>>, vector<1x32xf32>
    %39 = vector.broadcast %38 : vector<1x32xf32> to vector<16x32xf32>
    %40 = arith.addf %37, %39 : vector<16x32xf32>
    %c0_26 = arith.constant 0 : index
    %c0_27 = arith.constant 0 : index
    %c0_28 = arith.constant 0 : index
    %41 = vector.load %arg5[%c0_26, %c0_27, %c0_28] : memref<2x8x32xf32, #tpu.memory_space<vmem>>, vector<2x8x32xf32>
    %42 = vector.shape_cast %41 : vector<2x8x32xf32> to vector<16x32xf32>
    %c0_29 = arith.constant 0 : index
    %c0_30 = arith.constant 0 : index
    %43 = vector.load %arg8[%c0_29, %c0_30] : memref<32x64xf32, #tpu.memory_space<vmem>>, vector<32x64xf32>
    %cst_31 = arith.constant dense<0.000000e+00> : vector<16x64xf32>
    %44 = tpu.matmul %42, %43, %cst_31 {dimension_numbers = #tpu.dot_dimension_numbers<[1], [0], [0], [1], [0, 0, 1, 1], [], []>} : vector<16x32xf32>, vector<32x64xf32>, vector<16x64xf32> -> vector<16x64xf32>
    %c0_32 = arith.constant 0 : index
    %c0_33 = arith.constant 0 : index
    %45 = vector.load %arg9[%c0_32, %c0_33] : memref<1x64xf32, #tpu.memory_space<vmem>>, vector<1x64xf32>
    %46 = vector.broadcast %45 : vector<1x64xf32> to vector<16x64xf32>
    %47 = arith.addf %44, %46 : vector<16x64xf32>
    %48 = vector.extract_strided_slice %47 {offsets = [0, 0], sizes = [16, 32], strides = [1, 1]} : vector<16x64xf32> to vector<16x32xf32>
    %49 = vector.extract_strided_slice %47 {offsets = [0, 32], sizes = [16, 32], strides = [1, 1]} : vector<16x64xf32> to vector<16x32xf32>
    %50 = vector.extract_strided_slice %40 {offsets = [0, 0], sizes = [16, 8], strides = [1, 1]} : vector<16x32xf32> to vector<16x8xf32>
    %51 = vector.shape_cast %50 : vector<16x8xf32> to vector<2x8x8xf32>
    %52 = vector.extract_strided_slice %48 {offsets = [0, 0], sizes = [16, 8], strides = [1, 1]} : vector<16x32xf32> to vector<16x8xf32>
    %53 = vector.shape_cast %52 : vector<16x8xf32> to vector<2x8x8xf32>
    %54 = vector.extract_strided_slice %49 {offsets = [0, 0], sizes = [16, 8], strides = [1, 1]} : vector<16x32xf32> to vector<16x8xf32>
    %55 = vector.shape_cast %54 : vector<16x8xf32> to vector<2x8x8xf32>
    %cst_34 = arith.constant dense<0.000000e+00> : vector<2x8x8xf32>
    %56 = tpu.matmul %51, %53, %cst_34 {dimension_numbers = #tpu.dot_dimension_numbers<[2], [2], [1], [1], [0, 0, 0, 1, 1, 1], [0], [0]>} : vector<2x8x8xf32>, vector<2x8x8xf32>, vector<2x8x8xf32> -> vector<2x8x8xf32>
    %cst_35 = arith.constant 0.353553385 : f32
    %57 = vector.broadcast %cst_35 : f32 to vector<2x8x8xf32>
    %58 = arith.mulf %56, %57 : vector<2x8x8xf32>
    %cst_36 = arith.constant dense<0xFF800000> : vector<2x8xf32>
    %59 = vector.multi_reduction <maximumf>, %58, %cst_36 [2] : vector<2x8x8xf32> to vector<2x8xf32>
    %60 = vector.shape_cast %59 : vector<2x8xf32> to vector<2x8x1xf32>
    %61 = vector.broadcast %60 : vector<2x8x1xf32> to vector<2x8x8xf32>
    %62 = arith.subf %58, %61 : vector<2x8x8xf32>
    %63 = math.exp %62 : vector<2x8x8xf32>
    %cst_37 = arith.constant dense<0.000000e+00> : vector<2x8xf32>
    %64 = vector.multi_reduction <add>, %63, %cst_37 [2] : vector<2x8x8xf32> to vector<2x8xf32>
    %65 = vector.shape_cast %64 : vector<2x8xf32> to vector<2x8x1xf32>
    %66 = tpu.reciprocal %65 {approx = true} : vector<2x8x1xf32> -> vector<2x8x1xf32>
    %67 = vector.broadcast %66 : vector<2x8x1xf32> to vector<2x8x8xf32>
    %68 = arith.mulf %63, %67 : vector<2x8x8xf32>
    %cst_38 = arith.constant dense<0.000000e+00> : vector<2x8x8xf32>
    %69 = tpu.matmul %55, %68, %cst_38 {dimension_numbers = #tpu.dot_dimension_numbers<[1], [2], [2], [1], [0, 0, 0, 2, 1, 1], [0], [0]>} : vector<2x8x8xf32>, vector<2x8x8xf32>, vector<2x8x8xf32> -> vector<2x8x8xf32>
    %70 = vector.extract_strided_slice %40 {offsets = [0, 8], sizes = [16, 8], strides = [1, 1]} : vector<16x32xf32> to vector<16x8xf32>
    %71 = vector.shape_cast %70 : vector<16x8xf32> to vector<2x8x8xf32>
    %72 = vector.extract_strided_slice %48 {offsets = [0, 8], sizes = [16, 8], strides = [1, 1]} : vector<16x32xf32> to vector<16x8xf32>
    %73 = vector.shape_cast %72 : vector<16x8xf32> to vector<2x8x8xf32>
    %74 = vector.extract_strided_slice %49 {offsets = [0, 8], sizes = [16, 8], strides = [1, 1]} : vector<16x32xf32> to vector<16x8xf32>
    %75 = vector.shape_cast %74 : vector<16x8xf32> to vector<2x8x8xf32>
    %cst_39 = arith.constant dense<0.000000e+00> : vector<2x8x8xf32>
    %76 = tpu.matmul %71, %73, %cst_39 {dimension_numbers = #tpu.dot_dimension_numbers<[2], [2], [1], [1], [0, 0, 0, 1, 1, 1], [0], [0]>} : vector<2x8x8xf32>, vector<2x8x8xf32>, vector<2x8x8xf32> -> vector<2x8x8xf32>
    %cst_40 = arith.constant 0.353553385 : f32
    %77 = vector.broadcast %cst_40 : f32 to vector<2x8x8xf32>
    %78 = arith.mulf %76, %77 : vector<2x8x8xf32>
    %cst_41 = arith.constant dense<0xFF800000> : vector<2x8xf32>
    %79 = vector.multi_reduction <maximumf>, %78, %cst_41 [2] : vector<2x8x8xf32> to vector<2x8xf32>
    %80 = vector.shape_cast %79 : vector<2x8xf32> to vector<2x8x1xf32>
    %81 = vector.broadcast %80 : vector<2x8x1xf32> to vector<2x8x8xf32>
    %82 = arith.subf %78, %81 : vector<2x8x8xf32>
    %83 = math.exp %82 : vector<2x8x8xf32>
    %cst_42 = arith.constant dense<0.000000e+00> : vector<2x8xf32>
    %84 = vector.multi_reduction <add>, %83, %cst_42 [2] : vector<2x8x8xf32> to vector<2x8xf32>
    %85 = vector.shape_cast %84 : vector<2x8xf32> to vector<2x8x1xf32>
    %86 = tpu.reciprocal %85 {approx = true} : vector<2x8x1xf32> -> vector<2x8x1xf32>
    %87 = vector.broadcast %86 : vector<2x8x1xf32> to vector<2x8x8xf32>
    %88 = arith.mulf %83, %87 : vector<2x8x8xf32>
    %cst_43 = arith.constant dense<0.000000e+00> : vector<2x8x8xf32>
    %89 = tpu.matmul %75, %88, %cst_43 {dimension_numbers = #tpu.dot_dimension_numbers<[1], [2], [2], [1], [0, 0, 0, 2, 1, 1], [0], [0]>} : vector<2x8x8xf32>, vector<2x8x8xf32>, vector<2x8x8xf32> -> vector<2x8x8xf32>
    %90 = vector.extract_strided_slice %40 {offsets = [0, 16], sizes = [16, 8], strides = [1, 1]} : vector<16x32xf32> to vector<16x8xf32>
    %91 = vector.shape_cast %90 : vector<16x8xf32> to vector<2x8x8xf32>
    %92 = vector.extract_strided_slice %48 {offsets = [0, 16], sizes = [16, 8], strides = [1, 1]} : vector<16x32xf32> to vector<16x8xf32>
    %93 = vector.shape_cast %92 : vector<16x8xf32> to vector<2x8x8xf32>
    %94 = vector.extract_strided_slice %49 {offsets = [0, 16], sizes = [16, 8], strides = [1, 1]} : vector<16x32xf32> to vector<16x8xf32>
    %95 = vector.shape_cast %94 : vector<16x8xf32> to vector<2x8x8xf32>
    %cst_44 = arith.constant dense<0.000000e+00> : vector<2x8x8xf32>
    %96 = tpu.matmul %91, %93, %cst_44 {dimension_numbers = #tpu.dot_dimension_numbers<[2], [2], [1], [1], [0, 0, 0, 1, 1, 1], [0], [0]>} : vector<2x8x8xf32>, vector<2x8x8xf32>, vector<2x8x8xf32> -> vector<2x8x8xf32>
    %cst_45 = arith.constant 0.353553385 : f32
    %97 = vector.broadcast %cst_45 : f32 to vector<2x8x8xf32>
    %98 = arith.mulf %96, %97 : vector<2x8x8xf32>
    %cst_46 = arith.constant dense<0xFF800000> : vector<2x8xf32>
    %99 = vector.multi_reduction <maximumf>, %98, %cst_46 [2] : vector<2x8x8xf32> to vector<2x8xf32>
    %100 = vector.shape_cast %99 : vector<2x8xf32> to vector<2x8x1xf32>
    %101 = vector.broadcast %100 : vector<2x8x1xf32> to vector<2x8x8xf32>
    %102 = arith.subf %98, %101 : vector<2x8x8xf32>
    %103 = math.exp %102 : vector<2x8x8xf32>
    %cst_47 = arith.constant dense<0.000000e+00> : vector<2x8xf32>
    %104 = vector.multi_reduction <add>, %103, %cst_47 [2] : vector<2x8x8xf32> to vector<2x8xf32>
    %105 = vector.shape_cast %104 : vector<2x8xf32> to vector<2x8x1xf32>
    %106 = tpu.reciprocal %105 {approx = true} : vector<2x8x1xf32> -> vector<2x8x1xf32>
    %107 = vector.broadcast %106 : vector<2x8x1xf32> to vector<2x8x8xf32>
    %108 = arith.mulf %103, %107 : vector<2x8x8xf32>
    %cst_48 = arith.constant dense<0.000000e+00> : vector<2x8x8xf32>
    %109 = tpu.matmul %95, %108, %cst_48 {dimension_numbers = #tpu.dot_dimension_numbers<[1], [2], [2], [1], [0, 0, 0, 2, 1, 1], [0], [0]>} : vector<2x8x8xf32>, vector<2x8x8xf32>, vector<2x8x8xf32> -> vector<2x8x8xf32>
    %110 = vector.extract_strided_slice %40 {offsets = [0, 24], sizes = [16, 8], strides = [1, 1]} : vector<16x32xf32> to vector<16x8xf32>
    %111 = vector.shape_cast %110 : vector<16x8xf32> to vector<2x8x8xf32>
    %112 = vector.extract_strided_slice %48 {offsets = [0, 24], sizes = [16, 8], strides = [1, 1]} : vector<16x32xf32> to vector<16x8xf32>
    %113 = vector.shape_cast %112 : vector<16x8xf32> to vector<2x8x8xf32>
    %114 = vector.extract_strided_slice %49 {offsets = [0, 24], sizes = [16, 8], strides = [1, 1]} : vector<16x32xf32> to vector<16x8xf32>
    %115 = vector.shape_cast %114 : vector<16x8xf32> to vector<2x8x8xf32>
    %cst_49 = arith.constant dense<0.000000e+00> : vector<2x8x8xf32>
    %116 = tpu.matmul %111, %113, %cst_49 {dimension_numbers = #tpu.dot_dimension_numbers<[2], [2], [1], [1], [0, 0, 0, 1, 1, 1], [0], [0]>} : vector<2x8x8xf32>, vector<2x8x8xf32>, vector<2x8x8xf32> -> vector<2x8x8xf32>
    %cst_50 = arith.constant 0.353553385 : f32
    %117 = vector.broadcast %cst_50 : f32 to vector<2x8x8xf32>
    %118 = arith.mulf %116, %117 : vector<2x8x8xf32>
    %cst_51 = arith.constant dense<0xFF800000> : vector<2x8xf32>
    %119 = vector.multi_reduction <maximumf>, %118, %cst_51 [2] : vector<2x8x8xf32> to vector<2x8xf32>
    %120 = vector.shape_cast %119 : vector<2x8xf32> to vector<2x8x1xf32>
    %121 = vector.broadcast %120 : vector<2x8x1xf32> to vector<2x8x8xf32>
    %122 = arith.subf %118, %121 : vector<2x8x8xf32>
    %123 = math.exp %122 : vector<2x8x8xf32>
    %cst_52 = arith.constant dense<0.000000e+00> : vector<2x8xf32>
    %124 = vector.multi_reduction <add>, %123, %cst_52 [2] : vector<2x8x8xf32> to vector<2x8xf32>
    %125 = vector.shape_cast %124 : vector<2x8xf32> to vector<2x8x1xf32>
    %126 = tpu.reciprocal %125 {approx = true} : vector<2x8x1xf32> -> vector<2x8x1xf32>
    %127 = vector.broadcast %126 : vector<2x8x1xf32> to vector<2x8x8xf32>
    %128 = arith.mulf %123, %127 : vector<2x8x8xf32>
    %cst_53 = arith.constant dense<0.000000e+00> : vector<2x8x8xf32>
    %129 = tpu.matmul %115, %128, %cst_53 {dimension_numbers = #tpu.dot_dimension_numbers<[1], [2], [2], [1], [0, 0, 0, 2, 1, 1], [0], [0]>} : vector<2x8x8xf32>, vector<2x8x8xf32>, vector<2x8x8xf32> -> vector<2x8x8xf32>
    %130 = tpu.concatenate %69, %89, %109, %129 in 1 : vector<2x8x8xf32>, vector<2x8x8xf32>, vector<2x8x8xf32>, vector<2x8x8xf32> -> vector<2x32x8xf32>
    %c0_54 = arith.constant 0 : index
    %c0_55 = arith.constant 0 : index
    %c0_56 = arith.constant 0 : index
    %131 = vector.load %arg11[%c0_54, %c0_55, %c0_56] : memref<2x32x8xf32, #tpu.memory_space<vmem>>, vector<2x32x8xf32>
    tpu.vector_store %arg11[%c0_54, %c0_55, %c0_56], %130 {strides = array<i32>} : memref<2x32x8xf32, #tpu.memory_space<vmem>>, vector<2x32x8xf32>,
    return
  }
  func.func @transform_0(%arg0: i32) -> (i32, i32, i32) {
    %c0_i32 = arith.constant 0 : i32
    %c0_i32_0 = arith.constant 0 : i32
    %c0_i32_1 = arith.constant 0 : i32
    %c0_i32_2 = arith.constant 0 : i32
    return %c0_i32, %c0_i32_0, %c0_i32_1 : i32, i32, i32
  }
  func.func @transform_1(%arg0: i32) -> (i32, i32, i32) {
    %c0_i32 = arith.constant 0 : i32
    %c0_i32_0 = arith.constant 0 : i32
    %c0_i32_1 = arith.constant 0 : i32
    %c0_i32_2 = arith.constant 0 : i32
    return %c0_i32, %c0_i32_0, %c0_i32_1 : i32, i32, i32
  }
  func.func @transform_2(%arg0: i32) -> (i32, i32) {
    %c0_i32 = arith.constant 0 : i32
    %c0_i32_0 = arith.constant 0 : i32
    %c0_i32_1 = arith.constant 0 : i32
    return %c0_i32, %c0_i32_0 : i32, i32
  }
  func.func @transform_3(%arg0: i32) -> (i32, i32) {
    %c0_i32 = arith.constant 0 : i32
    %c0_i32_0 = arith.constant 0 : i32
    %c0_i32_1 = arith.constant 0 : i32
    return %c0_i32, %c0_i32_0 : i32, i32
  }
  func.func @transform_4(%arg0: i32) -> (i32, i32, i32) {
    %c0_i32 = arith.constant 0 : i32
    %c0_i32_0 = arith.constant 0 : i32
    %c0_i32_1 = arith.constant 0 : i32
    %c0_i32_2 = arith.constant 0 : i32
    return %c0_i32, %c0_i32_0, %c0_i32_1 : i32, i32, i32
  }
  func.func @transform_5(%arg0: i32) -> (i32, i32) {
    %c0_i32 = arith.constant 0 : i32
    %c0_i32_0 = arith.constant 0 : i32
    %c0_i32_1 = arith.constant 0 : i32
    return %c0_i32, %c0_i32_0 : i32, i32
  }
  func.func @transform_6(%arg0: i32) -> (i32, i32) {
    %c0_i32 = arith.constant 0 : i32
    %c0_i32_0 = arith.constant 0 : i32
    %c0_i32_1 = arith.constant 0 : i32
    return %c0_i32, %c0_i32_0 : i32, i32
  }
  func.func @transform_7(%arg0: i32) -> (i32, i32) {
    %c0_i32 = arith.constant 0 : i32
    %c0_i32_0 = arith.constant 0 : i32
    %c0_i32_1 = arith.constant 0 : i32
    return %c0_i32, %c0_i32_0 : i32, i32
  }
  func.func @transform_8(%arg0: i32) -> (i32, i32) {
    %c0_i32 = arith.constant 0 : i32
    %c0_i32_0 = arith.constant 0 : i32
    %c0_i32_1 = arith.constant 0 : i32
    return %c0_i32, %c0_i32_0 : i32, i32
  }
  func.func @transform_9(%arg0: i32) -> (i32, i32, i32) {
    %c0_i32 = arith.constant 0 : i32
    %c0_i32_0 = arith.constant 0 : i32
    %c0_i32_1 = arith.constant 0 : i32
    %c0_i32_2 = arith.constant 0 : i32
    return %c0_i32, %c0_i32_0, %c0_i32_1 : i32, i32, i32
  }
  func.func @transform_10(%arg0: i32) -> (i32, i32, i32) {
    %c0_i32 = arith.constant 0 : i32
    %c0_i32_0 = arith.constant 0 : i32
    %c0_i32_1 = arith.constant 0 : i32
    %c0_i32_2 = arith.constant 0 : i32
    return %c0_i32, %c0_i32_0, %c0_i32_1 : i32, i32, i32
  }
}

</mosaic_0001>

<llo_original>
// kernel: transformer_forward.12
$region0: #{transformer_forward.12}
  #allocation0 [shape = 'u32[]', space=smem, size = 0x4, offset = 0x4, fixed_abs, tag = 'smem constant byte address 0x4 - core index']
  #allocation1 [shape = 'u32[144,128]{1,0:T(1,128)}', space=vmem, size = 0x12000, scoped, tag = 'internal scratch']
  %s0 = inlined_call_operand.vmem [shape: f32[2,8,32], index: 0, kind: input, shape index: {}]
  %s1 = inlined_call_operand.vmem [shape: f32[2,8,32], index: 1, kind: input, shape index: {}]
  %s2 = inlined_call_operand.vmem [shape: f32[32,32], index: 2, kind: input, shape index: {}]
  %s3 = inlined_call_operand.vmem [shape: f32[1,32], index: 3, kind: input, shape index: {}]
  %s4 = inlined_call_operand.vmem [shape: f32[32,64], index: 4, kind: input, shape index: {}]
  %s5 = inlined_call_operand.vmem [shape: f32[1,64], index: 5, kind: input, shape index: {}]
  %s6 = inlined_call_operand.vmem [shape: f32[64,32], index: 6, kind: input, shape index: {}]
  %s7 = inlined_call_operand.vmem [shape: f32[1,32], index: 7, kind: input, shape index: {}]
  %s8 = inlined_call_operand.vmem [shape: f32[2,8,32], index: 8, kind: output, shape index: {}]
  %s9 = sld [smem:[#allocation0]]
  $region42: #{transformer_forward.12} parent=0
    _
  %s11 = ssub.s32 1, %s9
  %s12 = scalar_select 0, %s11, %s9
  // Predicated region
  $region2: #{transformer_forward.12} parent=0 // pred_check
    _
  $region3: #{transformer_forward.12} parent=0 // pred_check_branch
    %14 = sbr.rel (0) target = $region5
  $region4: #{transformer_forward.12} parent=0 // pred_region
    _
  $region5: #{transformer_forward.12} parent=0 // pred_fallthru
    _
  // Predicated region
  $region6: #{transformer_forward.12} parent=0 // pred_check
    _
  $region7: #{transformer_forward.12} parent=0 // pred_check_branch
    %16 = sbr.rel (0) target = $region9
  $region8: #{transformer_forward.12} parent=0 // pred_region
    _
  $region9: #{transformer_forward.12} parent=0 // pred_fallthru
    _
  // Predicated region
  $region10: #{transformer_forward.12} parent=0 // pred_check
    _
  $region11: #{transformer_forward.12} parent=0 // pred_check_branch
    %18 = sbr.rel (0) target = $region13
  $region12: #{transformer_forward.12} parent=0 // pred_region
    _
  $region13: #{transformer_forward.12} parent=0 // pred_fallthru
    _
  // Predicated region
  $region14: #{transformer_forward.12} parent=0 // pred_check
    _
  $region15: #{transformer_forward.12} parent=0 // pred_check_branch
    %20 = sbr.rel (0) target = $region17
  $region16: #{transformer_forward.12} parent=0 // pred_region
    _
  $region17: #{transformer_forward.12} parent=0 // pred_fallthru
    _
  // Predicated region
  $region18: #{transformer_forward.12} parent=0 // pred_check
    _
  $region19: #{transformer_forward.12} parent=0 // pred_check_branch
    %22 = sbr.rel (0) target = $region21
  $region20: #{transformer_forward.12} parent=0 // pred_region
    _
  $region21: #{transformer_forward.12} parent=0 // pred_fallthru
    _
  // Predicated region
  $region22: #{transformer_forward.12} parent=0 // pred_check
    _
  $region23: #{transformer_forward.12} parent=0 // pred_check_branch
    %24 = sbr.rel (0) target = $region25
  $region24: #{transformer_forward.12} parent=0 // pred_region
    _
  $region25: #{transformer_forward.12} parent=0 // pred_fallthru
    _
  // Predicated region
  $region26: #{transformer_forward.12} parent=0 // pred_check
    _
  $region27: #{transformer_forward.12} parent=0 // pred_check_branch
    %26 = sbr.rel (0) target = $region29
  $region28: #{transformer_forward.12} parent=0 // pred_region
    _
  $region29: #{transformer_forward.12} parent=0 // pred_fallthru
    _
  // Predicated region
  $region30: #{transformer_forward.12} parent=0 // pred_check
    _
  $region31: #{transformer_forward.12} parent=0 // pred_check_branch
    %28 = sbr.rel (0) target = $region33
  $region32: #{transformer_forward.12} parent=0 // pred_region
    _
  $region33: #{transformer_forward.12} parent=0 // pred_fallthru
    _
  %v29 = vld [vmem:[%s0] sm:$0xff]
  %v30 = vld [vmem:[%s0 + $0x8] sm:$0xff]
  %v31 = vld [vmem:[%s2] sm:$0xff]
  %v32 = vld [vmem:[%s2 + $0x8] sm:$0xff]
  %v33 = vld [vmem:[%s2 + $0x10] sm:$0xff]
  %v34 = vld [vmem:[%s2 + $0x18] sm:$0xff]
  %v35 = vld [vmem:[%s3] sm:$0x1]
  %v37 = vlaneseq
  %v38 = vshrl.u32 %v37, 7
  %v39 = vsub.s32 0, %v38
  %v40 = vrot.slane %v35, %v39
  %vm42 = vcmask 261120
  %v44 = vsel %vm42, %v29, 0
  %v47 = vsel %vm42, %v30, 0
  %49 = vmatprep.subr.mxu0 0.0
  %50 = vmatpush1.msra.mxu0 %v31
  %51 = vmatprep.subr.mxu0 0.0
  %52 = vmatpush1.msra.mxu0 %v32
  %53 = vmatprep.subr.mxu0 0.0
  %54 = vmatpush1.msra.mxu0 %v33
  %55 = vmatprep.subr.mxu0 0.0
  %56 = vmatpush1.msra.mxu0 %v34
  %57 = vmatprep.subr.mxu0 0.0
  %58 = vmatpush1.msra.mxu0 0.0
  %59 = vmatprep.subr.mxu0 0.0
  %60 = vmatpush1.msra.mxu0 0.0
  %61 = vmatprep.subr.mxu0 0.0
  %62 = vmatpush1.msra.mxu0 0.0
  %63 = vmatprep.subr.mxu0 0.0
  %64 = vmatpush1.msra.mxu0 0.0
  %65 = vmatprep.subr.mxu0 0.0
  %66 = vmatpush1.msra.mxu0 0.0
  %67 = vmatprep.subr.mxu0 0.0
  %68 = vmatpush1.msra.mxu0 0.0
  %69 = vmatprep.subr.mxu0 0.0
  %70 = vmatpush1.msra.mxu0 0.0
  %71 = vmatprep.subr.mxu0 0.0
  %72 = vmatpush1.msra.mxu0 0.0
  %73 = vmatprep.subr.mxu0 0.0
  %74 = vmatpush1.msra.mxu0 0.0
  %75 = vmatprep.subr.mxu0 0.0
  %76 = vmatpush1.msra.mxu0 0.0
  %77 = vmatprep.subr.mxu0 0.0
  %78 = vmatpush1.msra.mxu0 0.0
  %79 = vmatprep.subr.mxu0 0.0
  %80 = vmatpush1.msra.mxu0 0.0
  %81 = vmatprep.subr.mxu0 0.0
  %82 = vmatpush1.msra.mxu0 0.0
  %83 = vmatprep.subr.mxu0 0.0
  %84 = vmatpush1.msra.mxu0 0.0
  %85 = vmatprep.subr.mxu0 0.0
  %86 = vmatpush1.msra.mxu0 0.0
  %87 = vmatprep.subr.mxu0 0.0
  %88 = vmatpush1.msra.mxu0 0.0
  %89 = vmatprep.subr.mxu0 0.0
  %90 = vmatpush1.msra.mxu0 0.0
  %91 = vmatprep.subr.mxu0 0.0
  %92 = vmatpush1.msra.mxu0 0.0
  %93 = vmatprep.subr.mxu0 0.0
  %94 = vmatpush1.msra.mxu0 0.0
  %95 = vmatprep.subr.mxu0 0.0
  %96 = vmatpush1.msra.mxu0 0.0
  %97 = vmatprep.subr.mxu0 0.0
  %98 = vmatpush1.msra.mxu0 0.0
  %99 = vmatprep.subr.mxu0 0.0
  %100 = vmatpush1.msra.mxu0 0.0
  %101 = vmatprep.subr.mxu0 0.0
  %102 = vmatpush1.msra.mxu0 0.0
  %103 = vmatprep.subr.mxu0 0.0
  %104 = vmatpush1.msra.mxu0 0.0
  %105 = vmatprep.subr.mxu0 0.0
  %106 = vmatpush1.msra.mxu0 0.0
  %107 = vmatprep.subr.mxu0 0.0
  %108 = vmatpush1.msra.mxu0 0.0
  %109 = vmatprep.subr.mxu0 0.0
  %110 = vmatpush1.msra.mxu0 0.0
  %111 = vmatprep.subr.mxu0 0.0
  %112 = vmatpush1.msra.mxu0 0.0
  %113 = vmatprep.mubr.f32.mxu0 0.0
  %114 = vmatmul.mubr.f32.gmra.mrb[0].mxu0 %v44
  %v115 = vpop.f32.mrb[0].mxu0
  %v116 = vadd.f32 %v40, %v115
  %v117 = vpop.f32.mrb[0].mxu0
  %118 = vmatprep.mubr.f32.mxu0 0.0
  %119 = vmatmul.mubr.f32.gmra.mrb[0].mxu0 %v47
  %v120 = vpop.f32.mrb[0].mxu0
  %v121 = vadd.f32 %v40, %v120
  %v122 = vpop.f32.mrb[0].mxu0
  %123 = vdwg.mxu0
  %v124 = vld [vmem:[%s1] sm:$0xff]
  %v125 = vld [vmem:[%s1 + $0x8] sm:$0xff]
  %v126 = vadd.f32 %v116, %v124
  %v127 = vadd.f32 %v121, %v125
  %v128 = vsel %vm42, %v126, 0.0
  %129 = vadd.xlane.f32.xlu0 %v128
  %v130 = vpop.xlane.xlu0 %129
  %v131 = vsel %vm42, %v127, 0.0
  %132 = vadd.xlane.f32.xlu0 %v131
  %v133 = vpop.xlane.xlu0 %132
  %v134 = vrcp.pop 32.0
  %v135 = vmul.f32 %v130, %v134
  %v136 = vmul.f32 %v133, %v134
  %v137 = vrot.slane %v135, 4
  %v138 = vadd.f32 %v135, %v137
  %v139 = vrot.slane %v138, 2
  %v140 = vadd.f32 %v138, %v139
  %v141 = vrot.slane %v140, 1
  %v142 = vadd.f32 %v140, %v141
  %v143 = vrot.slane %v136, 4
  %v144 = vadd.f32 %v136, %v143
  %v145 = vrot.slane %v144, 2
  %v146 = vadd.f32 %v144, %v145
  %v147 = vrot.slane %v146, 1
  %v148 = vadd.f32 %v146, %v147
  %v149 = vrcp.pop 8.0
  %v150 = vmul.f32 %v142, %v149
  %v151 = vmul.f32 %v148, %v149
  %v152 = vsub.f32 %v126, %v150
  %v153 = vsub.f32 %v127, %v151
  %v154 = vmul.f32 %v152, %v152
  %v155 = vmul.f32 %v153, %v153
  %v156 = vsel %vm42, %v154, 0.0
  %157 = vadd.xlane.f32.xlu0 %v156
  %v158 = vpop.xlane.xlu0 %157
  %v159 = vsel %vm42, %v155, 0.0
  %160 = vadd.xlane.f32.xlu0 %v159
  %v161 = vpop.xlane.xlu0 %160
  %v162 = vmul.f32 %v158, %v134
  %v163 = vmul.f32 %v161, %v134
  %v164 = vrot.slane %v162, 4
  %v165 = vadd.f32 %v162, %v164
  %v166 = vrot.slane %v165, 2
  %v167 = vadd.f32 %v165, %v166
  %v168 = vrot.slane %v167, 1
  %v169 = vadd.f32 %v167, %v168
  %v170 = vrot.slane %v163, 4
  %v171 = vadd.f32 %v163, %v170
  %v172 = vrot.slane %v171, 2
  %v173 = vadd.f32 %v171, %v172
  %v174 = vrot.slane %v173, 1
  %v175 = vadd.f32 %v173, %v174
  %v176 = vmul.f32 %v169, %v149
  %v177 = vmul.f32 %v175, %v149
  %v178 = vadd.f32 %v176, 1e-05
  %v179 = vadd.f32 %v177, 1e-05
  %v180 = vrsqrt.pop %v178
  %v181 = vrsqrt.pop %v179
  %v182 = vmul.f32 %v152, %v180
  %v183 = vmul.f32 %v153, %v181
  %v184 = vld [vmem:[%s4] sm:$0xff]
  %v185 = vld [vmem:[%s4 + $0x8] sm:$0xff]
  %v186 = vld [vmem:[%s4 + $0x10] sm:$0xff]
  %v187 = vld [vmem:[%s4 + $0x18] sm:$0xff]
  %v188 = vld [vmem:[%s5] sm:$0x1]
  %v190 = vlaneseq
  %v191 = vshrl.u32 %v190, 7
  %v192 = vsub.s32 0, %v191
  %v193 = vrot.slane %v188, %v192
  %v196 = vsel %vm42, %v182, 0
  %v199 = vsel %vm42, %v183, 0
  %201 = vmatprep.subr.mxu0 0.0
  %202 = vmatpush1.msra.mxu0 %v184
  %203 = vmatprep.subr.mxu0 0.0
  %204 = vmatpush1.msra.mxu0 %v185
  %205 = vmatprep.subr.mxu0 0.0
  %206 = vmatpush1.msra.mxu0 %v186
  %207 = vmatprep.subr.mxu0 0.0
  %208 = vmatpush1.msra.mxu0 %v187
  %209 = vmatprep.subr.mxu0 0.0
  %210 = vmatpush1.msra.mxu0 0.0
  %211 = vmatprep.subr.mxu0 0.0
  %212 = vmatpush1.msra.mxu0 0.0
  %213 = vmatprep.subr.mxu0 0.0
  %214 = vmatpush1.msra.mxu0 0.0
  %215 = vmatprep.subr.mxu0 0.0
  %216 = vmatpush1.msra.mxu0 0.0
  %217 = vmatprep.subr.mxu0 0.0
  %218 = vmatpush1.msra.mxu0 0.0
  %219 = vmatprep.subr.mxu0 0.0
  %220 = vmatpush1.msra.mxu0 0.0
  %221 = vmatprep.subr.mxu0 0.0
  %222 = vmatpush1.msra.mxu0 0.0
  %223 = vmatprep.subr.mxu0 0.0
  %224 = vmatpush1.msra.mxu0 0.0
  %225 = vmatprep.subr.mxu0 0.0
  %226 = vmatpush1.msra.mxu0 0.0
  %227 = vmatprep.subr.mxu0 0.0
  %228 = vmatpush1.msra.mxu0 0.0
  %229 = vmatprep.subr.mxu0 0.0
  %230 = vmatpush1.msra.mxu0 0.0
  %231 = vmatprep.subr.mxu0 0.0
  %232 = vmatpush1.msra.mxu0 0.0
  %233 = vmatprep.subr.mxu0 0.0
  %234 = vmatpush1.msra.mxu0 0.0
  %235 = vmatprep.subr.mxu0 0.0
  %236 = vmatpush1.msra.mxu0 0.0
  %237 = vmatprep.subr.mxu0 0.0
  %238 = vmatpush1.msra.mxu0 0.0
  %239 = vmatprep.subr.mxu0 0.0
  %240 = vmatpush1.msra.mxu0 0.0
  %241 = vmatprep.subr.mxu0 0.0
  %242 = vmatpush1.msra.mxu0 0.0
  %243 = vmatprep.subr.mxu0 0.0
  %244 = vmatpush1.msra.mxu0 0.0
  %245 = vmatprep.subr.mxu0 0.0
  %246 = vmatpush1.msra.mxu0 0.0
  %247 = vmatprep.subr.mxu0 0.0
  %248 = vmatpush1.msra.mxu0 0.0
  %249 = vmatprep.subr.mxu0 0.0
  %250 = vmatpush1.msra.mxu0 0.0
  %251 = vmatprep.subr.mxu0 0.0
  %252 = vmatpush1.msra.mxu0 0.0
  %253 = vmatprep.subr.mxu0 0.0
  %254 = vmatpush1.msra.mxu0 0.0
  %255 = vmatprep.subr.mxu0 0.0
  %256 = vmatpush1.msra.mxu0 0.0
  %257 = vmatprep.subr.mxu0 0.0
  %258 = vmatpush1.msra.mxu0 0.0
  %259 = vmatprep.subr.mxu0 0.0
  %260 = vmatpush1.msra.mxu0 0.0
  %261 = vmatprep.subr.mxu0 0.0
  %262 = vmatpush1.msra.mxu0 0.0
  %263 = vmatprep.subr.mxu0 0.0
  %264 = vmatpush1.msra.mxu0 0.0
  %265 = vmatprep.mubr.f32.mxu0 0.0
  %266 = vmatmul.mubr.f32.gmra.mrb[0].mxu0 %v196
  %v267 = vpop.f32.mrb[0].mxu0
  %v268 = vadd.f32 %v193, %v267
  %v269 = vpop.f32.mrb[0].mxu0
  %270 = vmatprep.mubr.f32.mxu0 0.0
  %271 = vmatmul.mubr.f32.gmra.mrb[0].mxu0 %v199
  %v272 = vpop.f32.mrb[0].mxu0
  %v273 = vadd.f32 %v193, %v272
  %v274 = vpop.f32.mrb[0].mxu0
  %275 = vdwg.mxu0
  %v276 = vmax.f32 %v268, 0.0
  %v277 = vmax.f32 %v273, 0.0
  %v278 = vld [vmem:[%s6] sm:$0xff]
  %v279 = vld [vmem:[%s6 + $0x8] sm:$0xff]
  %v280 = vld [vmem:[%s6 + $0x10] sm:$0xff]
  %v281 = vld [vmem:[%s6 + $0x18] sm:$0xff]
  %v282 = vld [vmem:[%s6 + $0x20] sm:$0xff]
  %v283 = vld [vmem:[%s6 + $0x28] sm:$0xff]
  %v284 = vld [vmem:[%s6 + $0x30] sm:$0xff]
  %v285 = vld [vmem:[%s6 + $0x38] sm:$0xff]
  %v286 = vld [vmem:[%s7] sm:$0x1]
  %v288 = vlaneseq
  %v289 = vshrl.u32 %v288, 7
  %v290 = vsub.s32 0, %v289
  %v291 = vrot.slane %v286, %v290
  %vm293 = vcmask 523264
  %v295 = vsel %vm293, %v276, 0
  %v298 = vsel %vm293, %v277, 0
  %300 = vmatprep.subr.mxu0 0.0
  %301 = vmatpush1.msra.mxu0 %v278
  %302 = vmatprep.subr.mxu0 0.0
  %303 = vmatpush1.msra.mxu0 %v279
  %304 = vmatprep.subr.mxu0 0.0
  %305 = vmatpush1.msra.mxu0 %v280
  %306 = vmatprep.subr.mxu0 0.0
  %307 = vmatpush1.msra.mxu0 %v281
  %308 = vmatprep.subr.mxu0 0.0
  %309 = vmatpush1.msra.mxu0 %v282
  %310 = vmatprep.subr.mxu0 0.0
  %311 = vmatpush1.msra.mxu0 %v283
  %312 = vmatprep.subr.mxu0 0.0
  %313 = vmatpush1.msra.mxu0 %v284
  %314 = vmatprep.subr.mxu0 0.0
  %315 = vmatpush1.msra.mxu0 %v285
  %316 = vmatprep.subr.mxu0 0.0
  %317 = vmatpush1.msra.mxu0 0.0
  %318 = vmatprep.subr.mxu0 0.0
  %319 = vmatpush1.msra.mxu0 0.0
  %320 = vmatprep.subr.mxu0 0.0
  %321 = vmatpush1.msra.mxu0 0.0
  %322 = vmatprep.subr.mxu0 0.0
  %323 = vmatpush1.msra.mxu0 0.0
  %324 = vmatprep.subr.mxu0 0.0
  %325 = vmatpush1.msra.mxu0 0.0
  %326 = vmatprep.subr.mxu0 0.0
  %327 = vmatpush1.msra.mxu0 0.0
  %328 = vmatprep.subr.mxu0 0.0
  %329 = vmatpush1.msra.mxu0 0.0
  %330 = vmatprep.subr.mxu0 0.0
  %331 = vmatpush1.msra.mxu0 0.0
  %332 = vmatprep.subr.mxu0 0.0
  %333 = vmatpush1.msra.mxu0 0.0
  %334 = vmatprep.subr.mxu0 0.0
  %335 = vmatpush1.msra.mxu0 0.0
  %336 = vmatprep.subr.mxu0 0.0
  %337 = vmatpush1.msra.mxu0 0.0
  %338 = vmatprep.subr.mxu0 0.0
  %339 = vmatpush1.msra.mxu0 0.0
  %340 = vmatprep.subr.mxu0 0.0
  %341 = vmatpush1.msra.mxu0 0.0
  %342 = vmatprep.subr.mxu0 0.0
  %343 = vmatpush1.msra.mxu0 0.0
  %344 = vmatprep.subr.mxu0 0.0
  %345 = vmatpush1.msra.mxu0 0.0
  %346 = vmatprep.subr.mxu0 0.0
  %347 = vmatpush1.msra.mxu0 0.0
  %348 = vmatprep.subr.mxu0 0.0
  %349 = vmatpush1.msra.mxu0 0.0
  %350 = vmatprep.subr.mxu0 0.0
  %351 = vmatpush1.msra.mxu0 0.0
  %352 = vmatprep.subr.mxu0 0.0
  %353 = vmatpush1.msra.mxu0 0.0
  %354 = vmatprep.subr.mxu0 0.0
  %355 = vmatpush1.msra.mxu0 0.0
  %356 = vmatprep.subr.mxu0 0.0
  %357 = vmatpush1.msra.mxu0 0.0
  %358 = vmatprep.subr.mxu0 0.0
  %359 = vmatpush1.msra.mxu0 0.0
  %360 = vmatprep.subr.mxu0 0.0
  %361 = vmatpush1.msra.mxu0 0.0
  %362 = vmatprep.subr.mxu0 0.0
  %363 = vmatpush1.msra.mxu0 0.0
  %364 = vmatprep.mubr.f32.mxu0 0.0
  %365 = vmatmul.mubr.f32.gmra.mrb[0].mxu0 %v295
  %v366 = vpop.f32.mrb[0].mxu0
  %v367 = vadd.f32 %v291, %v366
  %v368 = vpop.f32.mrb[0].mxu0
  %369 = vmatprep.mubr.f32.mxu0 0.0
  %370 = vmatmul.mubr.f32.gmra.mrb[0].mxu0 %v298
  %v371 = vpop.f32.mrb[0].mxu0
  %v372 = vadd.f32 %v291, %v371
  %v373 = vpop.f32.mrb[0].mxu0
  %374 = vdwg.mxu0
  %v375 = vadd.f32 %v367, %v182
  %v376 = vadd.f32 %v372, %v183
  %v377 = vsel %vm42, %v375, 0.0
  %378 = vadd.xlane.f32.xlu0 %v377
  %v379 = vpop.xlane.xlu0 %378
  %v380 = vsel %vm42, %v376, 0.0
  %381 = vadd.xlane.f32.xlu0 %v380
  %v382 = vpop.xlane.xlu0 %381
  %v383 = vmul.f32 %v379, %v134
  %v384 = vmul.f32 %v382, %v134
  %v385 = vrot.slane %v383, 4
  %v386 = vadd.f32 %v383, %v385
  %v387 = vrot.slane %v386, 2
  %v388 = vadd.f32 %v386, %v387
  %v389 = vrot.slane %v388, 1
  %v390 = vadd.f32 %v388, %v389
  %v391 = vrot.slane %v384, 4
  %v392 = vadd.f32 %v384, %v391
  %v393 = vrot.slane %v392, 2
  %v394 = vadd.f32 %v392, %v393
  %v395 = vrot.slane %v394, 1
  %v396 = vadd.f32 %v394, %v395
  %v397 = vmul.f32 %v390, %v149
  %v398 = vmul.f32 %v396, %v149
  %v399 = vsub.f32 %v375, %v397
  %v400 = vsub.f32 %v376, %v398
  %v401 = vmul.f32 %v399, %v399
  %v402 = vmul.f32 %v400, %v400
  %v403 = vsel %vm42, %v401, 0.0
  %404 = vadd.xlane.f32.xlu0 %v403
  %v405 = vpop.xlane.xlu0 %404
  %v406 = vsel %vm42, %v402, 0.0
  %407 = vadd.xlane.f32.xlu0 %v406
  %v408 = vpop.xlane.xlu0 %407
  %v409 = vmul.f32 %v405, %v134
  %v410 = vmul.f32 %v408, %v134
  %v411 = vrot.slane %v409, 4
  %v412 = vadd.f32 %v409, %v411
  %v413 = vrot.slane %v412, 2
  %v414 = vadd.f32 %v412, %v413
  %v415 = vrot.slane %v414, 1
  %v416 = vadd.f32 %v414, %v415
  %v417 = vrot.slane %v410, 4
  %v418 = vadd.f32 %v410, %v417
  %v419 = vrot.slane %v418, 2
  %v420 = vadd.f32 %v418, %v419
  %v421 = vrot.slane %v420, 1
  %v422 = vadd.f32 %v420, %v421
  %v423 = vmul.f32 %v416, %v149
  %v424 = vmul.f32 %v422, %v149
  %v425 = vadd.f32 %v423, 1e-05
  %v426 = vadd.f32 %v424, 1e-05
  %v427 = vrsqrt.pop %v425
  %v428 = vrsqrt.pop %v426
  %v429 = vmul.f32 %v399, %v427
  %v430 = vmul.f32 %v400, %v428
  %431 = vst.msk [vmem:[%s8] sm:$0xff] %vm42, %v429
  %432 = vst.msk [vmem:[%s8 + $0x8] sm:$0xff] %vm42, %v430
  // Predicated region
  $region34: #{transformer_forward.12} parent=0 // pred_check
    _
  $region35: #{transformer_forward.12} parent=0 // pred_check_branch
    %434 = sbr.rel (0) target = $region37
  $region36: #{transformer_forward.12} parent=0 // pred_region
    _
  $region37: #{transformer_forward.12} parent=0 // pred_fallthru
    _
  // Predicated region
  $region38: #{transformer_forward.12} parent=0 // pred_check
    _
  $region39: #{transformer_forward.12} parent=0 // pred_check_branch
    %436 = sbr.rel (0) target = $region41
  $region40: #{transformer_forward.12} parent=0 // pred_region
    _
  $region41: #{transformer_forward.12} parent=0 // pred_fallthru
    _

// kernel: transformer_forward.21
$region0: #{transformer_forward.21}
  #allocation0 [shape = 'u32[]', space=smem, size = 0x4, offset = 0x4, fixed_abs, tag = 'smem constant byte address 0x4 - core index']
  #allocation1 [shape = 'u32[144,128]{1,0:T(1,128)}', space=vmem, size = 0x12000, scoped, tag = 'internal scratch']
  %s0 = inlined_call_operand.vmem [shape: f32[2,8,32], index: 0, kind: input, shape index: {}]
  %s1 = inlined_call_operand.vmem [shape: f32[32,60], index: 1, kind: input, shape index: {}]
  %s2 = inlined_call_operand.vmem [shape: f32[1,60], index: 2, kind: input, shape index: {}]
  %s3 = inlined_call_operand.hbm [shape: f32[2,8,60], index: 3, kind: output, shape index: {}]
  %s4 = sld [smem:[#allocation0]]
  $region22: #{transformer_forward.21} parent=0
    _
  %s6 = ssub.s32 1, %s4
  %s7 = scalar_select 0, %s6, %s4
  $region1: #{transformer_forward.21} parent=0
    #allocation2 [shape = 'u8[8192]{0}', space=vmem, size = 0x2000, scoped, tag = 'output window, operand 0, single buffered']
    #allocation3 [shape = 's32[1]{0}', space=sflag, size = 0x4, scoped, tag = 'scoped memory for transformer_forward.21']
    %8 = vsyncpa [#allocation3], 0
    // Predicated region
    $region2: #{transformer_forward.21} parent=1 // pred_check
      _
    $region3: #{transformer_forward.21} parent=1 // pred_check_branch
      %10 = sbr.rel (0) target = $region5
    $region4: #{transformer_forward.21} parent=1 // pred_region
      _
    $region5: #{transformer_forward.21} parent=1 // pred_fallthru
      _
    // Predicated region
    $region6: #{transformer_forward.21} parent=1 // pred_check
      _
    $region7: #{transformer_forward.21} parent=1 // pred_check_branch
      %12 = sbr.rel (0) target = $region9
    $region8: #{transformer_forward.21} parent=1 // pred_region
      _
    $region9: #{transformer_forward.21} parent=1 // pred_fallthru
      _
    // Predicated region
    $region10: #{transformer_forward.21} parent=1 // pred_check
      _
    $region11: #{transformer_forward.21} parent=1 // pred_check_branch
      %14 = sbr.rel (0) target = $region13
    $region12: #{transformer_forward.21} parent=1 // pred_region
      _
    $region13: #{transformer_forward.21} parent=1 // pred_fallthru
      _
    %v15 = vld [vmem:[%s0] sm:$0xff]
    %v16 = vld [vmem:[%s0 + $0x8] sm:$0xff]
    %v17 = vld [vmem:[%s1] sm:$0xff]
    %v18 = vld [vmem:[%s1 + $0x8] sm:$0xff]
    %v19 = vld [vmem:[%s1 + $0x10] sm:$0xff]
    %v20 = vld [vmem:[%s1 + $0x18] sm:$0xff]
    %v21 = vld [vmem:[%s2] sm:$0x1]
    %v23 = vlaneseq
    %v24 = vshrl.u32 %v23, 7
    %v25 = vsub.s32 0, %v24
    %v26 = vrot.slane %v21, %v25
    %vm28 = vcmask 261120
    %v30 = vsel %vm28, %v15, 0
    %v33 = vsel %vm28, %v16, 0
    %35 = vmatprep.subr.mxu0 0.0
    %36 = vmatpush1.msra.mxu0 %v17
    %37 = vmatprep.subr.mxu0 0.0
    %38 = vmatpush1.msra.mxu0 %v18
    %39 = vmatprep.subr.mxu0 0.0
    %40 = vmatpush1.msra.mxu0 %v19
    %41 = vmatprep.subr.mxu0 0.0
    %42 = vmatpush1.msra.mxu0 %v20
    %43 = vmatprep.subr.mxu0 0.0
    %44 = vmatpush1.msra.mxu0 0.0
    %45 = vmatprep.subr.mxu0 0.0
    %46 = vmatpush1.msra.mxu0 0.0
    %47 = vmatprep.subr.mxu0 0.0
    %48 = vmatpush1.msra.mxu0 0.0
    %49 = vmatprep.subr.mxu0 0.0
    %50 = vmatpush1.msra.mxu0 0.0
    %51 = vmatprep.subr.mxu0 0.0
    %52 = vmatpush1.msra.mxu0 0.0
    %53 = vmatprep.subr.mxu0 0.0
    %54 = vmatpush1.msra.mxu0 0.0
    %55 = vmatprep.subr.mxu0 0.0
    %56 = vmatpush1.msra.mxu0 0.0
    %57 = vmatprep.subr.mxu0 0.0
    %58 = vmatpush1.msra.mxu0 0.0
    %59 = vmatprep.subr.mxu0 0.0
    %60 = vmatpush1.msra.mxu0 0.0
    %61 = vmatprep.subr.mxu0 0.0
    %62 = vmatpush1.msra.mxu0 0.0
    %63 = vmatprep.subr.mxu0 0.0
    %64 = vmatpush1.msra.mxu0 0.0
    %65 = vmatprep.subr.mxu0 0.0
    %66 = vmatpush1.msra.mxu0 0.0
    %67 = vmatprep.subr.mxu0 0.0
    %68 = vmatpush1.msra.mxu0 0.0
    %69 = vmatprep.subr.mxu0 0.0
    %70 = vmatpush1.msra.mxu0 0.0
    %71 = vmatprep.subr.mxu0 0.0
    %72 = vmatpush1.msra.mxu0 0.0
    %73 = vmatprep.subr.mxu0 0.0
    %74 = vmatpush1.msra.mxu0 0.0
    %75 = vmatprep.subr.mxu0 0.0
    %76 = vmatpush1.msra.mxu0 0.0
    %77 = vmatprep.subr.mxu0 0.0
    %78 = vmatpush1.msra.mxu0 0.0
    %79 = vmatprep.subr.mxu0 0.0
    %80 = vmatpush1.msra.mxu0 0.0
    %81 = vmatprep.subr.mxu0 0.0
    %82 = vmatpush1.msra.mxu0 0.0
    %83 = vmatprep.subr.mxu0 0.0
    %84 = vmatpush1.msra.mxu0 0.0
    %85 = vmatprep.subr.mxu0 0.0
    %86 = vmatpush1.msra.mxu0 0.0
    %87 = vmatprep.subr.mxu0 0.0
    %88 = vmatpush1.msra.mxu0 0.0
    %89 = vmatprep.subr.mxu0 0.0
    %90 = vmatpush1.msra.mxu0 0.0
    %91 = vmatprep.subr.mxu0 0.0
    %92 = vmatpush1.msra.mxu0 0.0
    %93 = vmatprep.subr.mxu0 0.0
    %94 = vmatpush1.msra.mxu0 0.0
    %95 = vmatprep.subr.mxu0 0.0
    %96 = vmatpush1.msra.mxu0 0.0
    %97 = vmatprep.subr.mxu0 0.0
    %98 = vmatpush1.msra.mxu0 0.0
    %99 = vmatprep.mubr.f32.mxu0 0.0
    %100 = vmatmul.mubr.f32.gmra.mrb[0].mxu0 %v30
    %v101 = vpop.f32.mrb[0].mxu0
    %v102 = vadd.f32 %v26, %v101
    %v103 = vpop.f32.mrb[0].mxu0
    %104 = vmatprep.mubr.f32.mxu0 0.0
    %105 = vmatmul.mubr.f32.gmra.mrb[0].mxu0 %v33
    %v106 = vpop.f32.mrb[0].mxu0
    %v107 = vadd.f32 %v26, %v106
    %v108 = vpop.f32.mrb[0].mxu0
    %109 = vdwg.mxu0
    %vm110 = vcmask 490496
    %v111 = vsel %vm110, %v102, -inf
    %112 = vmax.xlane.f32.xlu0 %v111
    %v113 = vpop.xlane.xlu0 %112
    %v114 = vsel %vm110, %v107, -inf
    %115 = vmax.xlane.f32.xlu0 %v114
    %v116 = vpop.xlane.xlu0 %115
    %v117 = vsub.f32 %v102, %v113
    %v118 = vsub.f32 %v107, %v116
    %v119 = vmul.f32 %v117, 1.442695
    %v120 = vpow.pop %v119
    %v121 = vmul.f32 %v118, 1.442695
    %v122 = vpow.pop %v121
    %v123 = vsel %vm110, %v120, 0.0
    %124 = vadd.xlane.f32.xlu0 %v123
    %v125 = vpop.xlane.xlu0 %124
    %v126 = vsel %vm110, %v122, 0.0
    %127 = vadd.xlane.f32.xlu0 %v126
    %v128 = vpop.xlane.xlu0 %127
    %v129 = vrcp.pop %v125
    %v130 = vmul.f32 %v120, %v129
    %v131 = vrcp.pop %v128
    %v132 = vmul.f32 %v122, %v131
    %133 = vst.msk [vmem:[#allocation2] sm:$0xff] %vm110, %v130
    %134 = vst.msk [vmem:[#allocation2 + $0x8] sm:$0xff] %vm110, %v132
    // Predicated region
    $region14: #{transformer_forward.21} parent=1 // pred_check
      _
    $region15: #{transformer_forward.21} parent=1 // pred_check_branch
      %136 = sbr.rel (0) target = $region17
    $region16: #{transformer_forward.21} parent=1 // pred_region
      %s138 = ssub.s32 256, 256
      %139 = vsyncadd [#allocation3], %s138
      %s140 = sshll.u32 [#allocation2], 4
      %s141 = int_to_ptr.vmem [resolvable:$true] %s140
      %146 = dma.vmem_to_hbm [thread:$0]  %s141, 256, %s3, [#allocation3], 128, 128, 8
    $region17: #{transformer_forward.21} parent=1 // pred_fallthru
      _
    // Predicated region
    $region18: #{transformer_forward.21} parent=1 // pred_check
      _
    $region19: #{transformer_forward.21} parent=1 // pred_check_branch
      %148 = sbr.rel (0) target = $region21
    $region20: #{transformer_forward.21} parent=1 // pred_region
      %149 = dma.done [#allocation3], 256
    $region21: #{transformer_forward.21} parent=1 // pred_fallthru
      _
    %150 = vsyncpa [#allocation3], 1

// kernel: transformer_forward.11
$region0: #{transformer_forward.11}
  #allocation0 [shape = 'u32[]', space=smem, size = 0x4, offset = 0x4, fixed_abs, tag = 'smem constant byte address 0x4 - core index']
  #allocation1 [shape = 'u32[144,128]{1,0:T(1,128)}', space=vmem, size = 0x12000, scoped, tag = 'internal scratch']
  %s0 = inlined_call_operand.vmem [shape: f32[2,8,32], index: 0, kind: input, shape index: {}]
  %s1 = inlined_call_operand.vmem [shape: f32[32,96], index: 1, kind: input, shape index: {}]
  %s2 = inlined_call_operand.vmem [shape: f32[1,96], index: 2, kind: input, shape index: {}]
  %s3 = inlined_call_operand.vmem [shape: f32[2,32,8], index: 3, kind: output, shape index: {}]
  %s4 = sld [smem:[#allocation0]]
  $region22: #{transformer_forward.11} parent=0
    _
  %s6 = ssub.s32 1, %s4
  %s7 = scalar_select 0, %s6, %s4
  // Predicated region
  $region2: #{transformer_forward.11} parent=0 // pred_check
    _
  $region3: #{transformer_forward.11} parent=0 // pred_check_branch
    %9 = sbr.rel (0) target = $region5
  $region4: #{transformer_forward.11} parent=0 // pred_region
    _
  $region5: #{transformer_forward.11} parent=0 // pred_fallthru
    _
  // Predicated region
  $region6: #{transformer_forward.11} parent=0 // pred_check
    _
  $region7: #{transformer_forward.11} parent=0 // pred_check_branch
    %11 = sbr.rel (0) target = $region9
  $region8: #{transformer_forward.11} parent=0 // pred_region
    _
  $region9: #{transformer_forward.11} parent=0 // pred_fallthru
    _
  // Predicated region
  $region10: #{transformer_forward.11} parent=0 // pred_check
    _
  $region11: #{transformer_forward.11} parent=0 // pred_check_branch
    %13 = sbr.rel (0) target = $region13
  $region12: #{transformer_forward.11} parent=0 // pred_region
    _
  $region13: #{transformer_forward.11} parent=0 // pred_fallthru
    _
  %v14 = vld [vmem:[%s0] sm:$0xff]
  %v15 = vld [vmem:[%s0 + $0x8] sm:$0xff]
  %v16 = vld [vmem:[%s1] sm:$0xff]
  %v17 = vld [vmem:[%s1 + $0x8] sm:$0xff]
  %v18 = vld [vmem:[%s1 + $0x10] sm:$0xff]
  %v19 = vld [vmem:[%s1 + $0x18] sm:$0xff]
  %v20 = vld [vmem:[%s2] sm:$0x1]
  %v22 = vlaneseq
  %v23 = vshrl.u32 %v22, 7
  %v24 = vsub.s32 0, %v23
  %v25 = vrot.slane %v20, %v24
  %vm27 = vcmask 261120
  %v29 = vsel %vm27, %v14, 0
  %v32 = vsel %vm27, %v15, 0
  %34 = vmatprep.subr.mxu0 0.0
  %35 = vmatpush1.msra.mxu0 %v16
  %36 = vmatprep.subr.mxu0 0.0
  %37 = vmatpush1.msra.mxu0 %v17
  %38 = vmatprep.subr.mxu0 0.0
  %39 = vmatpush1.msra.mxu0 %v18
  %40 = vmatprep.subr.mxu0 0.0
  %41 = vmatpush1.msra.mxu0 %v19
  %42 = vmatprep.subr.mxu0 0.0
  %43 = vmatpush1.msra.mxu0 0.0
  %44 = vmatprep.subr.mxu0 0.0
  %45 = vmatpush1.msra.mxu0 0.0
  %46 = vmatprep.subr.mxu0 0.0
  %47 = vmatpush1.msra.mxu0 0.0
  %48 = vmatprep.subr.mxu0 0.0
  %49 = vmatpush1.msra.mxu0 0.0
  %50 = vmatprep.subr.mxu0 0.0
  %51 = vmatpush1.msra.mxu0 0.0
  %52 = vmatprep.subr.mxu0 0.0
  %53 = vmatpush1.msra.mxu0 0.0
  %54 = vmatprep.subr.mxu0 0.0
  %55 = vmatpush1.msra.mxu0 0.0
  %56 = vmatprep.subr.mxu0 0.0
  %57 = vmatpush1.msra.mxu0 0.0
  %58 = vmatprep.subr.mxu0 0.0
  %59 = vmatpush1.msra.mxu0 0.0
  %60 = vmatprep.subr.mxu0 0.0
  %61 = vmatpush1.msra.mxu0 0.0
  %62 = vmatprep.subr.mxu0 0.0
  %63 = vmatpush1.msra.mxu0 0.0
  %64 = vmatprep.subr.mxu0 0.0
  %65 = vmatpush1.msra.mxu0 0.0
  %66 = vmatprep.subr.mxu0 0.0
  %67 = vmatpush1.msra.mxu0 0.0
  %68 = vmatprep.subr.mxu0 0.0
  %69 = vmatpush1.msra.mxu0 0.0
  %70 = vmatprep.subr.mxu0 0.0
  %71 = vmatpush1.msra.mxu0 0.0
  %72 = vmatprep.subr.mxu0 0.0
  %73 = vmatpush1.msra.mxu0 0.0
  %74 = vmatprep.subr.mxu0 0.0
  %75 = vmatpush1.msra.mxu0 0.0
  %76 = vmatprep.subr.mxu0 0.0
  %77 = vmatpush1.msra.mxu0 0.0
  %78 = vmatprep.subr.mxu0 0.0
  %79 = vmatpush1.msra.mxu0 0.0
  %80 = vmatprep.subr.mxu0 0.0
  %81 = vmatpush1.msra.mxu0 0.0
  %82 = vmatprep.subr.mxu0 0.0
  %83 = vmatpush1.msra.mxu0 0.0
  %84 = vmatprep.subr.mxu0 0.0
  %85 = vmatpush1.msra.mxu0 0.0
  %86 = vmatprep.subr.mxu0 0.0
  %87 = vmatpush1.msra.mxu0 0.0
  %88 = vmatprep.subr.mxu0 0.0
  %89 = vmatpush1.msra.mxu0 0.0
  %90 = vmatprep.subr.mxu0 0.0
  %91 = vmatpush1.msra.mxu0 0.0
  %92 = vmatprep.subr.mxu0 0.0
  %93 = vmatpush1.msra.mxu0 0.0
  %94 = vmatprep.subr.mxu0 0.0
  %95 = vmatpush1.msra.mxu0 0.0
  %96 = vmatprep.subr.mxu0 0.0
  %97 = vmatpush1.msra.mxu0 0.0
  %98 = vmatprep.mubr.f32.mxu0 0.0
  %99 = vmatmul.mubr.f32.gmra.mrb[0].mxu0 %v29
  %v100 = vpop.f32.mrb[0].mxu0
  %v101 = vadd.f32 %v25, %v100
  %v102 = vpop.f32.mrb[0].mxu0
  %103 = vmatprep.mubr.f32.mxu0 0.0
  %104 = vmatmul.mubr.f32.gmra.mrb[0].mxu0 %v32
  %v105 = vpop.f32.mrb[0].mxu0
  %v106 = vadd.f32 %v25, %v105
  %v107 = vpop.f32.mrb[0].mxu0
  %108 = vdwg.mxu0
  %110 = vrot.lane.b32.xlu0 %v101, 96
  %v111 = vpop.permute.xlu0 %110
  %vm112 = vcmask 64512
  %v113 = vsel %vm112, %v101, 0
  %v115 = vsel %vm112, %v111, 0
  %117 = vmatprep.subr.mxu0 0.0
  %118 = vmatpush1.xpose.msra.mxu0 %v115
  %119 = vmatprep.subr.mxu0 0.0
  %120 = vmatpush1.xpose.msra.mxu0 0.0
  %121 = vmatprep.subr.mxu0 0.0
  %122 = vmatpush1.xpose.msra.mxu0 0.0
  %123 = vmatprep.subr.mxu0 0.0
  %124 = vmatpush1.xpose.msra.mxu0 0.0
  %125 = vmatprep.subr.mxu0 0.0
  %126 = vmatpush1.xpose.msra.mxu0 0.0
  %127 = vmatprep.subr.mxu0 0.0
  %128 = vmatpush1.xpose.msra.mxu0 0.0
  %129 = vmatprep.subr.mxu0 0.0
  %130 = vmatpush1.xpose.msra.mxu0 0.0
  %131 = vmatprep.subr.mxu0 0.0
  %132 = vmatpush1.xpose.msra.mxu0 0.0
  %133 = vmatprep.subr.mxu0 0.0
  %134 = vmatpush1.xpose.msra.mxu0 0.0
  %135 = vmatprep.subr.mxu0 0.0
  %136 = vmatpush1.xpose.msra.mxu0 0.0
  %137 = vmatprep.subr.mxu0 0.0
  %138 = vmatpush1.xpose.msra.mxu0 0.0
  %139 = vmatprep.subr.mxu0 0.0
  %140 = vmatpush1.xpose.msra.mxu0 0.0
  %141 = vmatprep.subr.mxu0 0.0
  %142 = vmatpush1.xpose.msra.mxu0 0.0
  %143 = vmatprep.subr.mxu0 0.0
  %144 = vmatpush1.xpose.msra.mxu0 0.0
  %145 = vmatprep.subr.mxu0 0.0
  %146 = vmatpush1.xpose.msra.mxu0 0.0
  %147 = vmatprep.subr.mxu0 0.0
  %148 = vmatpush1.xpose.msra.mxu0 0.0
  %149 = vmatprep.subr.mxu0 0.0
  %150 = vmatpush1.xpose.msra.mxu0 0.0
  %151 = vmatprep.subr.mxu0 0.0
  %152 = vmatpush1.xpose.msra.mxu0 0.0
  %153 = vmatprep.subr.mxu0 0.0
  %154 = vmatpush1.xpose.msra.mxu0 0.0
  %155 = vmatprep.subr.mxu0 0.0
  %156 = vmatpush1.xpose.msra.mxu0 0.0
  %157 = vmatprep.subr.mxu0 0.0
  %158 = vmatpush1.xpose.msra.mxu0 0.0
  %159 = vmatprep.subr.mxu0 0.0
  %160 = vmatpush1.xpose.msra.mxu0 0.0
  %161 = vmatprep.subr.mxu0 0.0
  %162 = vmatpush1.xpose.msra.mxu0 0.0
  %163 = vmatprep.subr.mxu0 0.0
  %164 = vmatpush1.xpose.msra.mxu0 0.0
  %165 = vmatprep.subr.mxu0 0.0
  %166 = vmatpush1.xpose.msra.mxu0 0.0
  %167 = vmatprep.subr.mxu0 0.0
  %168 = vmatpush1.xpose.msra.mxu0 0.0
  %169 = vmatprep.subr.mxu0 0.0
  %170 = vmatpush1.xpose.msra.mxu0 0.0
  %171 = vmatprep.subr.mxu0 0.0
  %172 = vmatpush1.xpose.msra.mxu0 0.0
  %173 = vmatprep.subr.mxu0 0.0
  %174 = vmatpush1.xpose.msra.mxu0 0.0
  %175 = vmatprep.subr.mxu0 0.0
  %176 = vmatpush1.xpose.msra.mxu0 0.0
  %177 = vmatprep.subr.mxu0 0.0
  %178 = vmatpush1.xpose.msra.mxu0 0.0
  %179 = vmatprep.subr.mxu0 0.0
  %180 = vmatpush1.xpose.msra.mxu0 0.0
  %181 = vmatprep.mubr.f32.mxu0 0.0
  %182 = vmatmul.mubr.f32.gmra.mrb[0].mxu0 %v113
  %v183 = vpop.f32.mrb[0].mxu0
  %v184 = vadd.f32 0.0, %v183
  %v185 = vpop.f32.mrb[0].mxu0
  %186 = vdwg.mxu0
  %188 = vrot.lane.b32.xlu0 %v106, 96
  %v189 = vpop.permute.xlu0 %188
  %v190 = vsel %vm112, %v106, 0
  %v192 = vsel %vm112, %v189, 0
  %194 = vmatprep.subr.mxu0 0.0
  %195 = vmatpush1.xpose.msra.mxu0 %v192
  %196 = vmatprep.subr.mxu0 0.0
  %197 = vmatpush1.xpose.msra.mxu0 0.0
  %198 = vmatprep.subr.mxu0 0.0
  %199 = vmatpush1.xpose.msra.mxu0 0.0
  %200 = vmatprep.subr.mxu0 0.0
  %201 = vmatpush1.xpose.msra.mxu0 0.0
  %202 = vmatprep.subr.mxu0 0.0
  %203 = vmatpush1.xpose.msra.mxu0 0.0
  %204 = vmatprep.subr.mxu0 0.0
  %205 = vmatpush1.xpose.msra.mxu0 0.0
  %206 = vmatprep.subr.mxu0 0.0
  %207 = vmatpush1.xpose.msra.mxu0 0.0
  %208 = vmatprep.subr.mxu0 0.0
  %209 = vmatpush1.xpose.msra.mxu0 0.0
  %210 = vmatprep.subr.mxu0 0.0
  %211 = vmatpush1.xpose.msra.mxu0 0.0
  %212 = vmatprep.subr.mxu0 0.0
  %213 = vmatpush1.xpose.msra.mxu0 0.0
  %214 = vmatprep.subr.mxu0 0.0
  %215 = vmatpush1.xpose.msra.mxu0 0.0
  %216 = vmatprep.subr.mxu0 0.0
  %217 = vmatpush1.xpose.msra.mxu0 0.0
  %218 = vmatprep.subr.mxu0 0.0
  %219 = vmatpush1.xpose.msra.mxu0 0.0
  %220 = vmatprep.subr.mxu0 0.0
  %221 = vmatpush1.xpose.msra.mxu0 0.0
  %222 = vmatprep.subr.mxu0 0.0
  %223 = vmatpush1.xpose.msra.mxu0 0.0
  %224 = vmatprep.subr.mxu0 0.0
  %225 = vmatpush1.xpose.msra.mxu0 0.0
  %226 = vmatprep.subr.mxu0 0.0
  %227 = vmatpush1.xpose.msra.mxu0 0.0
  %228 = vmatprep.subr.mxu0 0.0
  %229 = vmatpush1.xpose.msra.mxu0 0.0
  %230 = vmatprep.subr.mxu0 0.0
  %231 = vmatpush1.xpose.msra.mxu0 0.0
  %232 = vmatprep.subr.mxu0 0.0
  %233 = vmatpush1.xpose.msra.mxu0 0.0
  %234 = vmatprep.subr.mxu0 0.0
  %235 = vmatpush1.xpose.msra.mxu0 0.0
  %236 = vmatprep.subr.mxu0 0.0
  %237 = vmatpush1.xpose.msra.mxu0 0.0
  %238 = vmatprep.subr.mxu0 0.0
  %239 = vmatpush1.xpose.msra.mxu0 0.0
  %240 = vmatprep.subr.mxu0 0.0
  %241 = vmatpush1.xpose.msra.mxu0 0.0
  %242 = vmatprep.subr.mxu0 0.0
  %243 = vmatpush1.xpose.msra.mxu0 0.0
  %244 = vmatprep.subr.mxu0 0.0
  %245 = vmatpush1.xpose.msra.mxu0 0.0
  %246 = vmatprep.subr.mxu0 0.0
  %247 = vmatpush1.xpose.msra.mxu0 0.0
  %248 = vmatprep.subr.mxu0 0.0
  %249 = vmatpush1.xpose.msra.mxu0 0.0
  %250 = vmatprep.subr.mxu0 0.0
  %251 = vmatpush1.xpose.msra.mxu0 0.0
  %252 = vmatprep.subr.mxu0 0.0
  %253 = vmatpush1.xpose.msra.mxu0 0.0
  %254 = vmatprep.subr.mxu0 0.0
  %255 = vmatpush1.xpose.msra.mxu0 0.0
  %256 = vmatprep.subr.mxu0 0.0
  %257 = vmatpush1.xpose.msra.mxu0 0.0
  %258 = vmatprep.mubr.f32.mxu0 0.0
  %259 = vmatmul.mubr.f32.gmra.mrb[0].mxu0 %v190
  %v260 = vpop.f32.mrb[0].mxu0
  %v261 = vadd.f32 0.0, %v260
  %v262 = vpop.f32.mrb[0].mxu0
  %263 = vdwg.mxu0
  %v264 = vmul.f32 %v184, 0.35355338
  %v265 = vmul.f32 %v261, 0.35355338
  %v266 = vsel %vm112, %v264, -inf
  %267 = vmax.xlane.f32.xlu0 %v266
  %v268 = vpop.xlane.xlu0 %267
  %v269 = vsel %vm112, %v265, -inf
  %270 = vmax.xlane.f32.xlu0 %v269
  %v271 = vpop.xlane.xlu0 %270
  %v272 = vsub.f32 %v264, %v268
  %v273 = vsub.f32 %v265, %v271
  %v274 = vmul.f32 %v272, 1.442695
  %v275 = vpow.pop %v274
  %v276 = vmul.f32 %v273, 1.442695
  %v277 = vpow.pop %v276
  %v278 = vsel %vm112, %v275, 0.0
  %279 = vadd.xlane.f32.xlu0 %v278
  %v280 = vpop.xlane.xlu0 %279
  %v281 = vsel %vm112, %v277, 0.0
  %282 = vadd.xlane.f32.xlu0 %v281
  %v283 = vpop.xlane.xlu0 %282
  %v284 = vrcp.pop %v280
  %v285 = vrcp.pop %v283
  %v286 = vmul.f32 %v275, %v284
  %v287 = vmul.f32 %v277, %v285
  %288 = vrot.lane.b32.xlu0 %v101, 64
  %v289 = vpop.permute.xlu0 %288
  %291 = vxpose.xlu0.b32.start [1/16] %v289, 128
  %292 = vxpose.xlu0.b32.cont [2/16] 0.0, 128
  %293 = vxpose.xlu0.b32.cont [3/16] 0.0, 128
  %294 = vxpose.xlu0.b32.cont [4/16] 0.0, 128
  %295 = vxpose.xlu0.b32.cont [5/16] 0.0, 128
  %296 = vxpose.xlu0.b32.cont [6/16] 0.0, 128
  %297 = vxpose.xlu0.b32.cont [7/16] 0.0, 128
  %298 = vxpose.xlu0.b32.cont [8/16] 0.0, 128
  %299 = vxpose.xlu0.b32.cont [9/16] 0.0, 128
  %300 = vxpose.xlu0.b32.cont [10/16] 0.0, 128
  %301 = vxpose.xlu0.b32.cont [11/16] 0.0, 128
  %302 = vxpose.xlu0.b32.cont [12/16] 0.0, 128
  %303 = vxpose.xlu0.b32.cont [13/16] 0.0, 128
  %304 = vxpose.xlu0.b32.cont [14/16] 0.0, 128
  %305 = vxpose.xlu0.b32.cont [15/16] 0.0, 128
  %306 = vxpose.xlu0.b32.end [16/16] 0.0, 128
  %v307 = vpop.trf.xlu0
  %v308 = vpop.trf.xlu0
  %v309 = vpop.trf.xlu0
  %v310 = vpop.trf.xlu0
  %v311 = vpop.trf.xlu0
  %v312 = vpop.trf.xlu0
  %v313 = vpop.trf.xlu0
  %v314 = vpop.trf.xlu0
  %v315 = vpop.trf.xlu0
  %v316 = vpop.trf.xlu0
  %v317 = vpop.trf.xlu0
  %v318 = vpop.trf.xlu0
  %v319 = vpop.trf.xlu0
  %v320 = vpop.trf.xlu0
  %v321 = vpop.trf.xlu0
  %v322 = vpop.trf.xlu0
  %v324 = vsel %vm112, %v307, 0
  %v327 = vsel %vm112, %v286, 0
  %329 = vmatprep.subr.mxu0 0.0
  %330 = vmatpush1.xpose.msra.mxu0 %v327
  %331 = vmatprep.subr.mxu0 0.0
  %332 = vmatpush1.xpose.msra.mxu0 0.0
  %333 = vmatprep.subr.mxu0 0.0
  %334 = vmatpush1.xpose.msra.mxu0 0.0
  %335 = vmatprep.subr.mxu0 0.0
  %336 = vmatpush1.xpose.msra.mxu0 0.0
  %337 = vmatprep.subr.mxu0 0.0
  %338 = vmatpush1.xpose.msra.mxu0 0.0
  %339 = vmatprep.subr.mxu0 0.0
  %340 = vmatpush1.xpose.msra.mxu0 0.0
  %341 = vmatprep.subr.mxu0 0.0
  %342 = vmatpush1.xpose.msra.mxu0 0.0
  %343 = vmatprep.subr.mxu0 0.0
  %344 = vmatpush1.xpose.msra.mxu0 0.0
  %345 = vmatprep.subr.mxu0 0.0
  %346 = vmatpush1.xpose.msra.mxu0 0.0
  %347 = vmatprep.subr.mxu0 0.0
  %348 = vmatpush1.xpose.msra.mxu0 0.0
  %349 = vmatprep.subr.mxu0 0.0
  %350 = vmatpush1.xpose.msra.mxu0 0.0
  %351 = vmatprep.subr.mxu0 0.0
  %352 = vmatpush1.xpose.msra.mxu0 0.0
  %353 = vmatprep.subr.mxu0 0.0
  %354 = vmatpush1.xpose.msra.mxu0 0.0
  %355 = vmatprep.subr.mxu0 0.0
  %356 = vmatpush1.xpose.msra.mxu0 0.0
  %357 = vmatprep.subr.mxu0 0.0
  %358 = vmatpush1.xpose.msra.mxu0 0.0
  %359 = vmatprep.subr.mxu0 0.0
  %360 = vmatpush1.xpose.msra.mxu0 0.0
  %361 = vmatprep.subr.mxu0 0.0
  %362 = vmatpush1.xpose.msra.mxu0 0.0
  %363 = vmatprep.subr.mxu0 0.0
  %364 = vmatpush1.xpose.msra.mxu0 0.0
  %365 = vmatprep.subr.mxu0 0.0
  %366 = vmatpush1.xpose.msra.mxu0 0.0
  %367 = vmatprep.subr.mxu0 0.0
  %368 = vmatpush1.xpose.msra.mxu0 0.0
  %369 = vmatprep.subr.mxu0 0.0
  %370 = vmatpush1.xpose.msra.mxu0 0.0
  %371 = vmatprep.subr.mxu0 0.0
  %372 = vmatpush1.xpose.msra.mxu0 0.0
  %373 = vmatprep.subr.mxu0 0.0
  %374 = vmatpush1.xpose.msra.mxu0 0.0
  %375 = vmatprep.subr.mxu0 0.0
  %376 = vmatpush1.xpose.msra.mxu0 0.0
  %377 = vmatprep.subr.mxu0 0.0
  %378 = vmatpush1.xpose.msra.mxu0 0.0
  %379 = vmatprep.subr.mxu0 0.0
  %380 = vmatpush1.xpose.msra.mxu0 0.0
  %381 = vmatprep.subr.mxu0 0.0
  %382 = vmatpush1.xpose.msra.mxu0 0.0
  %383 = vmatprep.subr.mxu0 0.0
  %384 = vmatpush1.xpose.msra.mxu0 0.0
  %385 = vmatprep.subr.mxu0 0.0
  %386 = vmatpush1.xpose.msra.mxu0 0.0
  %387 = vmatprep.subr.mxu0 0.0
  %388 = vmatpush1.xpose.msra.mxu0 0.0
  %389 = vmatprep.subr.mxu0 0.0
  %390 = vmatpush1.xpose.msra.mxu0 0.0
  %391 = vmatprep.subr.mxu0 0.0
  %392 = vmatpush1.xpose.msra.mxu0 0.0
  %393 = vmatprep.mubr.f32.mxu0 0.0
  %394 = vmatmul.mubr.f32.gmra.mrb[0].mxu0 %v324
  %v395 = vpop.f32.mrb[0].mxu0
  %v396 = vadd.f32 0.0, %v395
  %v397 = vpop.f32.mrb[0].mxu0
  %398 = vdwg.mxu0
  %399 = vrot.lane.b32.xlu0 %v106, 64
  %v400 = vpop.permute.xlu0 %399
  %402 = vxpose.xlu0.b32.start [1/16] %v400, 128
  %403 = vxpose.xlu0.b32.cont [2/16] 0.0, 128
  %404 = vxpose.xlu0.b32.cont [3/16] 0.0, 128
  %405 = vxpose.xlu0.b32.cont [4/16] 0.0, 128
  %406 = vxpose.xlu0.b32.cont [5/16] 0.0, 128
  %407 = vxpose.xlu0.b32.cont [6/16] 0.0, 128
  %408 = vxpose.xlu0.b32.cont [7/16] 0.0, 128
  %409 = vxpose.xlu0.b32.cont [8/16] 0.0, 128
  %410 = vxpose.xlu0.b32.cont [9/16] 0.0, 128
  %411 = vxpose.xlu0.b32.cont [10/16] 0.0, 128
  %412 = vxpose.xlu0.b32.cont [11/16] 0.0, 128
  %413 = vxpose.xlu0.b32.cont [12/16] 0.0, 128
  %414 = vxpose.xlu0.b32.cont [13/16] 0.0, 128
  %415 = vxpose.xlu0.b32.cont [14/16] 0.0, 128
  %416 = vxpose.xlu0.b32.cont [15/16] 0.0, 128
  %417 = vxpose.xlu0.b32.end [16/16] 0.0, 128
  %v418 = vpop.trf.xlu0
  %v419 = vpop.trf.xlu0
  %v420 = vpop.trf.xlu0
  %v421 = vpop.trf.xlu0
  %v422 = vpop.trf.xlu0
  %v423 = vpop.trf.xlu0
  %v424 = vpop.trf.xlu0
  %v425 = vpop.trf.xlu0
  %v426 = vpop.trf.xlu0
  %v427 = vpop.trf.xlu0
  %v428 = vpop.trf.xlu0
  %v429 = vpop.trf.xlu0
  %v430 = vpop.trf.xlu0
  %v431 = vpop.trf.xlu0
  %v432 = vpop.trf.xlu0
  %v433 = vpop.trf.xlu0
  %v435 = vsel %vm112, %v418, 0
  %v438 = vsel %vm112, %v287, 0
  %440 = vmatprep.subr.mxu0 0.0
  %441 = vmatpush1.xpose.msra.mxu0 %v438
  %442 = vmatprep.subr.mxu0 0.0
  %443 = vmatpush1.xpose.msra.mxu0 0.0
  %444 = vmatprep.subr.mxu0 0.0
  %445 = vmatpush1.xpose.msra.mxu0 0.0
  %446 = vmatprep.subr.mxu0 0.0
  %447 = vmatpush1.xpose.msra.mxu0 0.0
  %448 = vmatprep.subr.mxu0 0.0
  %449 = vmatpush1.xpose.msra.mxu0 0.0
  %450 = vmatprep.subr.mxu0 0.0
  %451 = vmatpush1.xpose.msra.mxu0 0.0
  %452 = vmatprep.subr.mxu0 0.0
  %453 = vmatpush1.xpose.msra.mxu0 0.0
  %454 = vmatprep.subr.mxu0 0.0
  %455 = vmatpush1.xpose.msra.mxu0 0.0
  %456 = vmatprep.subr.mxu0 0.0
  %457 = vmatpush1.xpose.msra.mxu0 0.0
  %458 = vmatprep.subr.mxu0 0.0
  %459 = vmatpush1.xpose.msra.mxu0 0.0
  %460 = vmatprep.subr.mxu0 0.0
  %461 = vmatpush1.xpose.msra.mxu0 0.0
  %462 = vmatprep.subr.mxu0 0.0
  %463 = vmatpush1.xpose.msra.mxu0 0.0
  %464 = vmatprep.subr.mxu0 0.0
  %465 = vmatpush1.xpose.msra.mxu0 0.0
  %466 = vmatprep.subr.mxu0 0.0
  %467 = vmatpush1.xpose.msra.mxu0 0.0
  %468 = vmatprep.subr.mxu0 0.0
  %469 = vmatpush1.xpose.msra.mxu0 0.0
  %470 = vmatprep.subr.mxu0 0.0
  %471 = vmatpush1.xpose.msra.mxu0 0.0
  %472 = vmatprep.subr.mxu0 0.0
  %473 = vmatpush1.xpose.msra.mxu0 0.0
  %474 = vmatprep.subr.mxu0 0.0
  %475 = vmatpush1.xpose.msra.mxu0 0.0
  %476 = vmatprep.subr.mxu0 0.0
  %477 = vmatpush1.xpose.msra.mxu0 0.0
  %478 = vmatprep.subr.mxu0 0.0
  %479 = vmatpush1.xpose.msra.mxu0 0.0
  %480 = vmatprep.subr.mxu0 0.0
  %481 = vmatpush1.xpose.msra.mxu0 0.0
  %482 = vmatprep.subr.mxu0 0.0
  %483 = vmatpush1.xpose.msra.mxu0 0.0
  %484 = vmatprep.subr.mxu0 0.0
  %485 = vmatpush1.xpose.msra.mxu0 0.0
  %486 = vmatprep.subr.mxu0 0.0
  %487 = vmatpush1.xpose.msra.mxu0 0.0
  %488 = vmatprep.subr.mxu0 0.0
  %489 = vmatpush1.xpose.msra.mxu0 0.0
  %490 = vmatprep.subr.mxu0 0.0
  %491 = vmatpush1.xpose.msra.mxu0 0.0
  %492 = vmatprep.subr.mxu0 0.0
  %493 = vmatpush1.xpose.msra.mxu0 0.0
  %494 = vmatprep.subr.mxu0 0.0
  %495 = vmatpush1.xpose.msra.mxu0 0.0
  %496 = vmatprep.subr.mxu0 0.0
  %497 = vmatpush1.xpose.msra.mxu0 0.0
  %498 = vmatprep.subr.mxu0 0.0
  %499 = vmatpush1.xpose.msra.mxu0 0.0
  %500 = vmatprep.subr.mxu0 0.0
  %501 = vmatpush1.xpose.msra.mxu0 0.0
  %502 = vmatprep.subr.mxu0 0.0
  %503 = vmatpush1.xpose.msra.mxu0 0.0
  %504 = vmatprep.mubr.f32.mxu0 0.0
  %505 = vmatmul.mubr.f32.gmra.mrb[0].mxu0 %v435
  %v506 = vpop.f32.mrb[0].mxu0
  %v507 = vadd.f32 0.0, %v506
  %v508 = vpop.f32.mrb[0].mxu0
  %509 = vdwg.mxu0
  %510 = vrot.lane.b32.xlu0 %v101, 120
  %v511 = vpop.permute.xlu0 %510
  %512 = vrot.lane.b32.xlu0 %v101, 88
  %v513 = vpop.permute.xlu0 %512
  %v514 = vsel %vm112, %v511, 0
  %v516 = vsel %vm112, %v513, 0
  %518 = vmatprep.subr.mxu0 0.0
  %519 = vmatpush1.xpose.msra.mxu0 %v516
  %520 = vmatprep.subr.mxu0 0.0
  %521 = vmatpush1.xpose.msra.mxu0 0.0
  %522 = vmatprep.subr.mxu0 0.0
  %523 = vmatpush1.xpose.msra.mxu0 0.0
  %524 = vmatprep.subr.mxu0 0.0
  %525 = vmatpush1.xpose.msra.mxu0 0.0
  %526 = vmatprep.subr.mxu0 0.0
  %527 = vmatpush1.xpose.msra.mxu0 0.0
  %528 = vmatprep.subr.mxu0 0.0
  %529 = vmatpush1.xpose.msra.mxu0 0.0
  %530 = vmatprep.subr.mxu0 0.0
  %531 = vmatpush1.xpose.msra.mxu0 0.0
  %532 = vmatprep.subr.mxu0 0.0
  %533 = vmatpush1.xpose.msra.mxu0 0.0
  %534 = vmatprep.subr.mxu0 0.0
  %535 = vmatpush1.xpose.msra.mxu0 0.0
  %536 = vmatprep.subr.mxu0 0.0
  %537 = vmatpush1.xpose.msra.mxu0 0.0
  %538 = vmatprep.subr.mxu0 0.0
  %539 = vmatpush1.xpose.msra.mxu0 0.0
  %540 = vmatprep.subr.mxu0 0.0
  %541 = vmatpush1.xpose.msra.mxu0 0.0
  %542 = vmatprep.subr.mxu0 0.0
  %543 = vmatpush1.xpose.msra.mxu0 0.0
  %544 = vmatprep.subr.mxu0 0.0
  %545 = vmatpush1.xpose.msra.mxu0 0.0
  %546 = vmatprep.subr.mxu0 0.0
  %547 = vmatpush1.xpose.msra.mxu0 0.0
  %548 = vmatprep.subr.mxu0 0.0
  %549 = vmatpush1.xpose.msra.mxu0 0.0
  %550 = vmatprep.subr.mxu0 0.0
  %551 = vmatpush1.xpose.msra.mxu0 0.0
  %552 = vmatprep.subr.mxu0 0.0
  %553 = vmatpush1.xpose.msra.mxu0 0.0
  %554 = vmatprep.subr.mxu0 0.0
  %555 = vmatpush1.xpose.msra.mxu0 0.0
  %556 = vmatprep.subr.mxu0 0.0
  %557 = vmatpush1.xpose.msra.mxu0 0.0
  %558 = vmatprep.subr.mxu0 0.0
  %559 = vmatpush1.xpose.msra.mxu0 0.0
  %560 = vmatprep.subr.mxu0 0.0
  %561 = vmatpush1.xpose.msra.mxu0 0.0
  %562 = vmatprep.subr.mxu0 0.0
  %563 = vmatpush1.xpose.msra.mxu0 0.0
  %564 = vmatprep.subr.mxu0 0.0
  %565 = vmatpush1.xpose.msra.mxu0 0.0
  %566 = vmatprep.subr.mxu0 0.0
  %567 = vmatpush1.xpose.msra.mxu0 0.0
  %568 = vmatprep.subr.mxu0 0.0
  %569 = vmatpush1.xpose.msra.mxu0 0.0
  %570 = vmatprep.subr.mxu0 0.0
  %571 = vmatpush1.xpose.msra.mxu0 0.0
  %572 = vmatprep.subr.mxu0 0.0
  %573 = vmatpush1.xpose.msra.mxu0 0.0
  %574 = vmatprep.subr.mxu0 0.0
  %575 = vmatpush1.xpose.msra.mxu0 0.0
  %576 = vmatprep.subr.mxu0 0.0
  %577 = vmatpush1.xpose.msra.mxu0 0.0
  %578 = vmatprep.subr.mxu0 0.0
  %579 = vmatpush1.xpose.msra.mxu0 0.0
  %580 = vmatprep.subr.mxu0 0.0
  %581 = vmatpush1.xpose.msra.mxu0 0.0
  %582 = vmatprep.mubr.f32.mxu0 0.0
  %583 = vmatmul.mubr.f32.gmra.mrb[0].mxu0 %v514
  %v584 = vpop.f32.mrb[0].mxu0
  %v585 = vadd.f32 0.0, %v584
  %v586 = vpop.f32.mrb[0].mxu0
  %587 = vdwg.mxu0
  %588 = vrot.lane.b32.xlu0 %v106, 120
  %v589 = vpop.permute.xlu0 %588
  %590 = vrot.lane.b32.xlu0 %v106, 88
  %v591 = vpop.permute.xlu0 %590
  %v592 = vsel %vm112, %v589, 0
  %v594 = vsel %vm112, %v591, 0
  %596 = vmatprep.subr.mxu0 0.0
  %597 = vmatpush1.xpose.msra.mxu0 %v594
  %598 = vmatprep.subr.mxu0 0.0
  %599 = vmatpush1.xpose.msra.mxu0 0.0
  %600 = vmatprep.subr.mxu0 0.0
  %601 = vmatpush1.xpose.msra.mxu0 0.0
  %602 = vmatprep.subr.mxu0 0.0
  %603 = vmatpush1.xpose.msra.mxu0 0.0
  %604 = vmatprep.subr.mxu0 0.0
  %605 = vmatpush1.xpose.msra.mxu0 0.0
  %606 = vmatprep.subr.mxu0 0.0
  %607 = vmatpush1.xpose.msra.mxu0 0.0
  %608 = vmatprep.subr.mxu0 0.0
  %609 = vmatpush1.xpose.msra.mxu0 0.0
  %610 = vmatprep.subr.mxu0 0.0
  %611 = vmatpush1.xpose.msra.mxu0 0.0
  %612 = vmatprep.subr.mxu0 0.0
  %613 = vmatpush1.xpose.msra.mxu0 0.0
  %614 = vmatprep.subr.mxu0 0.0
  %615 = vmatpush1.xpose.msra.mxu0 0.0
  %616 = vmatprep.subr.mxu0 0.0
  %617 = vmatpush1.xpose.msra.mxu0 0.0
  %618 = vmatprep.subr.mxu0 0.0
  %619 = vmatpush1.xpose.msra.mxu0 0.0
  %620 = vmatprep.subr.mxu0 0.0
  %621 = vmatpush1.xpose.msra.mxu0 0.0
  %622 = vmatprep.subr.mxu0 0.0
  %623 = vmatpush1.xpose.msra.mxu0 0.0
  %624 = vmatprep.subr.mxu0 0.0
  %625 = vmatpush1.xpose.msra.mxu0 0.0
  %626 = vmatprep.subr.mxu0 0.0
  %627 = vmatpush1.xpose.msra.mxu0 0.0
  %628 = vmatprep.subr.mxu0 0.0
  %629 = vmatpush1.xpose.msra.mxu0 0.0
  %630 = vmatprep.subr.mxu0 0.0
  %631 = vmatpush1.xpose.msra.mxu0 0.0
  %632 = vmatprep.subr.mxu0 0.0
  %633 = vmatpush1.xpose.msra.mxu0 0.0
  %634 = vmatprep.subr.mxu0 0.0
  %635 = vmatpush1.xpose.msra.mxu0 0.0
  %636 = vmatprep.subr.mxu0 0.0
  %637 = vmatpush1.xpose.msra.mxu0 0.0
  %638 = vmatprep.subr.mxu0 0.0
  %639 = vmatpush1.xpose.msra.mxu0 0.0
  %640 = vmatprep.subr.mxu0 0.0
  %641 = vmatpush1.xpose.msra.mxu0 0.0
  %642 = vmatprep.subr.mxu0 0.0
  %643 = vmatpush1.xpose.msra.mxu0 0.0
  %644 = vmatprep.subr.mxu0 0.0
  %645 = vmatpush1.xpose.msra.mxu0 0.0
  %646 = vmatprep.subr.mxu0 0.0
  %647 = vmatpush1.xpose.msra.mxu0 0.0
  %648 = vmatprep.subr.mxu0 0.0
  %649 = vmatpush1.xpose.msra.mxu0 0.0
  %650 = vmatprep.subr.mxu0 0.0
  %651 = vmatpush1.xpose.msra.mxu0 0.0
  %652 = vmatprep.subr.mxu0 0.0
  %653 = vmatpush1.xpose.msra.mxu0 0.0
  %654 = vmatprep.subr.mxu0 0.0
  %655 = vmatpush1.xpose.msra.mxu0 0.0
  %656 = vmatprep.subr.mxu0 0.0
  %657 = vmatpush1.xpose.msra.mxu0 0.0
  %658 = vmatprep.subr.mxu0 0.0
  %659 = vmatpush1.xpose.msra.mxu0 0.0
  %660 = vmatprep.mubr.f32.mxu0 0.0
  %661 = vmatmul.mubr.f32.gmra.mrb[0].mxu0 %v592
  %v662 = vpop.f32.mrb[0].mxu0
  %v663 = vadd.f32 0.0, %v662
  %v664 = vpop.f32.mrb[0].mxu0
  %665 = vdwg.mxu0
  %v666 = vmul.f32 %v585, 0.35355338
  %v667 = vmul.f32 %v663, 0.35355338
  %v668 = vsel %vm112, %v666, -inf
  %669 = vmax.xlane.f32.xlu0 %v668
  %v670 = vpop.xlane.xlu0 %669
  %v671 = vsel %vm112, %v667, -inf
  %672 = vmax.xlane.f32.xlu0 %v671
  %v673 = vpop.xlane.xlu0 %672
  %v674 = vsub.f32 %v666, %v670
  %v675 = vsub.f32 %v667, %v673
  %v676 = vmul.f32 %v674, 1.442695
  %v677 = vpow.pop %v676
  %v678 = vmul.f32 %v675, 1.442695
  %v679 = vpow.pop %v678
  %v680 = vsel %vm112, %v677, 0.0
  %681 = vadd.xlane.f32.xlu0 %v680
  %v682 = vpop.xlane.xlu0 %681
  %v683 = vsel %vm112, %v679, 0.0
  %684 = vadd.xlane.f32.xlu0 %v683
  %v685 = vpop.xlane.xlu0 %684
  %v686 = vrcp.pop %v682
  %v687 = vrcp.pop %v685
  %v688 = vmul.f32 %v677, %v686
  %v689 = vmul.f32 %v679, %v687
  %690 = vrot.lane.b32.xlu0 %v101, 56
  %v691 = vpop.permute.xlu0 %690
  %693 = vxpose.xlu0.b32.start [1/16] %v691, 128
  %694 = vxpose.xlu0.b32.cont [2/16] 0.0, 128
  %695 = vxpose.xlu0.b32.cont [3/16] 0.0, 128
  %696 = vxpose.xlu0.b32.cont [4/16] 0.0, 128
  %697 = vxpose.xlu0.b32.cont [5/16] 0.0, 128
  %698 = vxpose.xlu0.b32.cont [6/16] 0.0, 128
  %699 = vxpose.xlu0.b32.cont [7/16] 0.0, 128
  %700 = vxpose.xlu0.b32.cont [8/16] 0.0, 128
  %701 = vxpose.xlu0.b32.cont [9/16] 0.0, 128
  %702 = vxpose.xlu0.b32.cont [10/16] 0.0, 128
  %703 = vxpose.xlu0.b32.cont [11/16] 0.0, 128
  %704 = vxpose.xlu0.b32.cont [12/16] 0.0, 128
  %705 = vxpose.xlu0.b32.cont [13/16] 0.0, 128
  %706 = vxpose.xlu0.b32.cont [14/16] 0.0, 128
  %707 = vxpose.xlu0.b32.cont [15/16] 0.0, 128
  %708 = vxpose.xlu0.b32.end [16/16] 0.0, 128
  %v709 = vpop.trf.xlu0
  %v710 = vpop.trf.xlu0
  %v711 = vpop.trf.xlu0
  %v712 = vpop.trf.xlu0
  %v713 = vpop.trf.xlu0
  %v714 = vpop.trf.xlu0
  %v715 = vpop.trf.xlu0
  %v716 = vpop.trf.xlu0
  %v717 = vpop.trf.xlu0
  %v718 = vpop.trf.xlu0
  %v719 = vpop.trf.xlu0
  %v720 = vpop.trf.xlu0
  %v721 = vpop.trf.xlu0
  %v722 = vpop.trf.xlu0
  %v723 = vpop.trf.xlu0
  %v724 = vpop.trf.xlu0
  %v726 = vsel %vm112, %v709, 0
  %v729 = vsel %vm112, %v688, 0
  %731 = vmatprep.subr.mxu0 0.0
  %732 = vmatpush1.xpose.msra.mxu0 %v729
  %733 = vmatprep.subr.mxu0 0.0
  %734 = vmatpush1.xpose.msra.mxu0 0.0
  %735 = vmatprep.subr.mxu0 0.0
  %736 = vmatpush1.xpose.msra.mxu0 0.0
  %737 = vmatprep.subr.mxu0 0.0
  %738 = vmatpush1.xpose.msra.mxu0 0.0
  %739 = vmatprep.subr.mxu0 0.0
  %740 = vmatpush1.xpose.msra.mxu0 0.0
  %741 = vmatprep.subr.mxu0 0.0
  %742 = vmatpush1.xpose.msra.mxu0 0.0
  %743 = vmatprep.subr.mxu0 0.0
  %744 = vmatpush1.xpose.msra.mxu0 0.0
  %745 = vmatprep.subr.mxu0 0.0
  %746 = vmatpush1.xpose.msra.mxu0 0.0
  %747 = vmatprep.subr.mxu0 0.0
  %748 = vmatpush1.xpose.msra.mxu0 0.0
  %749 = vmatprep.subr.mxu0 0.0
  %750 = vmatpush1.xpose.msra.mxu0 0.0
  %751 = vmatprep.subr.mxu0 0.0
  %752 = vmatpush1.xpose.msra.mxu0 0.0
  %753 = vmatprep.subr.mxu0 0.0
  %754 = vmatpush1.xpose.msra.mxu0 0.0
  %755 = vmatprep.subr.mxu0 0.0
  %756 = vmatpush1.xpose.msra.mxu0 0.0
  %757 = vmatprep.subr.mxu0 0.0
  %758 = vmatpush1.xpose.msra.mxu0 0.0
  %759 = vmatprep.subr.mxu0 0.0
  %760 = vmatpush1.xpose.msra.mxu0 0.0
  %761 = vmatprep.subr.mxu0 0.0
  %762 = vmatpush1.xpose.msra.mxu0 0.0
  %763 = vmatprep.subr.mxu0 0.0
  %764 = vmatpush1.xpose.msra.mxu0 0.0
  %765 = vmatprep.subr.mxu0 0.0
  %766 = vmatpush1.xpose.msra.mxu0 0.0
  %767 = vmatprep.subr.mxu0 0.0
  %768 = vmatpush1.xpose.msra.mxu0 0.0
  %769 = vmatprep.subr.mxu0 0.0
  %770 = vmatpush1.xpose.msra.mxu0 0.0
  %771 = vmatprep.subr.mxu0 0.0
  %772 = vmatpush1.xpose.msra.mxu0 0.0
  %773 = vmatprep.subr.mxu0 0.0
  %774 = vmatpush1.xpose.msra.mxu0 0.0
  %775 = vmatprep.subr.mxu0 0.0
  %776 = vmatpush1.xpose.msra.mxu0 0.0
  %777 = vmatprep.subr.mxu0 0.0
  %778 = vmatpush1.xpose.msra.mxu0 0.0
  %779 = vmatprep.subr.mxu0 0.0
  %780 = vmatpush1.xpose.msra.mxu0 0.0
  %781 = vmatprep.subr.mxu0 0.0
  %782 = vmatpush1.xpose.msra.mxu0 0.0
  %783 = vmatprep.subr.mxu0 0.0
  %784 = vmatpush1.xpose.msra.mxu0 0.0
  %785 = vmatprep.subr.mxu0 0.0
  %786 = vmatpush1.xpose.msra.mxu0 0.0
  %787 = vmatprep.subr.mxu0 0.0
  %788 = vmatpush1.xpose.msra.mxu0 0.0
  %789 = vmatprep.subr.mxu0 0.0
  %790 = vmatpush1.xpose.msra.mxu0 0.0
  %791 = vmatprep.subr.mxu0 0.0
  %792 = vmatpush1.xpose.msra.mxu0 0.0
  %793 = vmatprep.subr.mxu0 0.0
  %794 = vmatpush1.xpose.msra.mxu0 0.0
  %795 = vmatprep.mubr.f32.mxu0 0.0
  %796 = vmatmul.mubr.f32.gmra.mrb[0].mxu0 %v726
  %v797 = vpop.f32.mrb[0].mxu0
  %v798 = vadd.f32 0.0, %v797
  %v799 = vpop.f32.mrb[0].mxu0
  %800 = vdwg.mxu0
  %801 = vrot.lane.b32.xlu0 %v106, 56
  %v802 = vpop.permute.xlu0 %801
  %804 = vxpose.xlu0.b32.start [1/16] %v802, 128
  %805 = vxpose.xlu0.b32.cont [2/16] 0.0, 128
  %806 = vxpose.xlu0.b32.cont [3/16] 0.0, 128
  %807 = vxpose.xlu0.b32.cont [4/16] 0.0, 128
  %808 = vxpose.xlu0.b32.cont [5/16] 0.0, 128
  %809 = vxpose.xlu0.b32.cont [6/16] 0.0, 128
  %810 = vxpose.xlu0.b32.cont [7/16] 0.0, 128
  %811 = vxpose.xlu0.b32.cont [8/16] 0.0, 128
  %812 = vxpose.xlu0.b32.cont [9/16] 0.0, 128
  %813 = vxpose.xlu0.b32.cont [10/16] 0.0, 128
  %814 = vxpose.xlu0.b32.cont [11/16] 0.0, 128
  %815 = vxpose.xlu0.b32.cont [12/16] 0.0, 128
  %816 = vxpose.xlu0.b32.cont [13/16] 0.0, 128
  %817 = vxpose.xlu0.b32.cont [14/16] 0.0, 128
  %818 = vxpose.xlu0.b32.cont [15/16] 0.0, 128
  %819 = vxpose.xlu0.b32.end [16/16] 0.0, 128
  %v820 = vpop.trf.xlu0
  %v821 = vpop.trf.xlu0
  %v822 = vpop.trf.xlu0
  %v823 = vpop.trf.xlu0
  %v824 = vpop.trf.xlu0
  %v825 = vpop.trf.xlu0
  %v826 = vpop.trf.xlu0
  %v827 = vpop.trf.xlu0
  %v828 = vpop.trf.xlu0
  %v829 = vpop.trf.xlu0
  %v830 = vpop.trf.xlu0
  %v831 = vpop.trf.xlu0
  %v832 = vpop.trf.xlu0
  %v833 = vpop.trf.xlu0
  %v834 = vpop.trf.xlu0
  %v835 = vpop.trf.xlu0
  %v837 = vsel %vm112, %v820, 0
  %v840 = vsel %vm112, %v689, 0
  %842 = vmatprep.subr.mxu0 0.0
  %843 = vmatpush1.xpose.msra.mxu0 %v840
  %844 = vmatprep.subr.mxu0 0.0
  %845 = vmatpush1.xpose.msra.mxu0 0.0
  %846 = vmatprep.subr.mxu0 0.0
  %847 = vmatpush1.xpose.msra.mxu0 0.0
  %848 = vmatprep.subr.mxu0 0.0
  %849 = vmatpush1.xpose.msra.mxu0 0.0
  %850 = vmatprep.subr.mxu0 0.0
  %851 = vmatpush1.xpose.msra.mxu0 0.0
  %852 = vmatprep.subr.mxu0 0.0
  %853 = vmatpush1.xpose.msra.mxu0 0.0
  %854 = vmatprep.subr.mxu0 0.0
  %855 = vmatpush1.xpose.msra.mxu0 0.0
  %856 = vmatprep.subr.mxu0 0.0
  %857 = vmatpush1.xpose.msra.mxu0 0.0
  %858 = vmatprep.subr.mxu0 0.0
  %859 = vmatpush1.xpose.msra.mxu0 0.0
  %860 = vmatprep.subr.mxu0 0.0
  %861 = vmatpush1.xpose.msra.mxu0 0.0
  %862 = vmatprep.subr.mxu0 0.0
  %863 = vmatpush1.xpose.msra.mxu0 0.0
  %864 = vmatprep.subr.mxu0 0.0
  %865 = vmatpush1.xpose.msra.mxu0 0.0
  %866 = vmatprep.subr.mxu0 0.0
  %867 = vmatpush1.xpose.msra.mxu0 0.0
  %868 = vmatprep.subr.mxu0 0.0
  %869 = vmatpush1.xpose.msra.mxu0 0.0
  %870 = vmatprep.subr.mxu0 0.0
  %871 = vmatpush1.xpose.msra.mxu0 0.0
  %872 = vmatprep.subr.mxu0 0.0
  %873 = vmatpush1.xpose.msra.mxu0 0.0
  %874 = vmatprep.subr.mxu0 0.0
  %875 = vmatpush1.xpose.msra.mxu0 0.0
  %876 = vmatprep.subr.mxu0 0.0
  %877 = vmatpush1.xpose.msra.mxu0 0.0
  %878 = vmatprep.subr.mxu0 0.0
  %879 = vmatpush1.xpose.msra.mxu0 0.0
  %880 = vmatprep.subr.mxu0 0.0
  %881 = vmatpush1.xpose.msra.mxu0 0.0
  %882 = vmatprep.subr.mxu0 0.0
  %883 = vmatpush1.xpose.msra.mxu0 0.0
  %884 = vmatprep.subr.mxu0 0.0
  %885 = vmatpush1.xpose.msra.mxu0 0.0
  %886 = vmatprep.subr.mxu0 0.0
  %887 = vmatpush1.xpose.msra.mxu0 0.0
  %888 = vmatprep.subr.mxu0 0.0
  %889 = vmatpush1.xpose.msra.mxu0 0.0
  %890 = vmatprep.subr.mxu0 0.0
  %891 = vmatpush1.xpose.msra.mxu0 0.0
  %892 = vmatprep.subr.mxu0 0.0
  %893 = vmatpush1.xpose.msra.mxu0 0.0
  %894 = vmatprep.subr.mxu0 0.0
  %895 = vmatpush1.xpose.msra.mxu0 0.0
  %896 = vmatprep.subr.mxu0 0.0
  %897 = vmatpush1.xpose.msra.mxu0 0.0
  %898 = vmatprep.subr.mxu0 0.0
  %899 = vmatpush1.xpose.msra.mxu0 0.0
  %900 = vmatprep.subr.mxu0 0.0
  %901 = vmatpush1.xpose.msra.mxu0 0.0
  %902 = vmatprep.subr.mxu0 0.0
  %903 = vmatpush1.xpose.msra.mxu0 0.0
  %904 = vmatprep.subr.mxu0 0.0
  %905 = vmatpush1.xpose.msra.mxu0 0.0
  %906 = vmatprep.mubr.f32.mxu0 0.0
  %907 = vmatmul.mubr.f32.gmra.mrb[0].mxu0 %v837
  %v908 = vpop.f32.mrb[0].mxu0
  %v909 = vadd.f32 0.0, %v908
  %v910 = vpop.f32.mrb[0].mxu0
  %911 = vdwg.mxu0
  %912 = vrot.lane.b32.xlu0 %v101, 112
  %v913 = vpop.permute.xlu0 %912
  %914 = vrot.lane.b32.xlu0 %v101, 80
  %v915 = vpop.permute.xlu0 %914
  %v916 = vsel %vm112, %v913, 0
  %v918 = vsel %vm112, %v915, 0
  %920 = vmatprep.subr.mxu0 0.0
  %921 = vmatpush1.xpose.msra.mxu0 %v918
  %922 = vmatprep.subr.mxu0 0.0
  %923 = vmatpush1.xpose.msra.mxu0 0.0
  %924 = vmatprep.subr.mxu0 0.0
  %925 = vmatpush1.xpose.msra.mxu0 0.0
  %926 = vmatprep.subr.mxu0 0.0
  %927 = vmatpush1.xpose.msra.mxu0 0.0
  %928 = vmatprep.subr.mxu0 0.0
  %929 = vmatpush1.xpose.msra.mxu0 0.0
  %930 = vmatprep.subr.mxu0 0.0
  %931 = vmatpush1.xpose.msra.mxu0 0.0
  %932 = vmatprep.subr.mxu0 0.0
  %933 = vmatpush1.xpose.msra.mxu0 0.0
  %934 = vmatprep.subr.mxu0 0.0
  %935 = vmatpush1.xpose.msra.mxu0 0.0
  %936 = vmatprep.subr.mxu0 0.0
  %937 = vmatpush1.xpose.msra.mxu0 0.0
  %938 = vmatprep.subr.mxu0 0.0
  %939 = vmatpush1.xpose.msra.mxu0 0.0
  %940 = vmatprep.subr.mxu0 0.0
  %941 = vmatpush1.xpose.msra.mxu0 0.0
  %942 = vmatprep.subr.mxu0 0.0
  %943 = vmatpush1.xpose.msra.mxu0 0.0
  %944 = vmatprep.subr.mxu0 0.0
  %945 = vmatpush1.xpose.msra.mxu0 0.0
  %946 = vmatprep.subr.mxu0 0.0
  %947 = vmatpush1.xpose.msra.mxu0 0.0
  %948 = vmatprep.subr.mxu0 0.0
  %949 = vmatpush1.xpose.msra.mxu0 0.0
  %950 = vmatprep.subr.mxu0 0.0
  %951 = vmatpush1.xpose.msra.mxu0 0.0
  %952 = vmatprep.subr.mxu0 0.0
  %953 = vmatpush1.xpose.msra.mxu0 0.0
  %954 = vmatprep.subr.mxu0 0.0
  %955 = vmatpush1.xpose.msra.mxu0 0.0
  %956 = vmatprep.subr.mxu0 0.0
  %957 = vmatpush1.xpose.msra.mxu0 0.0
  %958 = vmatprep.subr.mxu0 0.0
  %959 = vmatpush1.xpose.msra.mxu0 0.0
  %960 = vmatprep.subr.mxu0 0.0
  %961 = vmatpush1.xpose.msra.mxu0 0.0
  %962 = vmatprep.subr.mxu0 0.0
  %963 = vmatpush1.xpose.msra.mxu0 0.0
  %964 = vmatprep.subr.mxu0 0.0
  %965 = vmatpush1.xpose.msra.mxu0 0.0
  %966 = vmatprep.subr.mxu0 0.0
  %967 = vmatpush1.xpose.msra.mxu0 0.0
  %968 = vmatprep.subr.mxu0 0.0
  %969 = vmatpush1.xpose.msra.mxu0 0.0
  %970 = vmatprep.subr.mxu0 0.0
  %971 = vmatpush1.xpose.msra.mxu0 0.0
  %972 = vmatprep.subr.mxu0 0.0
  %973 = vmatpush1.xpose.msra.mxu0 0.0
  %974 = vmatprep.subr.mxu0 0.0
  %975 = vmatpush1.xpose.msra.mxu0 0.0
  %976 = vmatprep.subr.mxu0 0.0
  %977 = vmatpush1.xpose.msra.mxu0 0.0
  %978 = vmatprep.subr.mxu0 0.0
  %979 = vmatpush1.xpose.msra.mxu0 0.0
  %980 = vmatprep.subr.mxu0 0.0
  %981 = vmatpush1.xpose.msra.mxu0 0.0
  %982 = vmatprep.subr.mxu0 0.0
  %983 = vmatpush1.xpose.msra.mxu0 0.0
  %984 = vmatprep.mubr.f32.mxu0 0.0
  %985 = vmatmul.mubr.f32.gmra.mrb[0].mxu0 %v916
  %v986 = vpop.f32.mrb[0].mxu0
  %v987 = vadd.f32 0.0, %v986
  %v988 = vpop.f32.mrb[0].mxu0
  %989 = vdwg.mxu0
  %990 = vrot.lane.b32.xlu0 %v106, 112
  %v991 = vpop.permute.xlu0 %990
  %992 = vrot.lane.b32.xlu0 %v106, 80
  %v993 = vpop.permute.xlu0 %992
  %v994 = vsel %vm112, %v991, 0
  %v996 = vsel %vm112, %v993, 0
  %998 = vmatprep.subr.mxu0 0.0
  %999 = vmatpush1.xpose.msra.mxu0 %v996
  %1000 = vmatprep.subr.mxu0 0.0
  %1001 = vmatpush1.xpose.msra.mxu0 0.0
  %1002 = vmatprep.subr.mxu0 0.0
  %1003 = vmatpush1.xpose.msra.mxu0 0.0
  %1004 = vmatprep.subr.mxu0 0.0
  %1005 = vmatpush1.xpose.msra.mxu0 0.0
  %1006 = vmatprep.subr.mxu0 0.0
  %1007 = vmatpush1.xpose.msra.mxu0 0.0
  %1008 = vmatprep.subr.mxu0 0.0
  %1009 = vmatpush1.xpose.msra.mxu0 0.0
  %1010 = vmatprep.subr.mxu0 0.0
  %1011 = vmatpush1.xpose.msra.mxu0 0.0
  %1012 = vmatprep.subr.mxu0 0.0
  %1013 = vmatpush1.xpose.msra.mxu0 0.0
  %1014 = vmatprep.subr.mxu0 0.0
  %1015 = vmatpush1.xpose.msra.mxu0 0.0
  %1016 = vmatprep.subr.mxu0 0.0
  %1017 = vmatpush1.xpose.msra.mxu0 0.0
  %1018 = vmatprep.subr.mxu0 0.0
  %1019 = vmatpush1.xpose.msra.mxu0 0.0
  %1020 = vmatprep.subr.mxu0 0.0
  %1021 = vmatpush1.xpose.msra.mxu0 0.0
  %1022 = vmatprep.subr.mxu0 0.0
  %1023 = vmatpush1.xpose.msra.mxu0 0.0
  %1024 = vmatprep.subr.mxu0 0.0
  %1025 = vmatpush1.xpose.msra.mxu0 0.0
  %1026 = vmatprep.subr.mxu0 0.0
  %1027 = vmatpush1.xpose.msra.mxu0 0.0
  %1028 = vmatprep.subr.mxu0 0.0
  %1029 = vmatpush1.xpose.msra.mxu0 0.0
  %1030 = vmatprep.subr.mxu0 0.0
  %1031 = vmatpush1.xpose.msra.mxu0 0.0
  %1032 = vmatprep.subr.mxu0 0.0
  %1033 = vmatpush1.xpose.msra.mxu0 0.0
  %1034 = vmatprep.subr.mxu0 0.0
  %1035 = vmatpush1.xpose.msra.mxu0 0.0
  %1036 = vmatprep.subr.mxu0 0.0
  %1037 = vmatpush1.xpose.msra.mxu0 0.0
  %1038 = vmatprep.subr.mxu0 0.0
  %1039 = vmatpush1.xpose.msra.mxu0 0.0
  %1040 = vmatprep.subr.mxu0 0.0
  %1041 = vmatpush1.xpose.msra.mxu0 0.0
  %1042 = vmatprep.subr.mxu0 0.0
  %1043 = vmatpush1.xpose.msra.mxu0 0.0
  %1044 = vmatprep.subr.mxu0 0.0
  %1045 = vmatpush1.xpose.msra.mxu0 0.0
  %1046 = vmatprep.subr.mxu0 0.0
  %1047 = vmatpush1.xpose.msra.mxu0 0.0
  %1048 = vmatprep.subr.mxu0 0.0
  %1049 = vmatpush1.xpose.msra.mxu0 0.0
  %1050 = vmatprep.subr.mxu0 0.0
  %1051 = vmatpush1.xpose.msra.mxu0 0.0
  %1052 = vmatprep.subr.mxu0 0.0
  %1053 = vmatpush1.xpose.msra.mxu0 0.0
  %1054 = vmatprep.subr.mxu0 0.0
  %1055 = vmatpush1.xpose.msra.mxu0 0.0
  %1056 = vmatprep.subr.mxu0 0.0
  %1057 = vmatpush1.xpose.msra.mxu0 0.0
  %1058 = vmatprep.subr.mxu0 0.0
  %1059 = vmatpush1.xpose.msra.mxu0 0.0
  %1060 = vmatprep.subr.mxu0 0.0
  %1061 = vmatpush1.xpose.msra.mxu0 0.0
  %1062 = vmatprep.mubr.f32.mxu0 0.0
  %1063 = vmatmul.mubr.f32.gmra.mrb[0].mxu0 %v994
  %v1064 = vpop.f32.mrb[0].mxu0
  %v1065 = vadd.f32 0.0, %v1064
  %v1066 = vpop.f32.mrb[0].mxu0
  %1067 = vdwg.mxu0
  %v1068 = vmul.f32 %v987, 0.35355338
  %v1069 = vmul.f32 %v1065, 0.35355338
  %v1070 = vsel %vm112, %v1068, -inf
  %1071 = vmax.xlane.f32.xlu0 %v1070
  %v1072 = vpop.xlane.xlu0 %1071
  %v1073 = vsel %vm112, %v1069, -inf
  %1074 = vmax.xlane.f32.xlu0 %v1073
  %v1075 = vpop.xlane.xlu0 %1074
  %v1076 = vsub.f32 %v1068, %v1072
  %v1077 = vsub.f32 %v1069, %v1075
  %v1078 = vmul.f32 %v1076, 1.442695
  %v1079 = vpow.pop %v1078
  %v1080 = vmul.f32 %v1077, 1.442695
  %v1081 = vpow.pop %v1080
  %v1082 = vsel %vm112, %v1079, 0.0
  %1083 = vadd.xlane.f32.xlu0 %v1082
  %v1084 = vpop.xlane.xlu0 %1083
  %v1085 = vsel %vm112, %v1081, 0.0
  %1086 = vadd.xlane.f32.xlu0 %v1085
  %v1087 = vpop.xlane.xlu0 %1086
  %v1088 = vrcp.pop %v1084
  %v1089 = vrcp.pop %v1087
  %v1090 = vmul.f32 %v1079, %v1088
  %v1091 = vmul.f32 %v1081, %v1089
  %1092 = vrot.lane.b32.xlu0 %v101, 48
  %v1093 = vpop.permute.xlu0 %1092
  %1095 = vxpose.xlu0.b32.start [1/16] %v1093, 128
  %1096 = vxpose.xlu0.b32.cont [2/16] 0.0, 128
  %1097 = vxpose.xlu0.b32.cont [3/16] 0.0, 128
  %1098 = vxpose.xlu0.b32.cont [4/16] 0.0, 128
  %1099 = vxpose.xlu0.b32.cont [5/16] 0.0, 128
  %1100 = vxpose.xlu0.b32.cont [6/16] 0.0, 128
  %1101 = vxpose.xlu0.b32.cont [7/16] 0.0, 128
  %1102 = vxpose.xlu0.b32.cont [8/16] 0.0, 128
  %1103 = vxpose.xlu0.b32.cont [9/16] 0.0, 128
  %1104 = vxpose.xlu0.b32.cont [10/16] 0.0, 128
  %1105 = vxpose.xlu0.b32.cont [11/16] 0.0, 128
  %1106 = vxpose.xlu0.b32.cont [12/16] 0.0, 128
  %1107 = vxpose.xlu0.b32.cont [13/16] 0.0, 128
  %1108 = vxpose.xlu0.b32.cont [14/16] 0.0, 128
  %1109 = vxpose.xlu0.b32.cont [15/16] 0.0, 128
  %1110 = vxpose.xlu0.b32.end [16/16] 0.0, 128
  %v1111 = vpop.trf.xlu0
  %v1112 = vpop.trf.xlu0
  %v1113 = vpop.trf.xlu0
  %v1114 = vpop.trf.xlu0
  %v1115 = vpop.trf.xlu0
  %v1116 = vpop.trf.xlu0
  %v1117 = vpop.trf.xlu0
  %v1118 = vpop.trf.xlu0
  %v1119 = vpop.trf.xlu0
  %v1120 = vpop.trf.xlu0
  %v1121 = vpop.trf.xlu0
  %v1122 = vpop.trf.xlu0
  %v1123 = vpop.trf.xlu0
  %v1124 = vpop.trf.xlu0
  %v1125 = vpop.trf.xlu0
  %v1126 = vpop.trf.xlu0
  %v1128 = vsel %vm112, %v1111, 0
  %v1131 = vsel %vm112, %v1090, 0
  %1133 = vmatprep.subr.mxu0 0.0
  %1134 = vmatpush1.xpose.msra.mxu0 %v1131
  %1135 = vmatprep.subr.mxu0 0.0
  %1136 = vmatpush1.xpose.msra.mxu0 0.0
  %1137 = vmatprep.subr.mxu0 0.0
  %1138 = vmatpush1.xpose.msra.mxu0 0.0
  %1139 = vmatprep.subr.mxu0 0.0
  %1140 = vmatpush1.xpose.msra.mxu0 0.0
  %1141 = vmatprep.subr.mxu0 0.0
  %1142 = vmatpush1.xpose.msra.mxu0 0.0
  %1143 = vmatprep.subr.mxu0 0.0
  %1144 = vmatpush1.xpose.msra.mxu0 0.0
  %1145 = vmatprep.subr.mxu0 0.0
  %1146 = vmatpush1.xpose.msra.mxu0 0.0
  %1147 = vmatprep.subr.mxu0 0.0
  %1148 = vmatpush1.xpose.msra.mxu0 0.0
  %1149 = vmatprep.subr.mxu0 0.0
  %1150 = vmatpush1.xpose.msra.mxu0 0.0
  %1151 = vmatprep.subr.mxu0 0.0
  %1152 = vmatpush1.xpose.msra.mxu0 0.0
  %1153 = vmatprep.subr.mxu0 0.0
  %1154 = vmatpush1.xpose.msra.mxu0 0.0
  %1155 = vmatprep.subr.mxu0 0.0
  %1156 = vmatpush1.xpose.msra.mxu0 0.0
  %1157 = vmatprep.subr.mxu0 0.0
  %1158 = vmatpush1.xpose.msra.mxu0 0.0
  %1159 = vmatprep.subr.mxu0 0.0
  %1160 = vmatpush1.xpose.msra.mxu0 0.0
  %1161 = vmatprep.subr.mxu0 0.0
  %1162 = vmatpush1.xpose.msra.mxu0 0.0
  %1163 = vmatprep.subr.mxu0 0.0
  %1164 = vmatpush1.xpose.msra.mxu0 0.0
  %1165 = vmatprep.subr.mxu0 0.0
  %1166 = vmatpush1.xpose.msra.mxu0 0.0
  %1167 = vmatprep.subr.mxu0 0.0
  %1168 = vmatpush1.xpose.msra.mxu0 0.0
  %1169 = vmatprep.subr.mxu0 0.0
  %1170 = vmatpush1.xpose.msra.mxu0 0.0
  %1171 = vmatprep.subr.mxu0 0.0
  %1172 = vmatpush1.xpose.msra.mxu0 0.0
  %1173 = vmatprep.subr.mxu0 0.0
  %1174 = vmatpush1.xpose.msra.mxu0 0.0
  %1175 = vmatprep.subr.mxu0 0.0
  %1176 = vmatpush1.xpose.msra.mxu0 0.0
  %1177 = vmatprep.subr.mxu0 0.0
  %1178 = vmatpush1.xpose.msra.mxu0 0.0
  %1179 = vmatprep.subr.mxu0 0.0
  %1180 = vmatpush1.xpose.msra.mxu0 0.0
  %1181 = vmatprep.subr.mxu0 0.0
  %1182 = vmatpush1.xpose.msra.mxu0 0.0
  %1183 = vmatprep.subr.mxu0 0.0
  %1184 = vmatpush1.xpose.msra.mxu0 0.0
  %1185 = vmatprep.subr.mxu0 0.0
  %1186 = vmatpush1.xpose.msra.mxu0 0.0
  %1187 = vmatprep.subr.mxu0 0.0
  %1188 = vmatpush1.xpose.msra.mxu0 0.0
  %1189 = vmatprep.subr.mxu0 0.0
  %1190 = vmatpush1.xpose.msra.mxu0 0.0
  %1191 = vmatprep.subr.mxu0 0.0
  %1192 = vmatpush1.xpose.msra.mxu0 0.0
  %1193 = vmatprep.subr.mxu0 0.0
  %1194 = vmatpush1.xpose.msra.mxu0 0.0
  %1195 = vmatprep.subr.mxu0 0.0
  %1196 = vmatpush1.xpose.msra.mxu0 0.0
  %1197 = vmatprep.mubr.f32.mxu0 0.0
  %1198 = vmatmul.mubr.f32.gmra.mrb[0].mxu0 %v1128
  %v1199 = vpop.f32.mrb[0].mxu0
  %v1200 = vadd.f32 0.0, %v1199
  %v1201 = vpop.f32.mrb[0].mxu0
  %1202 = vdwg.mxu0
  %1203 = vrot.lane.b32.xlu0 %v106, 48
  %v1204 = vpop.permute.xlu0 %1203
  %1206 = vxpose.xlu0.b32.start [1/16] %v1204, 128
  %1207 = vxpose.xlu0.b32.cont [2/16] 0.0, 128
  %1208 = vxpose.xlu0.b32.cont [3/16] 0.0, 128
  %1209 = vxpose.xlu0.b32.cont [4/16] 0.0, 128
  %1210 = vxpose.xlu0.b32.cont [5/16] 0.0, 128
  %1211 = vxpose.xlu0.b32.cont [6/16] 0.0, 128
  %1212 = vxpose.xlu0.b32.cont [7/16] 0.0, 128
  %1213 = vxpose.xlu0.b32.cont [8/16] 0.0, 128
  %1214 = vxpose.xlu0.b32.cont [9/16] 0.0, 128
  %1215 = vxpose.xlu0.b32.cont [10/16] 0.0, 128
  %1216 = vxpose.xlu0.b32.cont [11/16] 0.0, 128
  %1217 = vxpose.xlu0.b32.cont [12/16] 0.0, 128
  %1218 = vxpose.xlu0.b32.cont [13/16] 0.0, 128
  %1219 = vxpose.xlu0.b32.cont [14/16] 0.0, 128
  %1220 = vxpose.xlu0.b32.cont [15/16] 0.0, 128
  %1221 = vxpose.xlu0.b32.end [16/16] 0.0, 128
  %v1222 = vpop.trf.xlu0
  %v1223 = vpop.trf.xlu0
  %v1224 = vpop.trf.xlu0
  %v1225 = vpop.trf.xlu0
  %v1226 = vpop.trf.xlu0
  %v1227 = vpop.trf.xlu0
  %v1228 = vpop.trf.xlu0
  %v1229 = vpop.trf.xlu0
  %v1230 = vpop.trf.xlu0
  %v1231 = vpop.trf.xlu0
  %v1232 = vpop.trf.xlu0
  %v1233 = vpop.trf.xlu0
  %v1234 = vpop.trf.xlu0
  %v1235 = vpop.trf.xlu0
  %v1236 = vpop.trf.xlu0
  %v1237 = vpop.trf.xlu0
  %v1239 = vsel %vm112, %v1222, 0
  %v1242 = vsel %vm112, %v1091, 0
  %1244 = vmatprep.subr.mxu0 0.0
  %1245 = vmatpush1.xpose.msra.mxu0 %v1242
  %1246 = vmatprep.subr.mxu0 0.0
  %1247 = vmatpush1.xpose.msra.mxu0 0.0
  %1248 = vmatprep.subr.mxu0 0.0
  %1249 = vmatpush1.xpose.msra.mxu0 0.0
  %1250 = vmatprep.subr.mxu0 0.0
  %1251 = vmatpush1.xpose.msra.mxu0 0.0
  %1252 = vmatprep.subr.mxu0 0.0
  %1253 = vmatpush1.xpose.msra.mxu0 0.0
  %1254 = vmatprep.subr.mxu0 0.0
  %1255 = vmatpush1.xpose.msra.mxu0 0.0
  %1256 = vmatprep.subr.mxu0 0.0
  %1257 = vmatpush1.xpose.msra.mxu0 0.0
  %1258 = vmatprep.subr.mxu0 0.0
  %1259 = vmatpush1.xpose.msra.mxu0 0.0
  %1260 = vmatprep.subr.mxu0 0.0
  %1261 = vmatpush1.xpose.msra.mxu0 0.0
  %1262 = vmatprep.subr.mxu0 0.0
  %1263 = vmatpush1.xpose.msra.mxu0 0.0
  %1264 = vmatprep.subr.mxu0 0.0
  %1265 = vmatpush1.xpose.msra.mxu0 0.0
  %1266 = vmatprep.subr.mxu0 0.0
  %1267 = vmatpush1.xpose.msra.mxu0 0.0
  %1268 = vmatprep.subr.mxu0 0.0
  %1269 = vmatpush1.xpose.msra.mxu0 0.0
  %1270 = vmatprep.subr.mxu0 0.0
  %1271 = vmatpush1.xpose.msra.mxu0 0.0
  %1272 = vmatprep.subr.mxu0 0.0
  %1273 = vmatpush1.xpose.msra.mxu0 0.0
  %1274 = vmatprep.subr.mxu0 0.0
  %1275 = vmatpush1.xpose.msra.mxu0 0.0
  %1276 = vmatprep.subr.mxu0 0.0
  %1277 = vmatpush1.xpose.msra.mxu0 0.0
  %1278 = vmatprep.subr.mxu0 0.0
  %1279 = vmatpush1.xpose.msra.mxu0 0.0
  %1280 = vmatprep.subr.mxu0 0.0
  %1281 = vmatpush1.xpose.msra.mxu0 0.0
  %1282 = vmatprep.subr.mxu0 0.0
  %1283 = vmatpush1.xpose.msra.mxu0 0.0
  %1284 = vmatprep.subr.mxu0 0.0
  %1285 = vmatpush1.xpose.msra.mxu0 0.0
  %1286 = vmatprep.subr.mxu0 0.0
  %1287 = vmatpush1.xpose.msra.mxu0 0.0
  %1288 = vmatprep.subr.mxu0 0.0
  %1289 = vmatpush1.xpose.msra.mxu0 0.0
  %1290 = vmatprep.subr.mxu0 0.0
  %1291 = vmatpush1.xpose.msra.mxu0 0.0
  %1292 = vmatprep.subr.mxu0 0.0
  %1293 = vmatpush1.xpose.msra.mxu0 0.0
  %1294 = vmatprep.subr.mxu0 0.0
  %1295 = vmatpush1.xpose.msra.mxu0 0.0
  %1296 = vmatprep.subr.mxu0 0.0
  %1297 = vmatpush1.xpose.msra.mxu0 0.0
  %1298 = vmatprep.subr.mxu0 0.0
  %1299 = vmatpush1.xpose.msra.mxu0 0.0
  %1300 = vmatprep.subr.mxu0 0.0
  %1301 = vmatpush1.xpose.msra.mxu0 0.0
  %1302 = vmatprep.subr.mxu0 0.0
  %1303 = vmatpush1.xpose.msra.mxu0 0.0
  %1304 = vmatprep.subr.mxu0 0.0
  %1305 = vmatpush1.xpose.msra.mxu0 0.0
  %1306 = vmatprep.subr.mxu0 0.0
  %1307 = vmatpush1.xpose.msra.mxu0 0.0
  %1308 = vmatprep.mubr.f32.mxu0 0.0
  %1309 = vmatmul.mubr.f32.gmra.mrb[0].mxu0 %v1239
  %v1310 = vpop.f32.mrb[0].mxu0
  %v1311 = vadd.f32 0.0, %v1310
  %v1312 = vpop.f32.mrb[0].mxu0
  %1313 = vdwg.mxu0
  %1314 = vrot.lane.b32.xlu0 %v101, 104
  %v1315 = vpop.permute.xlu0 %1314
  %1316 = vrot.lane.b32.xlu0 %v101, 72
  %v1317 = vpop.permute.xlu0 %1316
  %v1318 = vsel %vm112, %v1315, 0
  %v1320 = vsel %vm112, %v1317, 0
  %1322 = vmatprep.subr.mxu0 0.0
  %1323 = vmatpush1.xpose.msra.mxu0 %v1320
  %1324 = vmatprep.subr.mxu0 0.0
  %1325 = vmatpush1.xpose.msra.mxu0 0.0
  %1326 = vmatprep.subr.mxu0 0.0
  %1327 = vmatpush1.xpose.msra.mxu0 0.0
  %1328 = vmatprep.subr.mxu0 0.0
  %1329 = vmatpush1.xpose.msra.mxu0 0.0
  %1330 = vmatprep.subr.mxu0 0.0
  %1331 = vmatpush1.xpose.msra.mxu0 0.0
  %1332 = vmatprep.subr.mxu0 0.0
  %1333 = vmatpush1.xpose.msra.mxu0 0.0
  %1334 = vmatprep.subr.mxu0 0.0
  %1335 = vmatpush1.xpose.msra.mxu0 0.0
  %1336 = vmatprep.subr.mxu0 0.0
  %1337 = vmatpush1.xpose.msra.mxu0 0.0
  %1338 = vmatprep.subr.mxu0 0.0
  %1339 = vmatpush1.xpose.msra.mxu0 0.0
  %1340 = vmatprep.subr.mxu0 0.0
  %1341 = vmatpush1.xpose.msra.mxu0 0.0
  %1342 = vmatprep.subr.mxu0 0.0
  %1343 = vmatpush1.xpose.msra.mxu0 0.0
  %1344 = vmatprep.subr.mxu0 0.0
  %1345 = vmatpush1.xpose.msra.mxu0 0.0
  %1346 = vmatprep.subr.mxu0 0.0
  %1347 = vmatpush1.xpose.msra.mxu0 0.0
  %1348 = vmatprep.subr.mxu0 0.0
  %1349 = vmatpush1.xpose.msra.mxu0 0.0
  %1350 = vmatprep.subr.mxu0 0.0
  %1351 = vmatpush1.xpose.msra.mxu0 0.0
  %1352 = vmatprep.subr.mxu0 0.0
  %1353 = vmatpush1.xpose.msra.mxu0 0.0
  %1354 = vmatprep.subr.mxu0 0.0
  %1355 = vmatpush1.xpose.msra.mxu0 0.0
  %1356 = vmatprep.subr.mxu0 0.0
  %1357 = vmatpush1.xpose.msra.mxu0 0.0
  %1358 = vmatprep.subr.mxu0 0.0
  %1359 = vmatpush1.xpose.msra.mxu0 0.0
  %1360 = vmatprep.subr.mxu0 0.0
  %1361 = vmatpush1.xpose.msra.mxu0 0.0
  %1362 = vmatprep.subr.mxu0 0.0
  %1363 = vmatpush1.xpose.msra.mxu0 0.0
  %1364 = vmatprep.subr.mxu0 0.0
  %1365 = vmatpush1.xpose.msra.mxu0 0.0
  %1366 = vmatprep.subr.mxu0 0.0
  %1367 = vmatpush1.xpose.msra.mxu0 0.0
  %1368 = vmatprep.subr.mxu0 0.0
  %1369 = vmatpush1.xpose.msra.mxu0 0.0
  %1370 = vmatprep.subr.mxu0 0.0
  %1371 = vmatpush1.xpose.msra.mxu0 0.0
  %1372 = vmatprep.subr.mxu0 0.0
  %1373 = vmatpush1.xpose.msra.mxu0 0.0
  %1374 = vmatprep.subr.mxu0 0.0
  %1375 = vmatpush1.xpose.msra.mxu0 0.0
  %1376 = vmatprep.subr.mxu0 0.0
  %1377 = vmatpush1.xpose.msra.mxu0 0.0
  %1378 = vmatprep.subr.mxu0 0.0
  %1379 = vmatpush1.xpose.msra.mxu0 0.0
  %1380 = vmatprep.subr.mxu0 0.0
  %1381 = vmatpush1.xpose.msra.mxu0 0.0
  %1382 = vmatprep.subr.mxu0 0.0
  %1383 = vmatpush1.xpose.msra.mxu0 0.0
  %1384 = vmatprep.subr.mxu0 0.0
  %1385 = vmatpush1.xpose.msra.mxu0 0.0
  %1386 = vmatprep.mubr.f32.mxu0 0.0
  %1387 = vmatmul.mubr.f32.gmra.mrb[0].mxu0 %v1318
  %v1388 = vpop.f32.mrb[0].mxu0
  %v1389 = vadd.f32 0.0, %v1388
  %v1390 = vpop.f32.mrb[0].mxu0
  %1391 = vdwg.mxu0
  %1392 = vrot.lane.b32.xlu0 %v106, 104
  %v1393 = vpop.permute.xlu0 %1392
  %1394 = vrot.lane.b32.xlu0 %v106, 72
  %v1395 = vpop.permute.xlu0 %1394
  %v1396 = vsel %vm112, %v1393, 0
  %v1398 = vsel %vm112, %v1395, 0
  %1400 = vmatprep.subr.mxu0 0.0
  %1401 = vmatpush1.xpose.msra.mxu0 %v1398
  %1402 = vmatprep.subr.mxu0 0.0
  %1403 = vmatpush1.xpose.msra.mxu0 0.0
  %1404 = vmatprep.subr.mxu0 0.0
  %1405 = vmatpush1.xpose.msra.mxu0 0.0
  %1406 = vmatprep.subr.mxu0 0.0
  %1407 = vmatpush1.xpose.msra.mxu0 0.0
  %1408 = vmatprep.subr.mxu0 0.0
  %1409 = vmatpush1.xpose.msra.mxu0 0.0
  %1410 = vmatprep.subr.mxu0 0.0
  %1411 = vmatpush1.xpose.msra.mxu0 0.0
  %1412 = vmatprep.subr.mxu0 0.0
  %1413 = vmatpush1.xpose.msra.mxu0 0.0
  %1414 = vmatprep.subr.mxu0 0.0
  %1415 = vmatpush1.xpose.msra.mxu0 0.0
  %1416 = vmatprep.subr.mxu0 0.0
  %1417 = vmatpush1.xpose.msra.mxu0 0.0
  %1418 = vmatprep.subr.mxu0 0.0
  %1419 = vmatpush1.xpose.msra.mxu0 0.0
  %1420 = vmatprep.subr.mxu0 0.0
  %1421 = vmatpush1.xpose.msra.mxu0 0.0
  %1422 = vmatprep.subr.mxu0 0.0
  %1423 = vmatpush1.xpose.msra.mxu0 0.0
  %1424 = vmatprep.subr.mxu0 0.0
  %1425 = vmatpush1.xpose.msra.mxu0 0.0
  %1426 = vmatprep.subr.mxu0 0.0
  %1427 = vmatpush1.xpose.msra.mxu0 0.0
  %1428 = vmatprep.subr.mxu0 0.0
  %1429 = vmatpush1.xpose.msra.mxu0 0.0
  %1430 = vmatprep.subr.mxu0 0.0
  %1431 = vmatpush1.xpose.msra.mxu0 0.0
  %1432 = vmatprep.subr.mxu0 0.0
  %1433 = vmatpush1.xpose.msra.mxu0 0.0
  %1434 = vmatprep.subr.mxu0 0.0
  %1435 = vmatpush1.xpose.msra.mxu0 0.0
  %1436 = vmatprep.subr.mxu0 0.0
  %1437 = vmatpush1.xpose.msra.mxu0 0.0
  %1438 = vmatprep.subr.mxu0 0.0
  %1439 = vmatpush1.xpose.msra.mxu0 0.0
  %1440 = vmatprep.subr.mxu0 0.0
  %1441 = vmatpush1.xpose.msra.mxu0 0.0
  %1442 = vmatprep.subr.mxu0 0.0
  %1443 = vmatpush1.xpose.msra.mxu0 0.0
  %1444 = vmatprep.subr.mxu0 0.0
  %1445 = vmatpush1.xpose.msra.mxu0 0.0
  %1446 = vmatprep.subr.mxu0 0.0
  %1447 = vmatpush1.xpose.msra.mxu0 0.0
  %1448 = vmatprep.subr.mxu0 0.0
  %1449 = vmatpush1.xpose.msra.mxu0 0.0
  %1450 = vmatprep.subr.mxu0 0.0
  %1451 = vmatpush1.xpose.msra.mxu0 0.0
  %1452 = vmatprep.subr.mxu0 0.0
  %1453 = vmatpush1.xpose.msra.mxu0 0.0
  %1454 = vmatprep.subr.mxu0 0.0
  %1455 = vmatpush1.xpose.msra.mxu0 0.0
  %1456 = vmatprep.subr.mxu0 0.0
  %1457 = vmatpush1.xpose.msra.mxu0 0.0
  %1458 = vmatprep.subr.mxu0 0.0
  %1459 = vmatpush1.xpose.msra.mxu0 0.0
  %1460 = vmatprep.subr.mxu0 0.0
  %1461 = vmatpush1.xpose.msra.mxu0 0.0
  %1462 = vmatprep.subr.mxu0 0.0
  %1463 = vmatpush1.xpose.msra.mxu0 0.0
  %1464 = vmatprep.mubr.f32.mxu0 0.0
  %1465 = vmatmul.mubr.f32.gmra.mrb[0].mxu0 %v1396
  %v1466 = vpop.f32.mrb[0].mxu0
  %v1467 = vadd.f32 0.0, %v1466
  %v1468 = vpop.f32.mrb[0].mxu0
  %1469 = vdwg.mxu0
  %v1470 = vmul.f32 %v1389, 0.35355338
  %v1471 = vmul.f32 %v1467, 0.35355338
  %v1472 = vsel %vm112, %v1470, -inf
  %1473 = vmax.xlane.f32.xlu0 %v1472
  %v1474 = vpop.xlane.xlu0 %1473
  %v1475 = vsel %vm112, %v1471, -inf
  %1476 = vmax.xlane.f32.xlu0 %v1475
  %v1477 = vpop.xlane.xlu0 %1476
  %v1478 = vsub.f32 %v1470, %v1474
  %v1479 = vsub.f32 %v1471, %v1477
  %v1480 = vmul.f32 %v1478, 1.442695
  %v1481 = vpow.pop %v1480
  %v1482 = vmul.f32 %v1479, 1.442695
  %v1483 = vpow.pop %v1482
  %v1484 = vsel %vm112, %v1481, 0.0
  %1485 = vadd.xlane.f32.xlu0 %v1484
  %v1486 = vpop.xlane.xlu0 %1485
  %v1487 = vsel %vm112, %v1483, 0.0
  %1488 = vadd.xlane.f32.xlu0 %v1487
  %v1489 = vpop.xlane.xlu0 %1488
  %v1490 = vrcp.pop %v1486
  %v1491 = vrcp.pop %v1489
  %v1492 = vmul.f32 %v1481, %v1490
  %v1493 = vmul.f32 %v1483, %v1491
  %1494 = vrot.lane.b32.xlu0 %v101, 40
  %v1495 = vpop.permute.xlu0 %1494
  %1497 = vxpose.xlu0.b32.start [1/16] %v1495, 128
  %1498 = vxpose.xlu0.b32.cont [2/16] 0.0, 128
  %1499 = vxpose.xlu0.b32.cont [3/16] 0.0, 128
  %1500 = vxpose.xlu0.b32.cont [4/16] 0.0, 128
  %1501 = vxpose.xlu0.b32.cont [5/16] 0.0, 128
  %1502 = vxpose.xlu0.b32.cont [6/16] 0.0, 128
  %1503 = vxpose.xlu0.b32.cont [7/16] 0.0, 128
  %1504 = vxpose.xlu0.b32.cont [8/16] 0.0, 128
  %1505 = vxpose.xlu0.b32.cont [9/16] 0.0, 128
  %1506 = vxpose.xlu0.b32.cont [10/16] 0.0, 128
  %1507 = vxpose.xlu0.b32.cont [11/16] 0.0, 128
  %1508 = vxpose.xlu0.b32.cont [12/16] 0.0, 128
  %1509 = vxpose.xlu0.b32.cont [13/16] 0.0, 128
  %1510 = vxpose.xlu0.b32.cont [14/16] 0.0, 128
  %1511 = vxpose.xlu0.b32.cont [15/16] 0.0, 128
  %1512 = vxpose.xlu0.b32.end [16/16] 0.0, 128
  %v1513 = vpop.trf.xlu0
  %v1514 = vpop.trf.xlu0
  %v1515 = vpop.trf.xlu0
  %v1516 = vpop.trf.xlu0
  %v1517 = vpop.trf.xlu0
  %v1518 = vpop.trf.xlu0
  %v1519 = vpop.trf.xlu0
  %v1520 = vpop.trf.xlu0
  %v1521 = vpop.trf.xlu0
  %v1522 = vpop.trf.xlu0
  %v1523 = vpop.trf.xlu0
  %v1524 = vpop.trf.xlu0
  %v1525 = vpop.trf.xlu0
  %v1526 = vpop.trf.xlu0
  %v1527 = vpop.trf.xlu0
  %v1528 = vpop.trf.xlu0
  %v1530 = vsel %vm112, %v1513, 0
  %v1533 = vsel %vm112, %v1492, 0
  %1535 = vmatprep.subr.mxu0 0.0
  %1536 = vmatpush1.xpose.msra.mxu0 %v1533
  %1537 = vmatprep.subr.mxu0 0.0
  %1538 = vmatpush1.xpose.msra.mxu0 0.0
  %1539 = vmatprep.subr.mxu0 0.0
  %1540 = vmatpush1.xpose.msra.mxu0 0.0
  %1541 = vmatprep.subr.mxu0 0.0
  %1542 = vmatpush1.xpose.msra.mxu0 0.0
  %1543 = vmatprep.subr.mxu0 0.0
  %1544 = vmatpush1.xpose.msra.mxu0 0.0
  %1545 = vmatprep.subr.mxu0 0.0
  %1546 = vmatpush1.xpose.msra.mxu0 0.0
  %1547 = vmatprep.subr.mxu0 0.0
  %1548 = vmatpush1.xpose.msra.mxu0 0.0
  %1549 = vmatprep.subr.mxu0 0.0
  %1550 = vmatpush1.xpose.msra.mxu0 0.0
  %1551 = vmatprep.subr.mxu0 0.0
  %1552 = vmatpush1.xpose.msra.mxu0 0.0
  %1553 = vmatprep.subr.mxu0 0.0
  %1554 = vmatpush1.xpose.msra.mxu0 0.0
  %1555 = vmatprep.subr.mxu0 0.0
  %1556 = vmatpush1.xpose.msra.mxu0 0.0
  %1557 = vmatprep.subr.mxu0 0.0
  %1558 = vmatpush1.xpose.msra.mxu0 0.0
  %1559 = vmatprep.subr.mxu0 0.0
  %1560 = vmatpush1.xpose.msra.mxu0 0.0
  %1561 = vmatprep.subr.mxu0 0.0
  %1562 = vmatpush1.xpose.msra.mxu0 0.0
  %1563 = vmatprep.subr.mxu0 0.0
  %1564 = vmatpush1.xpose.msra.mxu0 0.0
  %1565 = vmatprep.subr.mxu0 0.0
  %1566 = vmatpush1.xpose.msra.mxu0 0.0
  %1567 = vmatprep.subr.mxu0 0.0
  %1568 = vmatpush1.xpose.msra.mxu0 0.0
  %1569 = vmatprep.subr.mxu0 0.0
  %1570 = vmatpush1.xpose.msra.mxu0 0.0
  %1571 = vmatprep.subr.mxu0 0.0
  %1572 = vmatpush1.xpose.msra.mxu0 0.0
  %1573 = vmatprep.subr.mxu0 0.0
  %1574 = vmatpush1.xpose.msra.mxu0 0.0
  %1575 = vmatprep.subr.mxu0 0.0
  %1576 = vmatpush1.xpose.msra.mxu0 0.0
  %1577 = vmatprep.subr.mxu0 0.0
  %1578 = vmatpush1.xpose.msra.mxu0 0.0
  %1579 = vmatprep.subr.mxu0 0.0
  %1580 = vmatpush1.xpose.msra.mxu0 0.0
  %1581 = vmatprep.subr.mxu0 0.0
  %1582 = vmatpush1.xpose.msra.mxu0 0.0
  %1583 = vmatprep.subr.mxu0 0.0
  %1584 = vmatpush1.xpose.msra.mxu0 0.0
  %1585 = vmatprep.subr.mxu0 0.0
  %1586 = vmatpush1.xpose.msra.mxu0 0.0
  %1587 = vmatprep.subr.mxu0 0.0
  %1588 = vmatpush1.xpose.msra.mxu0 0.0
  %1589 = vmatprep.subr.mxu0 0.0
  %1590 = vmatpush1.xpose.msra.mxu0 0.0
  %1591 = vmatprep.subr.mxu0 0.0
  %1592 = vmatpush1.xpose.msra.mxu0 0.0
  %1593 = vmatprep.subr.mxu0 0.0
  %1594 = vmatpush1.xpose.msra.mxu0 0.0
  %1595 = vmatprep.subr.mxu0 0.0
  %1596 = vmatpush1.xpose.msra.mxu0 0.0
  %1597 = vmatprep.subr.mxu0 0.0
  %1598 = vmatpush1.xpose.msra.mxu0 0.0
  %1599 = vmatprep.mubr.f32.mxu0 0.0
  %1600 = vmatmul.mubr.f32.gmra.mrb[0].mxu0 %v1530
  %v1601 = vpop.f32.mrb[0].mxu0
  %v1602 = vadd.f32 0.0, %v1601
  %v1603 = vpop.f32.mrb[0].mxu0
  %1604 = vdwg.mxu0
  %1605 = vrot.lane.b32.xlu0 %v106, 40
  %v1606 = vpop.permute.xlu0 %1605
  %1608 = vxpose.xlu0.b32.start [1/16] %v1606, 128
  %1609 = vxpose.xlu0.b32.cont [2/16] 0.0, 128
  %1610 = vxpose.xlu0.b32.cont [3/16] 0.0, 128
  %1611 = vxpose.xlu0.b32.cont [4/16] 0.0, 128
  %1612 = vxpose.xlu0.b32.cont [5/16] 0.0, 128
  %1613 = vxpose.xlu0.b32.cont [6/16] 0.0, 128
  %1614 = vxpose.xlu0.b32.cont [7/16] 0.0, 128
  %1615 = vxpose.xlu0.b32.cont [8/16] 0.0, 128
  %1616 = vxpose.xlu0.b32.cont [9/16] 0.0, 128
  %1617 = vxpose.xlu0.b32.cont [10/16] 0.0, 128
  %1618 = vxpose.xlu0.b32.cont [11/16] 0.0, 128
  %1619 = vxpose.xlu0.b32.cont [12/16] 0.0, 128
  %1620 = vxpose.xlu0.b32.cont [13/16] 0.0, 128
  %1621 = vxpose.xlu0.b32.cont [14/16] 0.0, 128
  %1622 = vxpose.xlu0.b32.cont [15/16] 0.0, 128
  %1623 = vxpose.xlu0.b32.end [16/16] 0.0, 128
  %v1624 = vpop.trf.xlu0
  %v1625 = vpop.trf.xlu0
  %v1626 = vpop.trf.xlu0
  %v1627 = vpop.trf.xlu0
  %v1628 = vpop.trf.xlu0
  %v1629 = vpop.trf.xlu0
  %v1630 = vpop.trf.xlu0
  %v1631 = vpop.trf.xlu0
  %v1632 = vpop.trf.xlu0
  %v1633 = vpop.trf.xlu0
  %v1634 = vpop.trf.xlu0
  %v1635 = vpop.trf.xlu0
  %v1636 = vpop.trf.xlu0
  %v1637 = vpop.trf.xlu0
  %v1638 = vpop.trf.xlu0
  %v1639 = vpop.trf.xlu0
  %v1641 = vsel %vm112, %v1624, 0
  %v1644 = vsel %vm112, %v1493, 0
  %1646 = vmatprep.subr.mxu0 0.0
  %1647 = vmatpush1.xpose.msra.mxu0 %v1644
  %1648 = vmatprep.subr.mxu0 0.0
  %1649 = vmatpush1.xpose.msra.mxu0 0.0
  %1650 = vmatprep.subr.mxu0 0.0
  %1651 = vmatpush1.xpose.msra.mxu0 0.0
  %1652 = vmatprep.subr.mxu0 0.0
  %1653 = vmatpush1.xpose.msra.mxu0 0.0
  %1654 = vmatprep.subr.mxu0 0.0
  %1655 = vmatpush1.xpose.msra.mxu0 0.0
  %1656 = vmatprep.subr.mxu0 0.0
  %1657 = vmatpush1.xpose.msra.mxu0 0.0
  %1658 = vmatprep.subr.mxu0 0.0
  %1659 = vmatpush1.xpose.msra.mxu0 0.0
  %1660 = vmatprep.subr.mxu0 0.0
  %1661 = vmatpush1.xpose.msra.mxu0 0.0
  %1662 = vmatprep.subr.mxu0 0.0
  %1663 = vmatpush1.xpose.msra.mxu0 0.0
  %1664 = vmatprep.subr.mxu0 0.0
  %1665 = vmatpush1.xpose.msra.mxu0 0.0
  %1666 = vmatprep.subr.mxu0 0.0
  %1667 = vmatpush1.xpose.msra.mxu0 0.0
  %1668 = vmatprep.subr.mxu0 0.0
  %1669 = vmatpush1.xpose.msra.mxu0 0.0
  %1670 = vmatprep.subr.mxu0 0.0
  %1671 = vmatpush1.xpose.msra.mxu0 0.0
  %1672 = vmatprep.subr.mxu0 0.0
  %1673 = vmatpush1.xpose.msra.mxu0 0.0
  %1674 = vmatprep.subr.mxu0 0.0
  %1675 = vmatpush1.xpose.msra.mxu0 0.0
  %1676 = vmatprep.subr.mxu0 0.0
  %1677 = vmatpush1.xpose.msra.mxu0 0.0
  %1678 = vmatprep.subr.mxu0 0.0
  %1679 = vmatpush1.xpose.msra.mxu0 0.0
  %1680 = vmatprep.subr.mxu0 0.0
  %1681 = vmatpush1.xpose.msra.mxu0 0.0
  %1682 = vmatprep.subr.mxu0 0.0
  %1683 = vmatpush1.xpose.msra.mxu0 0.0
  %1684 = vmatprep.subr.mxu0 0.0
  %1685 = vmatpush1.xpose.msra.mxu0 0.0
  %1686 = vmatprep.subr.mxu0 0.0
  %1687 = vmatpush1.xpose.msra.mxu0 0.0
  %1688 = vmatprep.subr.mxu0 0.0
  %1689 = vmatpush1.xpose.msra.mxu0 0.0
  %1690 = vmatprep.subr.mxu0 0.0
  %1691 = vmatpush1.xpose.msra.mxu0 0.0
  %1692 = vmatprep.subr.mxu0 0.0
  %1693 = vmatpush1.xpose.msra.mxu0 0.0
  %1694 = vmatprep.subr.mxu0 0.0
  %1695 = vmatpush1.xpose.msra.mxu0 0.0
  %1696 = vmatprep.subr.mxu0 0.0
  %1697 = vmatpush1.xpose.msra.mxu0 0.0
  %1698 = vmatprep.subr.mxu0 0.0
  %1699 = vmatpush1.xpose.msra.mxu0 0.0
  %1700 = vmatprep.subr.mxu0 0.0
  %1701 = vmatpush1.xpose.msra.mxu0 0.0
  %1702 = vmatprep.subr.mxu0 0.0
  %1703 = vmatpush1.xpose.msra.mxu0 0.0
  %1704 = vmatprep.subr.mxu0 0.0
  %1705 = vmatpush1.xpose.msra.mxu0 0.0
  %1706 = vmatprep.subr.mxu0 0.0
  %1707 = vmatpush1.xpose.msra.mxu0 0.0
  %1708 = vmatprep.subr.mxu0 0.0
  %1709 = vmatpush1.xpose.msra.mxu0 0.0
  %1710 = vmatprep.mubr.f32.mxu0 0.0
  %1711 = vmatmul.mubr.f32.gmra.mrb[0].mxu0 %v1641
  %v1712 = vpop.f32.mrb[0].mxu0
  %v1713 = vadd.f32 0.0, %v1712
  %v1714 = vpop.f32.mrb[0].mxu0
  %1715 = vdwg.mxu0
  %1716 = vst.msk [vmem:[%s3] sm:$0xff] %vm112, %v396
  %1717 = vst.msk [vmem:[%s3 + $0x8] sm:$0xff] %vm112, %v798
  %1718 = vst.msk [vmem:[%s3 + $0x10] sm:$0xff] %vm112, %v1200
  %1719 = vst.msk [vmem:[%s3 + $0x18] sm:$0xff] %vm112, %v1602
  %1720 = vst.msk [vmem:[%s3 + $0x20] sm:$0xff] %vm112, %v507
  %1721 = vst.msk [vmem:[%s3 + $0x28] sm:$0xff] %vm112, %v909
  %1722 = vst.msk [vmem:[%s3 + $0x30] sm:$0xff] %vm112, %v1311
  %1723 = vst.msk [vmem:[%s3 + $0x38] sm:$0xff] %vm112, %v1713
  // Predicated region
  $region14: #{transformer_forward.11} parent=0 // pred_check
    _
  $region15: #{transformer_forward.11} parent=0 // pred_check_branch
    %1725 = sbr.rel (0) target = $region17
  $region16: #{transformer_forward.11} parent=0 // pred_region
    _
  $region17: #{transformer_forward.11} parent=0 // pred_fallthru
    _
  // Predicated region
  $region18: #{transformer_forward.11} parent=0 // pred_check
    _
  $region19: #{transformer_forward.11} parent=0 // pred_check_branch
    %1727 = sbr.rel (0) target = $region21
  $region20: #{transformer_forward.11} parent=0 // pred_region
    _
  $region21: #{transformer_forward.11} parent=0 // pred_fallthru
    _

// kernel: transformer_forward.16
$region0: #{transformer_forward.16}
  #allocation0 [shape = 'u32[]', space=smem, size = 0x4, offset = 0x4, fixed_abs, tag = 'smem constant byte address 0x4 - core index']
  #allocation1 [shape = 'u32[144,128]{1,0:T(1,128)}', space=vmem, size = 0x12000, scoped, tag = 'internal scratch']
  %s0 = inlined_call_operand.vmem [shape: f32[2,8,32], index: 0, kind: input, shape index: {}]
  %s1 = inlined_call_operand.vmem [shape: f32[2,8,32], index: 1, kind: input, shape index: {}]
  %s2 = inlined_call_operand.vmem [shape: f32[32,32], index: 2, kind: input, shape index: {}]
  %s3 = inlined_call_operand.vmem [shape: f32[1,32], index: 3, kind: input, shape index: {}]
  %s4 = inlined_call_operand.vmem [shape: f32[2,8,32], index: 4, kind: input, shape index: {}]
  %s5 = inlined_call_operand.vmem [shape: f32[32,32], index: 5, kind: input, shape index: {}]
  %s6 = inlined_call_operand.vmem [shape: f32[1,32], index: 6, kind: input, shape index: {}]
  %s7 = inlined_call_operand.vmem [shape: f32[32,64], index: 7, kind: input, shape index: {}]
  %s8 = inlined_call_operand.vmem [shape: f32[1,64], index: 8, kind: input, shape index: {}]
  %s9 = inlined_call_operand.vmem [shape: f32[2,8,32], index: 9, kind: output, shape index: {0}]
  %s10 = inlined_call_operand.vmem [shape: f32[2,32,8], index: 10, kind: output, shape index: {1}]
  %11 = xla_tuple %s9, %s10
  %s12 = sld [smem:[#allocation0]]
  $region54: #{transformer_forward.16} parent=0
    _
  %s14 = ssub.s32 1, %s12
  %s15 = scalar_select 0, %s14, %s12
  // Predicated region
  $region2: #{transformer_forward.16} parent=0 // pred_check
    _
  $region3: #{transformer_forward.16} parent=0 // pred_check_branch
    %17 = sbr.rel (0) target = $region5
  $region4: #{transformer_forward.16} parent=0 // pred_region
    _
  $region5: #{transformer_forward.16} parent=0 // pred_fallthru
    _
  // Predicated region
  $region6: #{transformer_forward.16} parent=0 // pred_check
    _
  $region7: #{transformer_forward.16} parent=0 // pred_check_branch
    %19 = sbr.rel (0) target = $region9
  $region8: #{transformer_forward.16} parent=0 // pred_region
    _
  $region9: #{transformer_forward.16} parent=0 // pred_fallthru
    _
  // Predicated region
  $region10: #{transformer_forward.16} parent=0 // pred_check
    _
  $region11: #{transformer_forward.16} parent=0 // pred_check_branch
    %21 = sbr.rel (0) target = $region13
  $region12: #{transformer_forward.16} parent=0 // pred_region
    _
  $region13: #{transformer_forward.16} parent=0 // pred_fallthru
    _
  // Predicated region
  $region14: #{transformer_forward.16} parent=0 // pred_check
    _
  $region15: #{transformer_forward.16} parent=0 // pred_check_branch
    %23 = sbr.rel (0) target = $region17
  $region16: #{transformer_forward.16} parent=0 // pred_region
    _
  $region17: #{transformer_forward.16} parent=0 // pred_fallthru
    _
  // Predicated region
  $region18: #{transformer_forward.16} parent=0 // pred_check
    _
  $region19: #{transformer_forward.16} parent=0 // pred_check_branch
    %25 = sbr.rel (0) target = $region21
  $region20: #{transformer_forward.16} parent=0 // pred_region
    _
  $region21: #{transformer_forward.16} parent=0 // pred_fallthru
    _
  // Predicated region
  $region22: #{transformer_forward.16} parent=0 // pred_check
    _
  $region23: #{transformer_forward.16} parent=0 // pred_check_branch
    %27 = sbr.rel (0) target = $region25
  $region24: #{transformer_forward.16} parent=0 // pred_region
    _
  $region25: #{transformer_forward.16} parent=0 // pred_fallthru
    _
  // Predicated region
  $region26: #{transformer_forward.16} parent=0 // pred_check
    _
  $region27: #{transformer_forward.16} parent=0 // pred_check_branch
    %29 = sbr.rel (0) target = $region29
  $region28: #{transformer_forward.16} parent=0 // pred_region
    _
  $region29: #{transformer_forward.16} parent=0 // pred_fallthru
    _
  // Predicated region
  $region30: #{transformer_forward.16} parent=0 // pred_check
    _
  $region31: #{transformer_forward.16} parent=0 // pred_check_branch
    %31 = sbr.rel (0) target = $region33
  $region32: #{transformer_forward.16} parent=0 // pred_region
    _
  $region33: #{transformer_forward.16} parent=0 // pred_fallthru
    _
  // Predicated region
  $region34: #{transformer_forward.16} parent=0 // pred_check
    _
  $region35: #{transformer_forward.16} parent=0 // pred_check_branch
    %33 = sbr.rel (0) target = $region37
  $region36: #{transformer_forward.16} parent=0 // pred_region
    _
  $region37: #{transformer_forward.16} parent=0 // pred_fallthru
    _
  %v34 = vld [vmem:[%s0] sm:$0xff]
  %v35 = vld [vmem:[%s0 + $0x8] sm:$0xff]
  %v36 = vld [vmem:[%s2] sm:$0xff]
  %v37 = vld [vmem:[%s2 + $0x8] sm:$0xff]
  %v38 = vld [vmem:[%s2 + $0x10] sm:$0xff]
  %v39 = vld [vmem:[%s2 + $0x18] sm:$0xff]
  %v40 = vld [vmem:[%s3] sm:$0x1]
  %v42 = vlaneseq
  %v43 = vshrl.u32 %v42, 7
  %v44 = vsub.s32 0, %v43
  %v45 = vrot.slane %v40, %v44
  %vm47 = vcmask 261120
  %v49 = vsel %vm47, %v34, 0
  %v52 = vsel %vm47, %v35, 0
  %54 = vmatprep.subr.mxu0 0.0
  %55 = vmatpush1.msra.mxu0 %v36
  %56 = vmatprep.subr.mxu0 0.0
  %57 = vmatpush1.msra.mxu0 %v37
  %58 = vmatprep.subr.mxu0 0.0
  %59 = vmatpush1.msra.mxu0 %v38
  %60 = vmatprep.subr.mxu0 0.0
  %61 = vmatpush1.msra.mxu0 %v39
  %62 = vmatprep.subr.mxu0 0.0
  %63 = vmatpush1.msra.mxu0 0.0
  %64 = vmatprep.subr.mxu0 0.0
  %65 = vmatpush1.msra.mxu0 0.0
  %66 = vmatprep.subr.mxu0 0.0
  %67 = vmatpush1.msra.mxu0 0.0
  %68 = vmatprep.subr.mxu0 0.0
  %69 = vmatpush1.msra.mxu0 0.0
  %70 = vmatprep.subr.mxu0 0.0
  %71 = vmatpush1.msra.mxu0 0.0
  %72 = vmatprep.subr.mxu0 0.0
  %73 = vmatpush1.msra.mxu0 0.0
  %74 = vmatprep.subr.mxu0 0.0
  %75 = vmatpush1.msra.mxu0 0.0
  %76 = vmatprep.subr.mxu0 0.0
  %77 = vmatpush1.msra.mxu0 0.0
  %78 = vmatprep.subr.mxu0 0.0
  %79 = vmatpush1.msra.mxu0 0.0
  %80 = vmatprep.subr.mxu0 0.0
  %81 = vmatpush1.msra.mxu0 0.0
  %82 = vmatprep.subr.mxu0 0.0
  %83 = vmatpush1.msra.mxu0 0.0
  %84 = vmatprep.subr.mxu0 0.0
  %85 = vmatpush1.msra.mxu0 0.0
  %86 = vmatprep.subr.mxu0 0.0
  %87 = vmatpush1.msra.mxu0 0.0
  %88 = vmatprep.subr.mxu0 0.0
  %89 = vmatpush1.msra.mxu0 0.0
  %90 = vmatprep.subr.mxu0 0.0
  %91 = vmatpush1.msra.mxu0 0.0
  %92 = vmatprep.subr.mxu0 0.0
  %93 = vmatpush1.msra.mxu0 0.0
  %94 = vmatprep.subr.mxu0 0.0
  %95 = vmatpush1.msra.mxu0 0.0
  %96 = vmatprep.subr.mxu0 0.0
  %97 = vmatpush1.msra.mxu0 0.0
  %98 = vmatprep.subr.mxu0 0.0
  %99 = vmatpush1.msra.mxu0 0.0
  %100 = vmatprep.subr.mxu0 0.0
  %101 = vmatpush1.msra.mxu0 0.0
  %102 = vmatprep.subr.mxu0 0.0
  %103 = vmatpush1.msra.mxu0 0.0
  %104 = vmatprep.subr.mxu0 0.0
  %105 = vmatpush1.msra.mxu0 0.0
  %106 = vmatprep.subr.mxu0 0.0
  %107 = vmatpush1.msra.mxu0 0.0
  %108 = vmatprep.subr.mxu0 0.0
  %109 = vmatpush1.msra.mxu0 0.0
  %110 = vmatprep.subr.mxu0 0.0
  %111 = vmatpush1.msra.mxu0 0.0
  %112 = vmatprep.subr.mxu0 0.0
  %113 = vmatpush1.msra.mxu0 0.0
  %114 = vmatprep.subr.mxu0 0.0
  %115 = vmatpush1.msra.mxu0 0.0
  %116 = vmatprep.subr.mxu0 0.0
  %117 = vmatpush1.msra.mxu0 0.0
  %118 = vmatprep.mubr.f32.mxu0 0.0
  %119 = vmatmul.mubr.f32.gmra.mrb[0].mxu0 %v49
  %v120 = vpop.f32.mrb[0].mxu0
  %v121 = vadd.f32 %v45, %v120
  %v122 = vpop.f32.mrb[0].mxu0
  %123 = vmatprep.mubr.f32.mxu0 0.0
  %124 = vmatmul.mubr.f32.gmra.mrb[0].mxu0 %v52
  %v125 = vpop.f32.mrb[0].mxu0
  %v126 = vadd.f32 %v45, %v125
  %v127 = vpop.f32.mrb[0].mxu0
  %128 = vdwg.mxu0
  %v129 = vld [vmem:[%s1] sm:$0xff]
  %v130 = vld [vmem:[%s1 + $0x8] sm:$0xff]
  %v131 = vadd.f32 %v121, %v129
  %v132 = vadd.f32 %v126, %v130
  %v133 = vsel %vm47, %v131, 0.0
  %134 = vadd.xlane.f32.xlu0 %v133
  %v135 = vpop.xlane.xlu0 %134
  %v136 = vsel %vm47, %v132, 0.0
  %137 = vadd.xlane.f32.xlu0 %v136
  %v138 = vpop.xlane.xlu0 %137
  %v139 = vrcp.pop 32.0
  %v140 = vmul.f32 %v135, %v139
  %v141 = vmul.f32 %v138, %v139
  %v142 = vrot.slane %v140, 4
  %v143 = vadd.f32 %v140, %v142
  %v144 = vrot.slane %v143, 2
  %v145 = vadd.f32 %v143, %v144
  %v146 = vrot.slane %v145, 1
  %v147 = vadd.f32 %v145, %v146
  %v148 = vrot.slane %v141, 4
  %v149 = vadd.f32 %v141, %v148
  %v150 = vrot.slane %v149, 2
  %v151 = vadd.f32 %v149, %v150
  %v152 = vrot.slane %v151, 1
  %v153 = vadd.f32 %v151, %v152
  %v154 = vrcp.pop 8.0
  %v155 = vmul.f32 %v147, %v154
  %v156 = vmul.f32 %v153, %v154
  %v157 = vsub.f32 %v131, %v155
  %v158 = vsub.f32 %v132, %v156
  %v159 = vmul.f32 %v157, %v157
  %v160 = vmul.f32 %v158, %v158
  %v161 = vsel %vm47, %v159, 0.0
  %162 = vadd.xlane.f32.xlu0 %v161
  %v163 = vpop.xlane.xlu0 %162
  %v164 = vsel %vm47, %v160, 0.0
  %165 = vadd.xlane.f32.xlu0 %v164
  %v166 = vpop.xlane.xlu0 %165
  %v167 = vmul.f32 %v163, %v139
  %v168 = vmul.f32 %v166, %v139
  %v169 = vrot.slane %v167, 4
  %v170 = vadd.f32 %v167, %v169
  %v171 = vrot.slane %v170, 2
  %v172 = vadd.f32 %v170, %v171
  %v173 = vrot.slane %v172, 1
  %v174 = vadd.f32 %v172, %v173
  %v175 = vrot.slane %v168, 4
  %v176 = vadd.f32 %v168, %v175
  %v177 = vrot.slane %v176, 2
  %v178 = vadd.f32 %v176, %v177
  %v179 = vrot.slane %v178, 1
  %v180 = vadd.f32 %v178, %v179
  %v181 = vmul.f32 %v174, %v154
  %v182 = vmul.f32 %v180, %v154
  %v183 = vadd.f32 %v181, 1e-05
  %v184 = vadd.f32 %v182, 1e-05
  %v185 = vrsqrt.pop %v183
  %v186 = vrsqrt.pop %v184
  %v187 = vmul.f32 %v157, %v185
  %v188 = vmul.f32 %v158, %v186
  %189 = vst.msk [vmem:[%s9] sm:$0xff] %vm47, %v187
  %190 = vst.msk [vmem:[%s9 + $0x8] sm:$0xff] %vm47, %v188
  %v191 = vld [vmem:[%s5] sm:$0xff]
  %v192 = vld [vmem:[%s5 + $0x8] sm:$0xff]
  %v193 = vld [vmem:[%s5 + $0x10] sm:$0xff]
  %v194 = vld [vmem:[%s5 + $0x18] sm:$0xff]
  %v195 = vld [vmem:[%s6] sm:$0x1]
  %v197 = vlaneseq
  %v198 = vshrl.u32 %v197, 7
  %v199 = vsub.s32 0, %v198
  %v200 = vrot.slane %v195, %v199
  %v203 = vsel %vm47, %v187, 0
  %v206 = vsel %vm47, %v188, 0
  %208 = vmatprep.subr.mxu0 0.0
  %209 = vmatpush1.msra.mxu0 %v191
  %210 = vmatprep.subr.mxu0 0.0
  %211 = vmatpush1.msra.mxu0 %v192
  %212 = vmatprep.subr.mxu0 0.0
  %213 = vmatpush1.msra.mxu0 %v193
  %214 = vmatprep.subr.mxu0 0.0
  %215 = vmatpush1.msra.mxu0 %v194
  %216 = vmatprep.subr.mxu0 0.0
  %217 = vmatpush1.msra.mxu0 0.0
  %218 = vmatprep.subr.mxu0 0.0
  %219 = vmatpush1.msra.mxu0 0.0
  %220 = vmatprep.subr.mxu0 0.0
  %221 = vmatpush1.msra.mxu0 0.0
  %222 = vmatprep.subr.mxu0 0.0
  %223 = vmatpush1.msra.mxu0 0.0
  %224 = vmatprep.subr.mxu0 0.0
  %225 = vmatpush1.msra.mxu0 0.0
  %226 = vmatprep.subr.mxu0 0.0
  %227 = vmatpush1.msra.mxu0 0.0
  %228 = vmatprep.subr.mxu0 0.0
  %229 = vmatpush1.msra.mxu0 0.0
  %230 = vmatprep.subr.mxu0 0.0
  %231 = vmatpush1.msra.mxu0 0.0
  %232 = vmatprep.subr.mxu0 0.0
  %233 = vmatpush1.msra.mxu0 0.0
  %234 = vmatprep.subr.mxu0 0.0
  %235 = vmatpush1.msra.mxu0 0.0
  %236 = vmatprep.subr.mxu0 0.0
  %237 = vmatpush1.msra.mxu0 0.0
  %238 = vmatprep.subr.mxu0 0.0
  %239 = vmatpush1.msra.mxu0 0.0
  %240 = vmatprep.subr.mxu0 0.0
  %241 = vmatpush1.msra.mxu0 0.0
  %242 = vmatprep.subr.mxu0 0.0
  %243 = vmatpush1.msra.mxu0 0.0
  %244 = vmatprep.subr.mxu0 0.0
  %245 = vmatpush1.msra.mxu0 0.0
  %246 = vmatprep.subr.mxu0 0.0
  %247 = vmatpush1.msra.mxu0 0.0
  %248 = vmatprep.subr.mxu0 0.0
  %249 = vmatpush1.msra.mxu0 0.0
  %250 = vmatprep.subr.mxu0 0.0
  %251 = vmatpush1.msra.mxu0 0.0
  %252 = vmatprep.subr.mxu0 0.0
  %253 = vmatpush1.msra.mxu0 0.0
  %254 = vmatprep.subr.mxu0 0.0
  %255 = vmatpush1.msra.mxu0 0.0
  %256 = vmatprep.subr.mxu0 0.0
  %257 = vmatpush1.msra.mxu0 0.0
  %258 = vmatprep.subr.mxu0 0.0
  %259 = vmatpush1.msra.mxu0 0.0
  %260 = vmatprep.subr.mxu0 0.0
  %261 = vmatpush1.msra.mxu0 0.0
  %262 = vmatprep.subr.mxu0 0.0
  %263 = vmatpush1.msra.mxu0 0.0
  %264 = vmatprep.subr.mxu0 0.0
  %265 = vmatpush1.msra.mxu0 0.0
  %266 = vmatprep.subr.mxu0 0.0
  %267 = vmatpush1.msra.mxu0 0.0
  %268 = vmatprep.subr.mxu0 0.0
  %269 = vmatpush1.msra.mxu0 0.0
  %270 = vmatprep.subr.mxu0 0.0
  %271 = vmatpush1.msra.mxu0 0.0
  %272 = vmatprep.mubr.f32.mxu0 0.0
  %273 = vmatmul.mubr.f32.gmra.mrb[0].mxu0 %v203
  %v274 = vpop.f32.mrb[0].mxu0
  %v275 = vadd.f32 %v200, %v274
  %v276 = vpop.f32.mrb[0].mxu0
  %277 = vmatprep.mubr.f32.mxu0 0.0
  %278 = vmatmul.mubr.f32.gmra.mrb[0].mxu0 %v206
  %v279 = vpop.f32.mrb[0].mxu0
  %v280 = vadd.f32 %v200, %v279
  %v281 = vpop.f32.mrb[0].mxu0
  %282 = vdwg.mxu0
  %v283 = vld [vmem:[%s4] sm:$0xff]
  %v284 = vld [vmem:[%s4 + $0x8] sm:$0xff]
  %v285 = vld [vmem:[%s7] sm:$0xff]
  %v286 = vld [vmem:[%s7 + $0x8] sm:$0xff]
  %v287 = vld [vmem:[%s7 + $0x10] sm:$0xff]
  %v288 = vld [vmem:[%s7 + $0x18] sm:$0xff]
  %v289 = vld [vmem:[%s8] sm:$0x1]
  %v291 = vlaneseq
  %v292 = vshrl.u32 %v291, 7
  %v293 = vsub.s32 0, %v292
  %v294 = vrot.slane %v289, %v293
  %v297 = vsel %vm47, %v283, 0
  %v300 = vsel %vm47, %v284, 0
  %302 = vmatprep.subr.mxu0 0.0
  %303 = vmatpush1.msra.mxu0 %v285
  %304 = vmatprep.subr.mxu0 0.0
  %305 = vmatpush1.msra.mxu0 %v286
  %306 = vmatprep.subr.mxu0 0.0
  %307 = vmatpush1.msra.mxu0 %v287
  %308 = vmatprep.subr.mxu0 0.0
  %309 = vmatpush1.msra.mxu0 %v288
  %310 = vmatprep.subr.mxu0 0.0
  %311 = vmatpush1.msra.mxu0 0.0
  %312 = vmatprep.subr.mxu0 0.0
  %313 = vmatpush1.msra.mxu0 0.0
  %314 = vmatprep.subr.mxu0 0.0
  %315 = vmatpush1.msra.mxu0 0.0
  %316 = vmatprep.subr.mxu0 0.0
  %317 = vmatpush1.msra.mxu0 0.0
  %318 = vmatprep.subr.mxu0 0.0
  %319 = vmatpush1.msra.mxu0 0.0
  %320 = vmatprep.subr.mxu0 0.0
  %321 = vmatpush1.msra.mxu0 0.0
  %322 = vmatprep.subr.mxu0 0.0
  %323 = vmatpush1.msra.mxu0 0.0
  %324 = vmatprep.subr.mxu0 0.0
  %325 = vmatpush1.msra.mxu0 0.0
  %326 = vmatprep.subr.mxu0 0.0
  %327 = vmatpush1.msra.mxu0 0.0
  %328 = vmatprep.subr.mxu0 0.0
  %329 = vmatpush1.msra.mxu0 0.0
  %330 = vmatprep.subr.mxu0 0.0
  %331 = vmatpush1.msra.mxu0 0.0
  %332 = vmatprep.subr.mxu0 0.0
  %333 = vmatpush1.msra.mxu0 0.0
  %334 = vmatprep.subr.mxu0 0.0
  %335 = vmatpush1.msra.mxu0 0.0
  %336 = vmatprep.subr.mxu0 0.0
  %337 = vmatpush1.msra.mxu0 0.0
  %338 = vmatprep.subr.mxu0 0.0
  %339 = vmatpush1.msra.mxu0 0.0
  %340 = vmatprep.subr.mxu0 0.0
  %341 = vmatpush1.msra.mxu0 0.0
  %342 = vmatprep.subr.mxu0 0.0
  %343 = vmatpush1.msra.mxu0 0.0
  %344 = vmatprep.subr.mxu0 0.0
  %345 = vmatpush1.msra.mxu0 0.0
  %346 = vmatprep.subr.mxu0 0.0
  %347 = vmatpush1.msra.mxu0 0.0
  %348 = vmatprep.subr.mxu0 0.0
  %349 = vmatpush1.msra.mxu0 0.0
  %350 = vmatprep.subr.mxu0 0.0
  %351 = vmatpush1.msra.mxu0 0.0
  %352 = vmatprep.subr.mxu0 0.0
  %353 = vmatpush1.msra.mxu0 0.0
  %354 = vmatprep.subr.mxu0 0.0
  %355 = vmatpush1.msra.mxu0 0.0
  %356 = vmatprep.subr.mxu0 0.0
  %357 = vmatpush1.msra.mxu0 0.0
  %358 = vmatprep.subr.mxu0 0.0
  %359 = vmatpush1.msra.mxu0 0.0
  %360 = vmatprep.subr.mxu0 0.0
  %361 = vmatpush1.msra.mxu0 0.0
  %362 = vmatprep.subr.mxu0 0.0
  %363 = vmatpush1.msra.mxu0 0.0
  %364 = vmatprep.subr.mxu0 0.0
  %365 = vmatpush1.msra.mxu0 0.0
  %366 = vmatprep.mubr.f32.mxu0 0.0
  %367 = vmatmul.mubr.f32.gmra.mrb[0].mxu0 %v297
  %v368 = vpop.f32.mrb[0].mxu0
  %v369 = vadd.f32 %v294, %v368
  %v370 = vpop.f32.mrb[0].mxu0
  %371 = vmatprep.mubr.f32.mxu0 0.0
  %372 = vmatmul.mubr.f32.gmra.mrb[0].mxu0 %v300
  %v373 = vpop.f32.mrb[0].mxu0
  %v374 = vadd.f32 %v294, %v373
  %v375 = vpop.f32.mrb[0].mxu0
  %376 = vdwg.mxu0
  %vm377 = vcmask 64512
  %v379 = vsel %vm377, %v275, 0
  %v382 = vsel %vm377, %v369, 0
  %384 = vmatprep.subr.mxu0 0.0
  %385 = vmatpush1.xpose.msra.mxu0 %v382
  %386 = vmatprep.subr.mxu0 0.0
  %387 = vmatpush1.xpose.msra.mxu0 0.0
  %388 = vmatprep.subr.mxu0 0.0
  %389 = vmatpush1.xpose.msra.mxu0 0.0
  %390 = vmatprep.subr.mxu0 0.0
  %391 = vmatpush1.xpose.msra.mxu0 0.0
  %392 = vmatprep.subr.mxu0 0.0
  %393 = vmatpush1.xpose.msra.mxu0 0.0
  %394 = vmatprep.subr.mxu0 0.0
  %395 = vmatpush1.xpose.msra.mxu0 0.0
  %396 = vmatprep.subr.mxu0 0.0
  %397 = vmatpush1.xpose.msra.mxu0 0.0
  %398 = vmatprep.subr.mxu0 0.0
  %399 = vmatpush1.xpose.msra.mxu0 0.0
  %400 = vmatprep.subr.mxu0 0.0
  %401 = vmatpush1.xpose.msra.mxu0 0.0
  %402 = vmatprep.subr.mxu0 0.0
  %403 = vmatpush1.xpose.msra.mxu0 0.0
  %404 = vmatprep.subr.mxu0 0.0
  %405 = vmatpush1.xpose.msra.mxu0 0.0
  %406 = vmatprep.subr.mxu0 0.0
  %407 = vmatpush1.xpose.msra.mxu0 0.0
  %408 = vmatprep.subr.mxu0 0.0
  %409 = vmatpush1.xpose.msra.mxu0 0.0
  %410 = vmatprep.subr.mxu0 0.0
  %411 = vmatpush1.xpose.msra.mxu0 0.0
  %412 = vmatprep.subr.mxu0 0.0
  %413 = vmatpush1.xpose.msra.mxu0 0.0
  %414 = vmatprep.subr.mxu0 0.0
  %415 = vmatpush1.xpose.msra.mxu0 0.0
  %416 = vmatprep.subr.mxu0 0.0
  %417 = vmatpush1.xpose.msra.mxu0 0.0
  %418 = vmatprep.subr.mxu0 0.0
  %419 = vmatpush1.xpose.msra.mxu0 0.0
  %420 = vmatprep.subr.mxu0 0.0
  %421 = vmatpush1.xpose.msra.mxu0 0.0
  %422 = vmatprep.subr.mxu0 0.0
  %423 = vmatpush1.xpose.msra.mxu0 0.0
  %424 = vmatprep.subr.mxu0 0.0
  %425 = vmatpush1.xpose.msra.mxu0 0.0
  %426 = vmatprep.subr.mxu0 0.0
  %427 = vmatpush1.xpose.msra.mxu0 0.0
  %428 = vmatprep.subr.mxu0 0.0
  %429 = vmatpush1.xpose.msra.mxu0 0.0
  %430 = vmatprep.subr.mxu0 0.0
  %431 = vmatpush1.xpose.msra.mxu0 0.0
  %432 = vmatprep.subr.mxu0 0.0
  %433 = vmatpush1.xpose.msra.mxu0 0.0
  %434 = vmatprep.subr.mxu0 0.0
  %435 = vmatpush1.xpose.msra.mxu0 0.0
  %436 = vmatprep.subr.mxu0 0.0
  %437 = vmatpush1.xpose.msra.mxu0 0.0
  %438 = vmatprep.subr.mxu0 0.0
  %439 = vmatpush1.xpose.msra.mxu0 0.0
  %440 = vmatprep.subr.mxu0 0.0
  %441 = vmatpush1.xpose.msra.mxu0 0.0
  %442 = vmatprep.subr.mxu0 0.0
  %443 = vmatpush1.xpose.msra.mxu0 0.0
  %444 = vmatprep.subr.mxu0 0.0
  %445 = vmatpush1.xpose.msra.mxu0 0.0
  %446 = vmatprep.subr.mxu0 0.0
  %447 = vmatpush1.xpose.msra.mxu0 0.0
  %448 = vmatprep.mubr.f32.mxu0 0.0
  %449 = vmatmul.mubr.f32.gmra.mrb[0].mxu0 %v379
  %v450 = vpop.f32.mrb[0].mxu0
  %v451 = vadd.f32 0.0, %v450
  %v452 = vpop.f32.mrb[0].mxu0
  %453 = vdwg.mxu0
  %v455 = vsel %vm377, %v280, 0
  %v458 = vsel %vm377, %v374, 0
  %460 = vmatprep.subr.mxu0 0.0
  %461 = vmatpush1.xpose.msra.mxu0 %v458
  %462 = vmatprep.subr.mxu0 0.0
  %463 = vmatpush1.xpose.msra.mxu0 0.0
  %464 = vmatprep.subr.mxu0 0.0
  %465 = vmatpush1.xpose.msra.mxu0 0.0
  %466 = vmatprep.subr.mxu0 0.0
  %467 = vmatpush1.xpose.msra.mxu0 0.0
  %468 = vmatprep.subr.mxu0 0.0
  %469 = vmatpush1.xpose.msra.mxu0 0.0
  %470 = vmatprep.subr.mxu0 0.0
  %471 = vmatpush1.xpose.msra.mxu0 0.0
  %472 = vmatprep.subr.mxu0 0.0
  %473 = vmatpush1.xpose.msra.mxu0 0.0
  %474 = vmatprep.subr.mxu0 0.0
  %475 = vmatpush1.xpose.msra.mxu0 0.0
  %476 = vmatprep.subr.mxu0 0.0
  %477 = vmatpush1.xpose.msra.mxu0 0.0
  %478 = vmatprep.subr.mxu0 0.0
  %479 = vmatpush1.xpose.msra.mxu0 0.0
  %480 = vmatprep.subr.mxu0 0.0
  %481 = vmatpush1.xpose.msra.mxu0 0.0
  %482 = vmatprep.subr.mxu0 0.0
  %483 = vmatpush1.xpose.msra.mxu0 0.0
  %484 = vmatprep.subr.mxu0 0.0
  %485 = vmatpush1.xpose.msra.mxu0 0.0
  %486 = vmatprep.subr.mxu0 0.0
  %487 = vmatpush1.xpose.msra.mxu0 0.0
  %488 = vmatprep.subr.mxu0 0.0
  %489 = vmatpush1.xpose.msra.mxu0 0.0
  %490 = vmatprep.subr.mxu0 0.0
  %491 = vmatpush1.xpose.msra.mxu0 0.0
  %492 = vmatprep.subr.mxu0 0.0
  %493 = vmatpush1.xpose.msra.mxu0 0.0
  %494 = vmatprep.subr.mxu0 0.0
  %495 = vmatpush1.xpose.msra.mxu0 0.0
  %496 = vmatprep.subr.mxu0 0.0
  %497 = vmatpush1.xpose.msra.mxu0 0.0
  %498 = vmatprep.subr.mxu0 0.0
  %499 = vmatpush1.xpose.msra.mxu0 0.0
  %500 = vmatprep.subr.mxu0 0.0
  %501 = vmatpush1.xpose.msra.mxu0 0.0
  %502 = vmatprep.subr.mxu0 0.0
  %503 = vmatpush1.xpose.msra.mxu0 0.0
  %504 = vmatprep.subr.mxu0 0.0
  %505 = vmatpush1.xpose.msra.mxu0 0.0
  %506 = vmatprep.subr.mxu0 0.0
  %507 = vmatpush1.xpose.msra.mxu0 0.0
  %508 = vmatprep.subr.mxu0 0.0
  %509 = vmatpush1.xpose.msra.mxu0 0.0
  %510 = vmatprep.subr.mxu0 0.0
  %511 = vmatpush1.xpose.msra.mxu0 0.0
  %512 = vmatprep.subr.mxu0 0.0
  %513 = vmatpush1.xpose.msra.mxu0 0.0
  %514 = vmatprep.subr.mxu0 0.0
  %515 = vmatpush1.xpose.msra.mxu0 0.0
  %516 = vmatprep.subr.mxu0 0.0
  %517 = vmatpush1.xpose.msra.mxu0 0.0
  %518 = vmatprep.subr.mxu0 0.0
  %519 = vmatpush1.xpose.msra.mxu0 0.0
  %520 = vmatprep.subr.mxu0 0.0
  %521 = vmatpush1.xpose.msra.mxu0 0.0
  %522 = vmatprep.subr.mxu0 0.0
  %523 = vmatpush1.xpose.msra.mxu0 0.0
  %524 = vmatprep.mubr.f32.mxu0 0.0
  %525 = vmatmul.mubr.f32.gmra.mrb[0].mxu0 %v455
  %v526 = vpop.f32.mrb[0].mxu0
  %v527 = vadd.f32 0.0, %v526
  %v528 = vpop.f32.mrb[0].mxu0
  %529 = vdwg.mxu0
  %v530 = vmul.f32 %v451, 0.35355338
  %v531 = vmul.f32 %v527, 0.35355338
  %v532 = vsel %vm377, %v530, -inf
  %533 = vmax.xlane.f32.xlu0 %v532
  %v534 = vpop.xlane.xlu0 %533
  %v535 = vsel %vm377, %v531, -inf
  %536 = vmax.xlane.f32.xlu0 %v535
  %v537 = vpop.xlane.xlu0 %536
  %v538 = vsub.f32 %v530, %v534
  %v539 = vsub.f32 %v531, %v537
  %v540 = vmul.f32 %v538, 1.442695
  %v541 = vpow.pop %v540
  %v542 = vmul.f32 %v539, 1.442695
  %v543 = vpow.pop %v542
  %v544 = vsel %vm377, %v541, 0.0
  %545 = vadd.xlane.f32.xlu0 %v544
  %v546 = vpop.xlane.xlu0 %545
  %v547 = vsel %vm377, %v543, 0.0
  %548 = vadd.xlane.f32.xlu0 %v547
  %v549 = vpop.xlane.xlu0 %548
  %v550 = vrcp.pop %v546
  %v551 = vrcp.pop %v549
  %v552 = vmul.f32 %v541, %v550
  %v553 = vmul.f32 %v543, %v551
  %554 = vrot.lane.b32.xlu0 %v369, 96
  %v555 = vpop.permute.xlu0 %554
  %557 = vxpose.xlu0.b32.start [1/16] %v555, 128
  %558 = vxpose.xlu0.b32.cont [2/16] 0.0, 128
  %559 = vxpose.xlu0.b32.cont [3/16] 0.0, 128
  %560 = vxpose.xlu0.b32.cont [4/16] 0.0, 128
  %561 = vxpose.xlu0.b32.cont [5/16] 0.0, 128
  %562 = vxpose.xlu0.b32.cont [6/16] 0.0, 128
  %563 = vxpose.xlu0.b32.cont [7/16] 0.0, 128
  %564 = vxpose.xlu0.b32.cont [8/16] 0.0, 128
  %565 = vxpose.xlu0.b32.cont [9/16] 0.0, 128
  %566 = vxpose.xlu0.b32.cont [10/16] 0.0, 128
  %567 = vxpose.xlu0.b32.cont [11/16] 0.0, 128
  %568 = vxpose.xlu0.b32.cont [12/16] 0.0, 128
  %569 = vxpose.xlu0.b32.cont [13/16] 0.0, 128
  %570 = vxpose.xlu0.b32.cont [14/16] 0.0, 128
  %571 = vxpose.xlu0.b32.cont [15/16] 0.0, 128
  %572 = vxpose.xlu0.b32.end [16/16] 0.0, 128
  %v573 = vpop.trf.xlu0
  %v574 = vpop.trf.xlu0
  %v575 = vpop.trf.xlu0
  %v576 = vpop.trf.xlu0
  %v577 = vpop.trf.xlu0
  %v578 = vpop.trf.xlu0
  %v579 = vpop.trf.xlu0
  %v580 = vpop.trf.xlu0
  %v581 = vpop.trf.xlu0
  %v582 = vpop.trf.xlu0
  %v583 = vpop.trf.xlu0
  %v584 = vpop.trf.xlu0
  %v585 = vpop.trf.xlu0
  %v586 = vpop.trf.xlu0
  %v587 = vpop.trf.xlu0
  %v588 = vpop.trf.xlu0
  %v590 = vsel %vm377, %v573, 0
  %v593 = vsel %vm377, %v552, 0
  %595 = vmatprep.subr.mxu0 0.0
  %596 = vmatpush1.xpose.msra.mxu0 %v593
  %597 = vmatprep.subr.mxu0 0.0
  %598 = vmatpush1.xpose.msra.mxu0 0.0
  %599 = vmatprep.subr.mxu0 0.0
  %600 = vmatpush1.xpose.msra.mxu0 0.0
  %601 = vmatprep.subr.mxu0 0.0
  %602 = vmatpush1.xpose.msra.mxu0 0.0
  %603 = vmatprep.subr.mxu0 0.0
  %604 = vmatpush1.xpose.msra.mxu0 0.0
  %605 = vmatprep.subr.mxu0 0.0
  %606 = vmatpush1.xpose.msra.mxu0 0.0
  %607 = vmatprep.subr.mxu0 0.0
  %608 = vmatpush1.xpose.msra.mxu0 0.0
  %609 = vmatprep.subr.mxu0 0.0
  %610 = vmatpush1.xpose.msra.mxu0 0.0
  %611 = vmatprep.subr.mxu0 0.0
  %612 = vmatpush1.xpose.msra.mxu0 0.0
  %613 = vmatprep.subr.mxu0 0.0
  %614 = vmatpush1.xpose.msra.mxu0 0.0
  %615 = vmatprep.subr.mxu0 0.0
  %616 = vmatpush1.xpose.msra.mxu0 0.0
  %617 = vmatprep.subr.mxu0 0.0
  %618 = vmatpush1.xpose.msra.mxu0 0.0
  %619 = vmatprep.subr.mxu0 0.0
  %620 = vmatpush1.xpose.msra.mxu0 0.0
  %621 = vmatprep.subr.mxu0 0.0
  %622 = vmatpush1.xpose.msra.mxu0 0.0
  %623 = vmatprep.subr.mxu0 0.0
  %624 = vmatpush1.xpose.msra.mxu0 0.0
  %625 = vmatprep.subr.mxu0 0.0
  %626 = vmatpush1.xpose.msra.mxu0 0.0
  %627 = vmatprep.subr.mxu0 0.0
  %628 = vmatpush1.xpose.msra.mxu0 0.0
  %629 = vmatprep.subr.mxu0 0.0
  %630 = vmatpush1.xpose.msra.mxu0 0.0
  %631 = vmatprep.subr.mxu0 0.0
  %632 = vmatpush1.xpose.msra.mxu0 0.0
  %633 = vmatprep.subr.mxu0 0.0
  %634 = vmatpush1.xpose.msra.mxu0 0.0
  %635 = vmatprep.subr.mxu0 0.0
  %636 = vmatpush1.xpose.msra.mxu0 0.0
  %637 = vmatprep.subr.mxu0 0.0
  %638 = vmatpush1.xpose.msra.mxu0 0.0
  %639 = vmatprep.subr.mxu0 0.0
  %640 = vmatpush1.xpose.msra.mxu0 0.0
  %641 = vmatprep.subr.mxu0 0.0
  %642 = vmatpush1.xpose.msra.mxu0 0.0
  %643 = vmatprep.subr.mxu0 0.0
  %644 = vmatpush1.xpose.msra.mxu0 0.0
  %645 = vmatprep.subr.mxu0 0.0
  %646 = vmatpush1.xpose.msra.mxu0 0.0
  %647 = vmatprep.subr.mxu0 0.0
  %648 = vmatpush1.xpose.msra.mxu0 0.0
  %649 = vmatprep.subr.mxu0 0.0
  %650 = vmatpush1.xpose.msra.mxu0 0.0
  %651 = vmatprep.subr.mxu0 0.0
  %652 = vmatpush1.xpose.msra.mxu0 0.0
  %653 = vmatprep.subr.mxu0 0.0
  %654 = vmatpush1.xpose.msra.mxu0 0.0
  %655 = vmatprep.subr.mxu0 0.0
  %656 = vmatpush1.xpose.msra.mxu0 0.0
  %657 = vmatprep.subr.mxu0 0.0
  %658 = vmatpush1.xpose.msra.mxu0 0.0
  %659 = vmatprep.mubr.f32.mxu0 0.0
  %660 = vmatmul.mubr.f32.gmra.mrb[0].mxu0 %v590
  %v661 = vpop.f32.mrb[0].mxu0
  %v662 = vadd.f32 0.0, %v661
  %v663 = vpop.f32.mrb[0].mxu0
  %664 = vdwg.mxu0
  %665 = vrot.lane.b32.xlu0 %v374, 96
  %v666 = vpop.permute.xlu0 %665
  %668 = vxpose.xlu0.b32.start [1/16] %v666, 128
  %669 = vxpose.xlu0.b32.cont [2/16] 0.0, 128
  %670 = vxpose.xlu0.b32.cont [3/16] 0.0, 128
  %671 = vxpose.xlu0.b32.cont [4/16] 0.0, 128
  %672 = vxpose.xlu0.b32.cont [5/16] 0.0, 128
  %673 = vxpose.xlu0.b32.cont [6/16] 0.0, 128
  %674 = vxpose.xlu0.b32.cont [7/16] 0.0, 128
  %675 = vxpose.xlu0.b32.cont [8/16] 0.0, 128
  %676 = vxpose.xlu0.b32.cont [9/16] 0.0, 128
  %677 = vxpose.xlu0.b32.cont [10/16] 0.0, 128
  %678 = vxpose.xlu0.b32.cont [11/16] 0.0, 128
  %679 = vxpose.xlu0.b32.cont [12/16] 0.0, 128
  %680 = vxpose.xlu0.b32.cont [13/16] 0.0, 128
  %681 = vxpose.xlu0.b32.cont [14/16] 0.0, 128
  %682 = vxpose.xlu0.b32.cont [15/16] 0.0, 128
  %683 = vxpose.xlu0.b32.end [16/16] 0.0, 128
  %v684 = vpop.trf.xlu0
  %v685 = vpop.trf.xlu0
  %v686 = vpop.trf.xlu0
  %v687 = vpop.trf.xlu0
  %v688 = vpop.trf.xlu0
  %v689 = vpop.trf.xlu0
  %v690 = vpop.trf.xlu0
  %v691 = vpop.trf.xlu0
  %v692 = vpop.trf.xlu0
  %v693 = vpop.trf.xlu0
  %v694 = vpop.trf.xlu0
  %v695 = vpop.trf.xlu0
  %v696 = vpop.trf.xlu0
  %v697 = vpop.trf.xlu0
  %v698 = vpop.trf.xlu0
  %v699 = vpop.trf.xlu0
  %v701 = vsel %vm377, %v684, 0
  %v704 = vsel %vm377, %v553, 0
  %706 = vmatprep.subr.mxu0 0.0
  %707 = vmatpush1.xpose.msra.mxu0 %v704
  %708 = vmatprep.subr.mxu0 0.0
  %709 = vmatpush1.xpose.msra.mxu0 0.0
  %710 = vmatprep.subr.mxu0 0.0
  %711 = vmatpush1.xpose.msra.mxu0 0.0
  %712 = vmatprep.subr.mxu0 0.0
  %713 = vmatpush1.xpose.msra.mxu0 0.0
  %714 = vmatprep.subr.mxu0 0.0
  %715 = vmatpush1.xpose.msra.mxu0 0.0
  %716 = vmatprep.subr.mxu0 0.0
  %717 = vmatpush1.xpose.msra.mxu0 0.0
  %718 = vmatprep.subr.mxu0 0.0
  %719 = vmatpush1.xpose.msra.mxu0 0.0
  %720 = vmatprep.subr.mxu0 0.0
  %721 = vmatpush1.xpose.msra.mxu0 0.0
  %722 = vmatprep.subr.mxu0 0.0
  %723 = vmatpush1.xpose.msra.mxu0 0.0
  %724 = vmatprep.subr.mxu0 0.0
  %725 = vmatpush1.xpose.msra.mxu0 0.0
  %726 = vmatprep.subr.mxu0 0.0
  %727 = vmatpush1.xpose.msra.mxu0 0.0
  %728 = vmatprep.subr.mxu0 0.0
  %729 = vmatpush1.xpose.msra.mxu0 0.0
  %730 = vmatprep.subr.mxu0 0.0
  %731 = vmatpush1.xpose.msra.mxu0 0.0
  %732 = vmatprep.subr.mxu0 0.0
  %733 = vmatpush1.xpose.msra.mxu0 0.0
  %734 = vmatprep.subr.mxu0 0.0
  %735 = vmatpush1.xpose.msra.mxu0 0.0
  %736 = vmatprep.subr.mxu0 0.0
  %737 = vmatpush1.xpose.msra.mxu0 0.0
  %738 = vmatprep.subr.mxu0 0.0
  %739 = vmatpush1.xpose.msra.mxu0 0.0
  %740 = vmatprep.subr.mxu0 0.0
  %741 = vmatpush1.xpose.msra.mxu0 0.0
  %742 = vmatprep.subr.mxu0 0.0
  %743 = vmatpush1.xpose.msra.mxu0 0.0
  %744 = vmatprep.subr.mxu0 0.0
  %745 = vmatpush1.xpose.msra.mxu0 0.0
  %746 = vmatprep.subr.mxu0 0.0
  %747 = vmatpush1.xpose.msra.mxu0 0.0
  %748 = vmatprep.subr.mxu0 0.0
  %749 = vmatpush1.xpose.msra.mxu0 0.0
  %750 = vmatprep.subr.mxu0 0.0
  %751 = vmatpush1.xpose.msra.mxu0 0.0
  %752 = vmatprep.subr.mxu0 0.0
  %753 = vmatpush1.xpose.msra.mxu0 0.0
  %754 = vmatprep.subr.mxu0 0.0
  %755 = vmatpush1.xpose.msra.mxu0 0.0
  %756 = vmatprep.subr.mxu0 0.0
  %757 = vmatpush1.xpose.msra.mxu0 0.0
  %758 = vmatprep.subr.mxu0 0.0
  %759 = vmatpush1.xpose.msra.mxu0 0.0
  %760 = vmatprep.subr.mxu0 0.0
  %761 = vmatpush1.xpose.msra.mxu0 0.0
  %762 = vmatprep.subr.mxu0 0.0
  %763 = vmatpush1.xpose.msra.mxu0 0.0
  %764 = vmatprep.subr.mxu0 0.0
  %765 = vmatpush1.xpose.msra.mxu0 0.0
  %766 = vmatprep.subr.mxu0 0.0
  %767 = vmatpush1.xpose.msra.mxu0 0.0
  %768 = vmatprep.subr.mxu0 0.0
  %769 = vmatpush1.xpose.msra.mxu0 0.0
  %770 = vmatprep.mubr.f32.mxu0 0.0
  %771 = vmatmul.mubr.f32.gmra.mrb[0].mxu0 %v701
  %v772 = vpop.f32.mrb[0].mxu0
  %v773 = vadd.f32 0.0, %v772
  %v774 = vpop.f32.mrb[0].mxu0
  %775 = vdwg.mxu0
  %776 = vrot.lane.b32.xlu0 %v275, 120
  %v777 = vpop.permute.xlu0 %776
  %778 = vrot.lane.b32.xlu0 %v369, 120
  %v779 = vpop.permute.xlu0 %778
  %v780 = vsel %vm377, %v777, 0
  %v782 = vsel %vm377, %v779, 0
  %784 = vmatprep.subr.mxu0 0.0
  %785 = vmatpush1.xpose.msra.mxu0 %v782
  %786 = vmatprep.subr.mxu0 0.0
  %787 = vmatpush1.xpose.msra.mxu0 0.0
  %788 = vmatprep.subr.mxu0 0.0
  %789 = vmatpush1.xpose.msra.mxu0 0.0
  %790 = vmatprep.subr.mxu0 0.0
  %791 = vmatpush1.xpose.msra.mxu0 0.0
  %792 = vmatprep.subr.mxu0 0.0
  %793 = vmatpush1.xpose.msra.mxu0 0.0
  %794 = vmatprep.subr.mxu0 0.0
  %795 = vmatpush1.xpose.msra.mxu0 0.0
  %796 = vmatprep.subr.mxu0 0.0
  %797 = vmatpush1.xpose.msra.mxu0 0.0
  %798 = vmatprep.subr.mxu0 0.0
  %799 = vmatpush1.xpose.msra.mxu0 0.0
  %800 = vmatprep.subr.mxu0 0.0
  %801 = vmatpush1.xpose.msra.mxu0 0.0
  %802 = vmatprep.subr.mxu0 0.0
  %803 = vmatpush1.xpose.msra.mxu0 0.0
  %804 = vmatprep.subr.mxu0 0.0
  %805 = vmatpush1.xpose.msra.mxu0 0.0
  %806 = vmatprep.subr.mxu0 0.0
  %807 = vmatpush1.xpose.msra.mxu0 0.0
  %808 = vmatprep.subr.mxu0 0.0
  %809 = vmatpush1.xpose.msra.mxu0 0.0
  %810 = vmatprep.subr.mxu0 0.0
  %811 = vmatpush1.xpose.msra.mxu0 0.0
  %812 = vmatprep.subr.mxu0 0.0
  %813 = vmatpush1.xpose.msra.mxu0 0.0
  %814 = vmatprep.subr.mxu0 0.0
  %815 = vmatpush1.xpose.msra.mxu0 0.0
  %816 = vmatprep.subr.mxu0 0.0
  %817 = vmatpush1.xpose.msra.mxu0 0.0
  %818 = vmatprep.subr.mxu0 0.0
  %819 = vmatpush1.xpose.msra.mxu0 0.0
  %820 = vmatprep.subr.mxu0 0.0
  %821 = vmatpush1.xpose.msra.mxu0 0.0
  %822 = vmatprep.subr.mxu0 0.0
  %823 = vmatpush1.xpose.msra.mxu0 0.0
  %824 = vmatprep.subr.mxu0 0.0
  %825 = vmatpush1.xpose.msra.mxu0 0.0
  %826 = vmatprep.subr.mxu0 0.0
  %827 = vmatpush1.xpose.msra.mxu0 0.0
  %828 = vmatprep.subr.mxu0 0.0
  %829 = vmatpush1.xpose.msra.mxu0 0.0
  %830 = vmatprep.subr.mxu0 0.0
  %831 = vmatpush1.xpose.msra.mxu0 0.0
  %832 = vmatprep.subr.mxu0 0.0
  %833 = vmatpush1.xpose.msra.mxu0 0.0
  %834 = vmatprep.subr.mxu0 0.0
  %835 = vmatpush1.xpose.msra.mxu0 0.0
  %836 = vmatprep.subr.mxu0 0.0
  %837 = vmatpush1.xpose.msra.mxu0 0.0
  %838 = vmatprep.subr.mxu0 0.0
  %839 = vmatpush1.xpose.msra.mxu0 0.0
  %840 = vmatprep.subr.mxu0 0.0
  %841 = vmatpush1.xpose.msra.mxu0 0.0
  %842 = vmatprep.subr.mxu0 0.0
  %843 = vmatpush1.xpose.msra.mxu0 0.0
  %844 = vmatprep.subr.mxu0 0.0
  %845 = vmatpush1.xpose.msra.mxu0 0.0
  %846 = vmatprep.subr.mxu0 0.0
  %847 = vmatpush1.xpose.msra.mxu0 0.0
  %848 = vmatprep.mubr.f32.mxu0 0.0
  %849 = vmatmul.mubr.f32.gmra.mrb[0].mxu0 %v780
  %v850 = vpop.f32.mrb[0].mxu0
  %v851 = vadd.f32 0.0, %v850
  %v852 = vpop.f32.mrb[0].mxu0
  %853 = vdwg.mxu0
  %854 = vrot.lane.b32.xlu0 %v280, 120
  %v855 = vpop.permute.xlu0 %854
  %856 = vrot.lane.b32.xlu0 %v374, 120
  %v857 = vpop.permute.xlu0 %856
  %v858 = vsel %vm377, %v855, 0
  %v860 = vsel %vm377, %v857, 0
  %862 = vmatprep.subr.mxu0 0.0
  %863 = vmatpush1.xpose.msra.mxu0 %v860
  %864 = vmatprep.subr.mxu0 0.0
  %865 = vmatpush1.xpose.msra.mxu0 0.0
  %866 = vmatprep.subr.mxu0 0.0
  %867 = vmatpush1.xpose.msra.mxu0 0.0
  %868 = vmatprep.subr.mxu0 0.0
  %869 = vmatpush1.xpose.msra.mxu0 0.0
  %870 = vmatprep.subr.mxu0 0.0
  %871 = vmatpush1.xpose.msra.mxu0 0.0
  %872 = vmatprep.subr.mxu0 0.0
  %873 = vmatpush1.xpose.msra.mxu0 0.0
  %874 = vmatprep.subr.mxu0 0.0
  %875 = vmatpush1.xpose.msra.mxu0 0.0
  %876 = vmatprep.subr.mxu0 0.0
  %877 = vmatpush1.xpose.msra.mxu0 0.0
  %878 = vmatprep.subr.mxu0 0.0
  %879 = vmatpush1.xpose.msra.mxu0 0.0
  %880 = vmatprep.subr.mxu0 0.0
  %881 = vmatpush1.xpose.msra.mxu0 0.0
  %882 = vmatprep.subr.mxu0 0.0
  %883 = vmatpush1.xpose.msra.mxu0 0.0
  %884 = vmatprep.subr.mxu0 0.0
  %885 = vmatpush1.xpose.msra.mxu0 0.0
  %886 = vmatprep.subr.mxu0 0.0
  %887 = vmatpush1.xpose.msra.mxu0 0.0
  %888 = vmatprep.subr.mxu0 0.0
  %889 = vmatpush1.xpose.msra.mxu0 0.0
  %890 = vmatprep.subr.mxu0 0.0
  %891 = vmatpush1.xpose.msra.mxu0 0.0
  %892 = vmatprep.subr.mxu0 0.0
  %893 = vmatpush1.xpose.msra.mxu0 0.0
  %894 = vmatprep.subr.mxu0 0.0
  %895 = vmatpush1.xpose.msra.mxu0 0.0
  %896 = vmatprep.subr.mxu0 0.0
  %897 = vmatpush1.xpose.msra.mxu0 0.0
  %898 = vmatprep.subr.mxu0 0.0
  %899 = vmatpush1.xpose.msra.mxu0 0.0
  %900 = vmatprep.subr.mxu0 0.0
  %901 = vmatpush1.xpose.msra.mxu0 0.0
  %902 = vmatprep.subr.mxu0 0.0
  %903 = vmatpush1.xpose.msra.mxu0 0.0
  %904 = vmatprep.subr.mxu0 0.0
  %905 = vmatpush1.xpose.msra.mxu0 0.0
  %906 = vmatprep.subr.mxu0 0.0
  %907 = vmatpush1.xpose.msra.mxu0 0.0
  %908 = vmatprep.subr.mxu0 0.0
  %909 = vmatpush1.xpose.msra.mxu0 0.0
  %910 = vmatprep.subr.mxu0 0.0
  %911 = vmatpush1.xpose.msra.mxu0 0.0
  %912 = vmatprep.subr.mxu0 0.0
  %913 = vmatpush1.xpose.msra.mxu0 0.0
  %914 = vmatprep.subr.mxu0 0.0
  %915 = vmatpush1.xpose.msra.mxu0 0.0
  %916 = vmatprep.subr.mxu0 0.0
  %917 = vmatpush1.xpose.msra.mxu0 0.0
  %918 = vmatprep.subr.mxu0 0.0
  %919 = vmatpush1.xpose.msra.mxu0 0.0
  %920 = vmatprep.subr.mxu0 0.0
  %921 = vmatpush1.xpose.msra.mxu0 0.0
  %922 = vmatprep.subr.mxu0 0.0
  %923 = vmatpush1.xpose.msra.mxu0 0.0
  %924 = vmatprep.subr.mxu0 0.0
  %925 = vmatpush1.xpose.msra.mxu0 0.0
  %926 = vmatprep.mubr.f32.mxu0 0.0
  %927 = vmatmul.mubr.f32.gmra.mrb[0].mxu0 %v858
  %v928 = vpop.f32.mrb[0].mxu0
  %v929 = vadd.f32 0.0, %v928
  %v930 = vpop.f32.mrb[0].mxu0
  %931 = vdwg.mxu0
  %v932 = vmul.f32 %v851, 0.35355338
  %v933 = vmul.f32 %v929, 0.35355338
  %v934 = vsel %vm377, %v932, -inf
  %935 = vmax.xlane.f32.xlu0 %v934
  %v936 = vpop.xlane.xlu0 %935
  %v937 = vsel %vm377, %v933, -inf
  %938 = vmax.xlane.f32.xlu0 %v937
  %v939 = vpop.xlane.xlu0 %938
  %v940 = vsub.f32 %v932, %v936
  %v941 = vsub.f32 %v933, %v939
  %v942 = vmul.f32 %v940, 1.442695
  %v943 = vpow.pop %v942
  %v944 = vmul.f32 %v941, 1.442695
  %v945 = vpow.pop %v944
  %v946 = vsel %vm377, %v943, 0.0
  %947 = vadd.xlane.f32.xlu0 %v946
  %v948 = vpop.xlane.xlu0 %947
  %v949 = vsel %vm377, %v945, 0.0
  %950 = vadd.xlane.f32.xlu0 %v949
  %v951 = vpop.xlane.xlu0 %950
  %v952 = vrcp.pop %v948
  %v953 = vrcp.pop %v951
  %v954 = vmul.f32 %v943, %v952
  %v955 = vmul.f32 %v945, %v953
  %956 = vrot.lane.b32.xlu0 %v369, 88
  %v957 = vpop.permute.xlu0 %956
  %959 = vxpose.xlu0.b32.start [1/16] %v957, 128
  %960 = vxpose.xlu0.b32.cont [2/16] 0.0, 128
  %961 = vxpose.xlu0.b32.cont [3/16] 0.0, 128
  %962 = vxpose.xlu0.b32.cont [4/16] 0.0, 128
  %963 = vxpose.xlu0.b32.cont [5/16] 0.0, 128
  %964 = vxpose.xlu0.b32.cont [6/16] 0.0, 128
  %965 = vxpose.xlu0.b32.cont [7/16] 0.0, 128
  %966 = vxpose.xlu0.b32.cont [8/16] 0.0, 128
  %967 = vxpose.xlu0.b32.cont [9/16] 0.0, 128
  %968 = vxpose.xlu0.b32.cont [10/16] 0.0, 128
  %969 = vxpose.xlu0.b32.cont [11/16] 0.0, 128
  %970 = vxpose.xlu0.b32.cont [12/16] 0.0, 128
  %971 = vxpose.xlu0.b32.cont [13/16] 0.0, 128
  %972 = vxpose.xlu0.b32.cont [14/16] 0.0, 128
  %973 = vxpose.xlu0.b32.cont [15/16] 0.0, 128
  %974 = vxpose.xlu0.b32.end [16/16] 0.0, 128
  %v975 = vpop.trf.xlu0
  %v976 = vpop.trf.xlu0
  %v977 = vpop.trf.xlu0
  %v978 = vpop.trf.xlu0
  %v979 = vpop.trf.xlu0
  %v980 = vpop.trf.xlu0
  %v981 = vpop.trf.xlu0
  %v982 = vpop.trf.xlu0
  %v983 = vpop.trf.xlu0
  %v984 = vpop.trf.xlu0
  %v985 = vpop.trf.xlu0
  %v986 = vpop.trf.xlu0
  %v987 = vpop.trf.xlu0
  %v988 = vpop.trf.xlu0
  %v989 = vpop.trf.xlu0
  %v990 = vpop.trf.xlu0
  %v992 = vsel %vm377, %v975, 0
  %v995 = vsel %vm377, %v954, 0
  %997 = vmatprep.subr.mxu0 0.0
  %998 = vmatpush1.xpose.msra.mxu0 %v995
  %999 = vmatprep.subr.mxu0 0.0
  %1000 = vmatpush1.xpose.msra.mxu0 0.0
  %1001 = vmatprep.subr.mxu0 0.0
  %1002 = vmatpush1.xpose.msra.mxu0 0.0
  %1003 = vmatprep.subr.mxu0 0.0
  %1004 = vmatpush1.xpose.msra.mxu0 0.0
  %1005 = vmatprep.subr.mxu0 0.0
  %1006 = vmatpush1.xpose.msra.mxu0 0.0
  %1007 = vmatprep.subr.mxu0 0.0
  %1008 = vmatpush1.xpose.msra.mxu0 0.0
  %1009 = vmatprep.subr.mxu0 0.0
  %1010 = vmatpush1.xpose.msra.mxu0 0.0
  %1011 = vmatprep.subr.mxu0 0.0
  %1012 = vmatpush1.xpose.msra.mxu0 0.0
  %1013 = vmatprep.subr.mxu0 0.0
  %1014 = vmatpush1.xpose.msra.mxu0 0.0
  %1015 = vmatprep.subr.mxu0 0.0
  %1016 = vmatpush1.xpose.msra.mxu0 0.0
  %1017 = vmatprep.subr.mxu0 0.0
  %1018 = vmatpush1.xpose.msra.mxu0 0.0
  %1019 = vmatprep.subr.mxu0 0.0
  %1020 = vmatpush1.xpose.msra.mxu0 0.0
  %1021 = vmatprep.subr.mxu0 0.0
  %1022 = vmatpush1.xpose.msra.mxu0 0.0
  %1023 = vmatprep.subr.mxu0 0.0
  %1024 = vmatpush1.xpose.msra.mxu0 0.0
  %1025 = vmatprep.subr.mxu0 0.0
  %1026 = vmatpush1.xpose.msra.mxu0 0.0
  %1027 = vmatprep.subr.mxu0 0.0
  %1028 = vmatpush1.xpose.msra.mxu0 0.0
  %1029 = vmatprep.subr.mxu0 0.0
  %1030 = vmatpush1.xpose.msra.mxu0 0.0
  %1031 = vmatprep.subr.mxu0 0.0
  %1032 = vmatpush1.xpose.msra.mxu0 0.0
  %1033 = vmatprep.subr.mxu0 0.0
  %1034 = vmatpush1.xpose.msra.mxu0 0.0
  %1035 = vmatprep.subr.mxu0 0.0
  %1036 = vmatpush1.xpose.msra.mxu0 0.0
  %1037 = vmatprep.subr.mxu0 0.0
  %1038 = vmatpush1.xpose.msra.mxu0 0.0
  %1039 = vmatprep.subr.mxu0 0.0
  %1040 = vmatpush1.xpose.msra.mxu0 0.0
  %1041 = vmatprep.subr.mxu0 0.0
  %1042 = vmatpush1.xpose.msra.mxu0 0.0
  %1043 = vmatprep.subr.mxu0 0.0
  %1044 = vmatpush1.xpose.msra.mxu0 0.0
  %1045 = vmatprep.subr.mxu0 0.0
  %1046 = vmatpush1.xpose.msra.mxu0 0.0
  %1047 = vmatprep.subr.mxu0 0.0
  %1048 = vmatpush1.xpose.msra.mxu0 0.0
  %1049 = vmatprep.subr.mxu0 0.0
  %1050 = vmatpush1.xpose.msra.mxu0 0.0
  %1051 = vmatprep.subr.mxu0 0.0
  %1052 = vmatpush1.xpose.msra.mxu0 0.0
  %1053 = vmatprep.subr.mxu0 0.0
  %1054 = vmatpush1.xpose.msra.mxu0 0.0
  %1055 = vmatprep.subr.mxu0 0.0
  %1056 = vmatpush1.xpose.msra.mxu0 0.0
  %1057 = vmatprep.subr.mxu0 0.0
  %1058 = vmatpush1.xpose.msra.mxu0 0.0
  %1059 = vmatprep.subr.mxu0 0.0
  %1060 = vmatpush1.xpose.msra.mxu0 0.0
  %1061 = vmatprep.mubr.f32.mxu0 0.0
  %1062 = vmatmul.mubr.f32.gmra.mrb[0].mxu0 %v992
  %v1063 = vpop.f32.mrb[0].mxu0
  %v1064 = vadd.f32 0.0, %v1063
  %v1065 = vpop.f32.mrb[0].mxu0
  %1066 = vdwg.mxu0
  %1067 = vrot.lane.b32.xlu0 %v374, 88
  %v1068 = vpop.permute.xlu0 %1067
  %1070 = vxpose.xlu0.b32.start [1/16] %v1068, 128
  %1071 = vxpose.xlu0.b32.cont [2/16] 0.0, 128
  %1072 = vxpose.xlu0.b32.cont [3/16] 0.0, 128
  %1073 = vxpose.xlu0.b32.cont [4/16] 0.0, 128
  %1074 = vxpose.xlu0.b32.cont [5/16] 0.0, 128
  %1075 = vxpose.xlu0.b32.cont [6/16] 0.0, 128
  %1076 = vxpose.xlu0.b32.cont [7/16] 0.0, 128
  %1077 = vxpose.xlu0.b32.cont [8/16] 0.0, 128
  %1078 = vxpose.xlu0.b32.cont [9/16] 0.0, 128
  %1079 = vxpose.xlu0.b32.cont [10/16] 0.0, 128
  %1080 = vxpose.xlu0.b32.cont [11/16] 0.0, 128
  %1081 = vxpose.xlu0.b32.cont [12/16] 0.0, 128
  %1082 = vxpose.xlu0.b32.cont [13/16] 0.0, 128
  %1083 = vxpose.xlu0.b32.cont [14/16] 0.0, 128
  %1084 = vxpose.xlu0.b32.cont [15/16] 0.0, 128
  %1085 = vxpose.xlu0.b32.end [16/16] 0.0, 128
  %v1086 = vpop.trf.xlu0
  %v1087 = vpop.trf.xlu0
  %v1088 = vpop.trf.xlu0
  %v1089 = vpop.trf.xlu0
  %v1090 = vpop.trf.xlu0
  %v1091 = vpop.trf.xlu0
  %v1092 = vpop.trf.xlu0
  %v1093 = vpop.trf.xlu0
  %v1094 = vpop.trf.xlu0
  %v1095 = vpop.trf.xlu0
  %v1096 = vpop.trf.xlu0
  %v1097 = vpop.trf.xlu0
  %v1098 = vpop.trf.xlu0
  %v1099 = vpop.trf.xlu0
  %v1100 = vpop.trf.xlu0
  %v1101 = vpop.trf.xlu0
  %v1103 = vsel %vm377, %v1086, 0
  %v1106 = vsel %vm377, %v955, 0
  %1108 = vmatprep.subr.mxu0 0.0
  %1109 = vmatpush1.xpose.msra.mxu0 %v1106
  %1110 = vmatprep.subr.mxu0 0.0
  %1111 = vmatpush1.xpose.msra.mxu0 0.0
  %1112 = vmatprep.subr.mxu0 0.0
  %1113 = vmatpush1.xpose.msra.mxu0 0.0
  %1114 = vmatprep.subr.mxu0 0.0
  %1115 = vmatpush1.xpose.msra.mxu0 0.0
  %1116 = vmatprep.subr.mxu0 0.0
  %1117 = vmatpush1.xpose.msra.mxu0 0.0
  %1118 = vmatprep.subr.mxu0 0.0
  %1119 = vmatpush1.xpose.msra.mxu0 0.0
  %1120 = vmatprep.subr.mxu0 0.0
  %1121 = vmatpush1.xpose.msra.mxu0 0.0
  %1122 = vmatprep.subr.mxu0 0.0
  %1123 = vmatpush1.xpose.msra.mxu0 0.0
  %1124 = vmatprep.subr.mxu0 0.0
  %1125 = vmatpush1.xpose.msra.mxu0 0.0
  %1126 = vmatprep.subr.mxu0 0.0
  %1127 = vmatpush1.xpose.msra.mxu0 0.0
  %1128 = vmatprep.subr.mxu0 0.0
  %1129 = vmatpush1.xpose.msra.mxu0 0.0
  %1130 = vmatprep.subr.mxu0 0.0
  %1131 = vmatpush1.xpose.msra.mxu0 0.0
  %1132 = vmatprep.subr.mxu0 0.0
  %1133 = vmatpush1.xpose.msra.mxu0 0.0
  %1134 = vmatprep.subr.mxu0 0.0
  %1135 = vmatpush1.xpose.msra.mxu0 0.0
  %1136 = vmatprep.subr.mxu0 0.0
  %1137 = vmatpush1.xpose.msra.mxu0 0.0
  %1138 = vmatprep.subr.mxu0 0.0
  %1139 = vmatpush1.xpose.msra.mxu0 0.0
  %1140 = vmatprep.subr.mxu0 0.0
  %1141 = vmatpush1.xpose.msra.mxu0 0.0
  %1142 = vmatprep.subr.mxu0 0.0
  %1143 = vmatpush1.xpose.msra.mxu0 0.0
  %1144 = vmatprep.subr.mxu0 0.0
  %1145 = vmatpush1.xpose.msra.mxu0 0.0
  %1146 = vmatprep.subr.mxu0 0.0
  %1147 = vmatpush1.xpose.msra.mxu0 0.0
  %1148 = vmatprep.subr.mxu0 0.0
  %1149 = vmatpush1.xpose.msra.mxu0 0.0
  %1150 = vmatprep.subr.mxu0 0.0
  %1151 = vmatpush1.xpose.msra.mxu0 0.0
  %1152 = vmatprep.subr.mxu0 0.0
  %1153 = vmatpush1.xpose.msra.mxu0 0.0
  %1154 = vmatprep.subr.mxu0 0.0
  %1155 = vmatpush1.xpose.msra.mxu0 0.0
  %1156 = vmatprep.subr.mxu0 0.0
  %1157 = vmatpush1.xpose.msra.mxu0 0.0
  %1158 = vmatprep.subr.mxu0 0.0
  %1159 = vmatpush1.xpose.msra.mxu0 0.0
  %1160 = vmatprep.subr.mxu0 0.0
  %1161 = vmatpush1.xpose.msra.mxu0 0.0
  %1162 = vmatprep.subr.mxu0 0.0
  %1163 = vmatpush1.xpose.msra.mxu0 0.0
  %1164 = vmatprep.subr.mxu0 0.0
  %1165 = vmatpush1.xpose.msra.mxu0 0.0
  %1166 = vmatprep.subr.mxu0 0.0
  %1167 = vmatpush1.xpose.msra.mxu0 0.0
  %1168 = vmatprep.subr.mxu0 0.0
  %1169 = vmatpush1.xpose.msra.mxu0 0.0
  %1170 = vmatprep.subr.mxu0 0.0
  %1171 = vmatpush1.xpose.msra.mxu0 0.0
  %1172 = vmatprep.mubr.f32.mxu0 0.0
  %1173 = vmatmul.mubr.f32.gmra.mrb[0].mxu0 %v1103
  %v1174 = vpop.f32.mrb[0].mxu0
  %v1175 = vadd.f32 0.0, %v1174
  %v1176 = vpop.f32.mrb[0].mxu0
  %1177 = vdwg.mxu0
  %1178 = vrot.lane.b32.xlu0 %v275, 112
  %v1179 = vpop.permute.xlu0 %1178
  %1180 = vrot.lane.b32.xlu0 %v369, 112
  %v1181 = vpop.permute.xlu0 %1180
  %v1182 = vsel %vm377, %v1179, 0
  %v1184 = vsel %vm377, %v1181, 0
  %1186 = vmatprep.subr.mxu0 0.0
  %1187 = vmatpush1.xpose.msra.mxu0 %v1184
  %1188 = vmatprep.subr.mxu0 0.0
  %1189 = vmatpush1.xpose.msra.mxu0 0.0
  %1190 = vmatprep.subr.mxu0 0.0
  %1191 = vmatpush1.xpose.msra.mxu0 0.0
  %1192 = vmatprep.subr.mxu0 0.0
  %1193 = vmatpush1.xpose.msra.mxu0 0.0
  %1194 = vmatprep.subr.mxu0 0.0
  %1195 = vmatpush1.xpose.msra.mxu0 0.0
  %1196 = vmatprep.subr.mxu0 0.0
  %1197 = vmatpush1.xpose.msra.mxu0 0.0
  %1198 = vmatprep.subr.mxu0 0.0
  %1199 = vmatpush1.xpose.msra.mxu0 0.0
  %1200 = vmatprep.subr.mxu0 0.0
  %1201 = vmatpush1.xpose.msra.mxu0 0.0
  %1202 = vmatprep.subr.mxu0 0.0
  %1203 = vmatpush1.xpose.msra.mxu0 0.0
  %1204 = vmatprep.subr.mxu0 0.0
  %1205 = vmatpush1.xpose.msra.mxu0 0.0
  %1206 = vmatprep.subr.mxu0 0.0
  %1207 = vmatpush1.xpose.msra.mxu0 0.0
  %1208 = vmatprep.subr.mxu0 0.0
  %1209 = vmatpush1.xpose.msra.mxu0 0.0
  %1210 = vmatprep.subr.mxu0 0.0
  %1211 = vmatpush1.xpose.msra.mxu0 0.0
  %1212 = vmatprep.subr.mxu0 0.0
  %1213 = vmatpush1.xpose.msra.mxu0 0.0
  %1214 = vmatprep.subr.mxu0 0.0
  %1215 = vmatpush1.xpose.msra.mxu0 0.0
  %1216 = vmatprep.subr.mxu0 0.0
  %1217 = vmatpush1.xpose.msra.mxu0 0.0
  %1218 = vmatprep.subr.mxu0 0.0
  %1219 = vmatpush1.xpose.msra.mxu0 0.0
  %1220 = vmatprep.subr.mxu0 0.0
  %1221 = vmatpush1.xpose.msra.mxu0 0.0
  %1222 = vmatprep.subr.mxu0 0.0
  %1223 = vmatpush1.xpose.msra.mxu0 0.0
  %1224 = vmatprep.subr.mxu0 0.0
  %1225 = vmatpush1.xpose.msra.mxu0 0.0
  %1226 = vmatprep.subr.mxu0 0.0
  %1227 = vmatpush1.xpose.msra.mxu0 0.0
  %1228 = vmatprep.subr.mxu0 0.0
  %1229 = vmatpush1.xpose.msra.mxu0 0.0
  %1230 = vmatprep.subr.mxu0 0.0
  %1231 = vmatpush1.xpose.msra.mxu0 0.0
  %1232 = vmatprep.subr.mxu0 0.0
  %1233 = vmatpush1.xpose.msra.mxu0 0.0
  %1234 = vmatprep.subr.mxu0 0.0
  %1235 = vmatpush1.xpose.msra.mxu0 0.0
  %1236 = vmatprep.subr.mxu0 0.0
  %1237 = vmatpush1.xpose.msra.mxu0 0.0
  %1238 = vmatprep.subr.mxu0 0.0
  %1239 = vmatpush1.xpose.msra.mxu0 0.0
  %1240 = vmatprep.subr.mxu0 0.0
  %1241 = vmatpush1.xpose.msra.mxu0 0.0
  %1242 = vmatprep.subr.mxu0 0.0
  %1243 = vmatpush1.xpose.msra.mxu0 0.0
  %1244 = vmatprep.subr.mxu0 0.0
  %1245 = vmatpush1.xpose.msra.mxu0 0.0
  %1246 = vmatprep.subr.mxu0 0.0
  %1247 = vmatpush1.xpose.msra.mxu0 0.0
  %1248 = vmatprep.subr.mxu0 0.0
  %1249 = vmatpush1.xpose.msra.mxu0 0.0
  %1250 = vmatprep.mubr.f32.mxu0 0.0
  %1251 = vmatmul.mubr.f32.gmra.mrb[0].mxu0 %v1182
  %v1252 = vpop.f32.mrb[0].mxu0
  %v1253 = vadd.f32 0.0, %v1252
  %v1254 = vpop.f32.mrb[0].mxu0
  %1255 = vdwg.mxu0
  %1256 = vrot.lane.b32.xlu0 %v280, 112
  %v1257 = vpop.permute.xlu0 %1256
  %1258 = vrot.lane.b32.xlu0 %v374, 112
  %v1259 = vpop.permute.xlu0 %1258
  %v1260 = vsel %vm377, %v1257, 0
  %v1262 = vsel %vm377, %v1259, 0
  %1264 = vmatprep.subr.mxu0 0.0
  %1265 = vmatpush1.xpose.msra.mxu0 %v1262
  %1266 = vmatprep.subr.mxu0 0.0
  %1267 = vmatpush1.xpose.msra.mxu0 0.0
  %1268 = vmatprep.subr.mxu0 0.0
  %1269 = vmatpush1.xpose.msra.mxu0 0.0
  %1270 = vmatprep.subr.mxu0 0.0
  %1271 = vmatpush1.xpose.msra.mxu0 0.0
  %1272 = vmatprep.subr.mxu0 0.0
  %1273 = vmatpush1.xpose.msra.mxu0 0.0
  %1274 = vmatprep.subr.mxu0 0.0
  %1275 = vmatpush1.xpose.msra.mxu0 0.0
  %1276 = vmatprep.subr.mxu0 0.0
  %1277 = vmatpush1.xpose.msra.mxu0 0.0
  %1278 = vmatprep.subr.mxu0 0.0
  %1279 = vmatpush1.xpose.msra.mxu0 0.0
  %1280 = vmatprep.subr.mxu0 0.0
  %1281 = vmatpush1.xpose.msra.mxu0 0.0
  %1282 = vmatprep.subr.mxu0 0.0
  %1283 = vmatpush1.xpose.msra.mxu0 0.0
  %1284 = vmatprep.subr.mxu0 0.0
  %1285 = vmatpush1.xpose.msra.mxu0 0.0
  %1286 = vmatprep.subr.mxu0 0.0
  %1287 = vmatpush1.xpose.msra.mxu0 0.0
  %1288 = vmatprep.subr.mxu0 0.0
  %1289 = vmatpush1.xpose.msra.mxu0 0.0
  %1290 = vmatprep.subr.mxu0 0.0
  %1291 = vmatpush1.xpose.msra.mxu0 0.0
  %1292 = vmatprep.subr.mxu0 0.0
  %1293 = vmatpush1.xpose.msra.mxu0 0.0
  %1294 = vmatprep.subr.mxu0 0.0
  %1295 = vmatpush1.xpose.msra.mxu0 0.0
  %1296 = vmatprep.subr.mxu0 0.0
  %1297 = vmatpush1.xpose.msra.mxu0 0.0
  %1298 = vmatprep.subr.mxu0 0.0
  %1299 = vmatpush1.xpose.msra.mxu0 0.0
  %1300 = vmatprep.subr.mxu0 0.0
  %1301 = vmatpush1.xpose.msra.mxu0 0.0
  %1302 = vmatprep.subr.mxu0 0.0
  %1303 = vmatpush1.xpose.msra.mxu0 0.0
  %1304 = vmatprep.subr.mxu0 0.0
  %1305 = vmatpush1.xpose.msra.mxu0 0.0
  %1306 = vmatprep.subr.mxu0 0.0
  %1307 = vmatpush1.xpose.msra.mxu0 0.0
  %1308 = vmatprep.subr.mxu0 0.0
  %1309 = vmatpush1.xpose.msra.mxu0 0.0
  %1310 = vmatprep.subr.mxu0 0.0
  %1311 = vmatpush1.xpose.msra.mxu0 0.0
  %1312 = vmatprep.subr.mxu0 0.0
  %1313 = vmatpush1.xpose.msra.mxu0 0.0
  %1314 = vmatprep.subr.mxu0 0.0
  %1315 = vmatpush1.xpose.msra.mxu0 0.0
  %1316 = vmatprep.subr.mxu0 0.0
  %1317 = vmatpush1.xpose.msra.mxu0 0.0
  %1318 = vmatprep.subr.mxu0 0.0
  %1319 = vmatpush1.xpose.msra.mxu0 0.0
  %1320 = vmatprep.subr.mxu0 0.0
  %1321 = vmatpush1.xpose.msra.mxu0 0.0
  %1322 = vmatprep.subr.mxu0 0.0
  %1323 = vmatpush1.xpose.msra.mxu0 0.0
  %1324 = vmatprep.subr.mxu0 0.0
  %1325 = vmatpush1.xpose.msra.mxu0 0.0
  %1326 = vmatprep.subr.mxu0 0.0
  %1327 = vmatpush1.xpose.msra.mxu0 0.0
  %1328 = vmatprep.mubr.f32.mxu0 0.0
  %1329 = vmatmul.mubr.f32.gmra.mrb[0].mxu0 %v1260
  %v1330 = vpop.f32.mrb[0].mxu0
  %v1331 = vadd.f32 0.0, %v1330
  %v1332 = vpop.f32.mrb[0].mxu0
  %1333 = vdwg.mxu0
  %v1334 = vmul.f32 %v1253, 0.35355338
  %v1335 = vmul.f32 %v1331, 0.35355338
  %v1336 = vsel %vm377, %v1334, -inf
  %1337 = vmax.xlane.f32.xlu0 %v1336
  %v1338 = vpop.xlane.xlu0 %1337
  %v1339 = vsel %vm377, %v1335, -inf
  %1340 = vmax.xlane.f32.xlu0 %v1339
  %v1341 = vpop.xlane.xlu0 %1340
  %v1342 = vsub.f32 %v1334, %v1338
  %v1343 = vsub.f32 %v1335, %v1341
  %v1344 = vmul.f32 %v1342, 1.442695
  %v1345 = vpow.pop %v1344
  %v1346 = vmul.f32 %v1343, 1.442695
  %v1347 = vpow.pop %v1346
  %v1348 = vsel %vm377, %v1345, 0.0
  %1349 = vadd.xlane.f32.xlu0 %v1348
  %v1350 = vpop.xlane.xlu0 %1349
  %v1351 = vsel %vm377, %v1347, 0.0
  %1352 = vadd.xlane.f32.xlu0 %v1351
  %v1353 = vpop.xlane.xlu0 %1352
  %v1354 = vrcp.pop %v1350
  %v1355 = vrcp.pop %v1353
  %v1356 = vmul.f32 %v1345, %v1354
  %v1357 = vmul.f32 %v1347, %v1355
  %1358 = vrot.lane.b32.xlu0 %v369, 80
  %v1359 = vpop.permute.xlu0 %1358
  %1361 = vxpose.xlu0.b32.start [1/16] %v1359, 128
  %1362 = vxpose.xlu0.b32.cont [2/16] 0.0, 128
  %1363 = vxpose.xlu0.b32.cont [3/16] 0.0, 128
  %1364 = vxpose.xlu0.b32.cont [4/16] 0.0, 128
  %1365 = vxpose.xlu0.b32.cont [5/16] 0.0, 128
  %1366 = vxpose.xlu0.b32.cont [6/16] 0.0, 128
  %1367 = vxpose.xlu0.b32.cont [7/16] 0.0, 128
  %1368 = vxpose.xlu0.b32.cont [8/16] 0.0, 128
  %1369 = vxpose.xlu0.b32.cont [9/16] 0.0, 128
  %1370 = vxpose.xlu0.b32.cont [10/16] 0.0, 128
  %1371 = vxpose.xlu0.b32.cont [11/16] 0.0, 128
  %1372 = vxpose.xlu0.b32.cont [12/16] 0.0, 128
  %1373 = vxpose.xlu0.b32.cont [13/16] 0.0, 128
  %1374 = vxpose.xlu0.b32.cont [14/16] 0.0, 128
  %1375 = vxpose.xlu0.b32.cont [15/16] 0.0, 128
  %1376 = vxpose.xlu0.b32.end [16/16] 0.0, 128
  %v1377 = vpop.trf.xlu0
  %v1378 = vpop.trf.xlu0
  %v1379 = vpop.trf.xlu0
  %v1380 = vpop.trf.xlu0
  %v1381 = vpop.trf.xlu0
  %v1382 = vpop.trf.xlu0
  %v1383 = vpop.trf.xlu0
  %v1384 = vpop.trf.xlu0
  %v1385 = vpop.trf.xlu0
  %v1386 = vpop.trf.xlu0
  %v1387 = vpop.trf.xlu0
  %v1388 = vpop.trf.xlu0
  %v1389 = vpop.trf.xlu0
  %v1390 = vpop.trf.xlu0
  %v1391 = vpop.trf.xlu0
  %v1392 = vpop.trf.xlu0
  %v1394 = vsel %vm377, %v1377, 0
  %v1397 = vsel %vm377, %v1356, 0
  %1399 = vmatprep.subr.mxu0 0.0
  %1400 = vmatpush1.xpose.msra.mxu0 %v1397
  %1401 = vmatprep.subr.mxu0 0.0
  %1402 = vmatpush1.xpose.msra.mxu0 0.0
  %1403 = vmatprep.subr.mxu0 0.0
  %1404 = vmatpush1.xpose.msra.mxu0 0.0
  %1405 = vmatprep.subr.mxu0 0.0
  %1406 = vmatpush1.xpose.msra.mxu0 0.0
  %1407 = vmatprep.subr.mxu0 0.0
  %1408 = vmatpush1.xpose.msra.mxu0 0.0
  %1409 = vmatprep.subr.mxu0 0.0
  %1410 = vmatpush1.xpose.msra.mxu0 0.0
  %1411 = vmatprep.subr.mxu0 0.0
  %1412 = vmatpush1.xpose.msra.mxu0 0.0
  %1413 = vmatprep.subr.mxu0 0.0
  %1414 = vmatpush1.xpose.msra.mxu0 0.0
  %1415 = vmatprep.subr.mxu0 0.0
  %1416 = vmatpush1.xpose.msra.mxu0 0.0
  %1417 = vmatprep.subr.mxu0 0.0
  %1418 = vmatpush1.xpose.msra.mxu0 0.0
  %1419 = vmatprep.subr.mxu0 0.0
  %1420 = vmatpush1.xpose.msra.mxu0 0.0
  %1421 = vmatprep.subr.mxu0 0.0
  %1422 = vmatpush1.xpose.msra.mxu0 0.0
  %1423 = vmatprep.subr.mxu0 0.0
  %1424 = vmatpush1.xpose.msra.mxu0 0.0
  %1425 = vmatprep.subr.mxu0 0.0
  %1426 = vmatpush1.xpose.msra.mxu0 0.0
  %1427 = vmatprep.subr.mxu0 0.0
  %1428 = vmatpush1.xpose.msra.mxu0 0.0
  %1429 = vmatprep.subr.mxu0 0.0
  %1430 = vmatpush1.xpose.msra.mxu0 0.0
  %1431 = vmatprep.subr.mxu0 0.0
  %1432 = vmatpush1.xpose.msra.mxu0 0.0
  %1433 = vmatprep.subr.mxu0 0.0
  %1434 = vmatpush1.xpose.msra.mxu0 0.0
  %1435 = vmatprep.subr.mxu0 0.0
  %1436 = vmatpush1.xpose.msra.mxu0 0.0
  %1437 = vmatprep.subr.mxu0 0.0
  %1438 = vmatpush1.xpose.msra.mxu0 0.0
  %1439 = vmatprep.subr.mxu0 0.0
  %1440 = vmatpush1.xpose.msra.mxu0 0.0
  %1441 = vmatprep.subr.mxu0 0.0
  %1442 = vmatpush1.xpose.msra.mxu0 0.0
  %1443 = vmatprep.subr.mxu0 0.0
  %1444 = vmatpush1.xpose.msra.mxu0 0.0
  %1445 = vmatprep.subr.mxu0 0.0
  %1446 = vmatpush1.xpose.msra.mxu0 0.0
  %1447 = vmatprep.subr.mxu0 0.0
  %1448 = vmatpush1.xpose.msra.mxu0 0.0
  %1449 = vmatprep.subr.mxu0 0.0
  %1450 = vmatpush1.xpose.msra.mxu0 0.0
  %1451 = vmatprep.subr.mxu0 0.0
  %1452 = vmatpush1.xpose.msra.mxu0 0.0
  %1453 = vmatprep.subr.mxu0 0.0
  %1454 = vmatpush1.xpose.msra.mxu0 0.0
  %1455 = vmatprep.subr.mxu0 0.0
  %1456 = vmatpush1.xpose.msra.mxu0 0.0
  %1457 = vmatprep.subr.mxu0 0.0
  %1458 = vmatpush1.xpose.msra.mxu0 0.0
  %1459 = vmatprep.subr.mxu0 0.0
  %1460 = vmatpush1.xpose.msra.mxu0 0.0
  %1461 = vmatprep.subr.mxu0 0.0
  %1462 = vmatpush1.xpose.msra.mxu0 0.0
  %1463 = vmatprep.mubr.f32.mxu0 0.0
  %1464 = vmatmul.mubr.f32.gmra.mrb[0].mxu0 %v1394
  %v1465 = vpop.f32.mrb[0].mxu0
  %v1466 = vadd.f32 0.0, %v1465
  %v1467 = vpop.f32.mrb[0].mxu0
  %1468 = vdwg.mxu0
  %1469 = vrot.lane.b32.xlu0 %v374, 80
  %v1470 = vpop.permute.xlu0 %1469
  %1472 = vxpose.xlu0.b32.start [1/16] %v1470, 128
  %1473 = vxpose.xlu0.b32.cont [2/16] 0.0, 128
  %1474 = vxpose.xlu0.b32.cont [3/16] 0.0, 128
  %1475 = vxpose.xlu0.b32.cont [4/16] 0.0, 128
  %1476 = vxpose.xlu0.b32.cont [5/16] 0.0, 128
  %1477 = vxpose.xlu0.b32.cont [6/16] 0.0, 128
  %1478 = vxpose.xlu0.b32.cont [7/16] 0.0, 128
  %1479 = vxpose.xlu0.b32.cont [8/16] 0.0, 128
  %1480 = vxpose.xlu0.b32.cont [9/16] 0.0, 128
  %1481 = vxpose.xlu0.b32.cont [10/16] 0.0, 128
  %1482 = vxpose.xlu0.b32.cont [11/16] 0.0, 128
  %1483 = vxpose.xlu0.b32.cont [12/16] 0.0, 128
  %1484 = vxpose.xlu0.b32.cont [13/16] 0.0, 128
  %1485 = vxpose.xlu0.b32.cont [14/16] 0.0, 128
  %1486 = vxpose.xlu0.b32.cont [15/16] 0.0, 128
  %1487 = vxpose.xlu0.b32.end [16/16] 0.0, 128
  %v1488 = vpop.trf.xlu0
  %v1489 = vpop.trf.xlu0
  %v1490 = vpop.trf.xlu0
  %v1491 = vpop.trf.xlu0
  %v1492 = vpop.trf.xlu0
  %v1493 = vpop.trf.xlu0
  %v1494 = vpop.trf.xlu0
  %v1495 = vpop.trf.xlu0
  %v1496 = vpop.trf.xlu0
  %v1497 = vpop.trf.xlu0
  %v1498 = vpop.trf.xlu0
  %v1499 = vpop.trf.xlu0
  %v1500 = vpop.trf.xlu0
  %v1501 = vpop.trf.xlu0
  %v1502 = vpop.trf.xlu0
  %v1503 = vpop.trf.xlu0
  %v1505 = vsel %vm377, %v1488, 0
  %v1508 = vsel %vm377, %v1357, 0
  %1510 = vmatprep.subr.mxu0 0.0
  %1511 = vmatpush1.xpose.msra.mxu0 %v1508
  %1512 = vmatprep.subr.mxu0 0.0
  %1513 = vmatpush1.xpose.msra.mxu0 0.0
  %1514 = vmatprep.subr.mxu0 0.0
  %1515 = vmatpush1.xpose.msra.mxu0 0.0
  %1516 = vmatprep.subr.mxu0 0.0
  %1517 = vmatpush1.xpose.msra.mxu0 0.0
  %1518 = vmatprep.subr.mxu0 0.0
  %1519 = vmatpush1.xpose.msra.mxu0 0.0
  %1520 = vmatprep.subr.mxu0 0.0
  %1521 = vmatpush1.xpose.msra.mxu0 0.0
  %1522 = vmatprep.subr.mxu0 0.0
  %1523 = vmatpush1.xpose.msra.mxu0 0.0
  %1524 = vmatprep.subr.mxu0 0.0
  %1525 = vmatpush1.xpose.msra.mxu0 0.0
  %1526 = vmatprep.subr.mxu0 0.0
  %1527 = vmatpush1.xpose.msra.mxu0 0.0
  %1528 = vmatprep.subr.mxu0 0.0
  %1529 = vmatpush1.xpose.msra.mxu0 0.0
  %1530 = vmatprep.subr.mxu0 0.0
  %1531 = vmatpush1.xpose.msra.mxu0 0.0
  %1532 = vmatprep.subr.mxu0 0.0
  %1533 = vmatpush1.xpose.msra.mxu0 0.0
  %1534 = vmatprep.subr.mxu0 0.0
  %1535 = vmatpush1.xpose.msra.mxu0 0.0
  %1536 = vmatprep.subr.mxu0 0.0
  %1537 = vmatpush1.xpose.msra.mxu0 0.0
  %1538 = vmatprep.subr.mxu0 0.0
  %1539 = vmatpush1.xpose.msra.mxu0 0.0
  %1540 = vmatprep.subr.mxu0 0.0
  %1541 = vmatpush1.xpose.msra.mxu0 0.0
  %1542 = vmatprep.subr.mxu0 0.0
  %1543 = vmatpush1.xpose.msra.mxu0 0.0
  %1544 = vmatprep.subr.mxu0 0.0
  %1545 = vmatpush1.xpose.msra.mxu0 0.0
  %1546 = vmatprep.subr.mxu0 0.0
  %1547 = vmatpush1.xpose.msra.mxu0 0.0
  %1548 = vmatprep.subr.mxu0 0.0
  %1549 = vmatpush1.xpose.msra.mxu0 0.0
  %1550 = vmatprep.subr.mxu0 0.0
  %1551 = vmatpush1.xpose.msra.mxu0 0.0
  %1552 = vmatprep.subr.mxu0 0.0
  %1553 = vmatpush1.xpose.msra.mxu0 0.0
  %1554 = vmatprep.subr.mxu0 0.0
  %1555 = vmatpush1.xpose.msra.mxu0 0.0
  %1556 = vmatprep.subr.mxu0 0.0
  %1557 = vmatpush1.xpose.msra.mxu0 0.0
  %1558 = vmatprep.subr.mxu0 0.0
  %1559 = vmatpush1.xpose.msra.mxu0 0.0
  %1560 = vmatprep.subr.mxu0 0.0
  %1561 = vmatpush1.xpose.msra.mxu0 0.0
  %1562 = vmatprep.subr.mxu0 0.0
  %1563 = vmatpush1.xpose.msra.mxu0 0.0
  %1564 = vmatprep.subr.mxu0 0.0
  %1565 = vmatpush1.xpose.msra.mxu0 0.0
  %1566 = vmatprep.subr.mxu0 0.0
  %1567 = vmatpush1.xpose.msra.mxu0 0.0
  %1568 = vmatprep.subr.mxu0 0.0
  %1569 = vmatpush1.xpose.msra.mxu0 0.0
  %1570 = vmatprep.subr.mxu0 0.0
  %1571 = vmatpush1.xpose.msra.mxu0 0.0
  %1572 = vmatprep.subr.mxu0 0.0
  %1573 = vmatpush1.xpose.msra.mxu0 0.0
  %1574 = vmatprep.mubr.f32.mxu0 0.0
  %1575 = vmatmul.mubr.f32.gmra.mrb[0].mxu0 %v1505
  %v1576 = vpop.f32.mrb[0].mxu0
  %v1577 = vadd.f32 0.0, %v1576
  %v1578 = vpop.f32.mrb[0].mxu0
  %1579 = vdwg.mxu0
  %1580 = vrot.lane.b32.xlu0 %v275, 104
  %v1581 = vpop.permute.xlu0 %1580
  %1582 = vrot.lane.b32.xlu0 %v369, 104
  %v1583 = vpop.permute.xlu0 %1582
  %v1584 = vsel %vm377, %v1581, 0
  %v1586 = vsel %vm377, %v1583, 0
  %1588 = vmatprep.subr.mxu0 0.0
  %1589 = vmatpush1.xpose.msra.mxu0 %v1586
  %1590 = vmatprep.subr.mxu0 0.0
  %1591 = vmatpush1.xpose.msra.mxu0 0.0
  %1592 = vmatprep.subr.mxu0 0.0
  %1593 = vmatpush1.xpose.msra.mxu0 0.0
  %1594 = vmatprep.subr.mxu0 0.0
  %1595 = vmatpush1.xpose.msra.mxu0 0.0
  %1596 = vmatprep.subr.mxu0 0.0
  %1597 = vmatpush1.xpose.msra.mxu0 0.0
  %1598 = vmatprep.subr.mxu0 0.0
  %1599 = vmatpush1.xpose.msra.mxu0 0.0
  %1600 = vmatprep.subr.mxu0 0.0
  %1601 = vmatpush1.xpose.msra.mxu0 0.0
  %1602 = vmatprep.subr.mxu0 0.0
  %1603 = vmatpush1.xpose.msra.mxu0 0.0
  %1604 = vmatprep.subr.mxu0 0.0
  %1605 = vmatpush1.xpose.msra.mxu0 0.0
  %1606 = vmatprep.subr.mxu0 0.0
  %1607 = vmatpush1.xpose.msra.mxu0 0.0
  %1608 = vmatprep.subr.mxu0 0.0
  %1609 = vmatpush1.xpose.msra.mxu0 0.0
  %1610 = vmatprep.subr.mxu0 0.0
  %1611 = vmatpush1.xpose.msra.mxu0 0.0
  %1612 = vmatprep.subr.mxu0 0.0
  %1613 = vmatpush1.xpose.msra.mxu0 0.0
  %1614 = vmatprep.subr.mxu0 0.0
  %1615 = vmatpush1.xpose.msra.mxu0 0.0
  %1616 = vmatprep.subr.mxu0 0.0
  %1617 = vmatpush1.xpose.msra.mxu0 0.0
  %1618 = vmatprep.subr.mxu0 0.0
  %1619 = vmatpush1.xpose.msra.mxu0 0.0
  %1620 = vmatprep.subr.mxu0 0.0
  %1621 = vmatpush1.xpose.msra.mxu0 0.0
  %1622 = vmatprep.subr.mxu0 0.0
  %1623 = vmatpush1.xpose.msra.mxu0 0.0
  %1624 = vmatprep.subr.mxu0 0.0
  %1625 = vmatpush1.xpose.msra.mxu0 0.0
  %1626 = vmatprep.subr.mxu0 0.0
  %1627 = vmatpush1.xpose.msra.mxu0 0.0
  %1628 = vmatprep.subr.mxu0 0.0
  %1629 = vmatpush1.xpose.msra.mxu0 0.0
  %1630 = vmatprep.subr.mxu0 0.0
  %1631 = vmatpush1.xpose.msra.mxu0 0.0
  %1632 = vmatprep.subr.mxu0 0.0
  %1633 = vmatpush1.xpose.msra.mxu0 0.0
  %1634 = vmatprep.subr.mxu0 0.0
  %1635 = vmatpush1.xpose.msra.mxu0 0.0
  %1636 = vmatprep.subr.mxu0 0.0
  %1637 = vmatpush1.xpose.msra.mxu0 0.0
  %1638 = vmatprep.subr.mxu0 0.0
  %1639 = vmatpush1.xpose.msra.mxu0 0.0
  %1640 = vmatprep.subr.mxu0 0.0
  %1641 = vmatpush1.xpose.msra.mxu0 0.0
  %1642 = vmatprep.subr.mxu0 0.0
  %1643 = vmatpush1.xpose.msra.mxu0 0.0
  %1644 = vmatprep.subr.mxu0 0.0
  %1645 = vmatpush1.xpose.msra.mxu0 0.0
  %1646 = vmatprep.subr.mxu0 0.0
  %1647 = vmatpush1.xpose.msra.mxu0 0.0
  %1648 = vmatprep.subr.mxu0 0.0
  %1649 = vmatpush1.xpose.msra.mxu0 0.0
  %1650 = vmatprep.subr.mxu0 0.0
  %1651 = vmatpush1.xpose.msra.mxu0 0.0
  %1652 = vmatprep.mubr.f32.mxu0 0.0
  %1653 = vmatmul.mubr.f32.gmra.mrb[0].mxu0 %v1584
  %v1654 = vpop.f32.mrb[0].mxu0
  %v1655 = vadd.f32 0.0, %v1654
  %v1656 = vpop.f32.mrb[0].mxu0
  %1657 = vdwg.mxu0
  %1658 = vrot.lane.b32.xlu0 %v280, 104
  %v1659 = vpop.permute.xlu0 %1658
  %1660 = vrot.lane.b32.xlu0 %v374, 104
  %v1661 = vpop.permute.xlu0 %1660
  %v1662 = vsel %vm377, %v1659, 0
  %v1664 = vsel %vm377, %v1661, 0
  %1666 = vmatprep.subr.mxu0 0.0
  %1667 = vmatpush1.xpose.msra.mxu0 %v1664
  %1668 = vmatprep.subr.mxu0 0.0
  %1669 = vmatpush1.xpose.msra.mxu0 0.0
  %1670 = vmatprep.subr.mxu0 0.0
  %1671 = vmatpush1.xpose.msra.mxu0 0.0
  %1672 = vmatprep.subr.mxu0 0.0
  %1673 = vmatpush1.xpose.msra.mxu0 0.0
  %1674 = vmatprep.subr.mxu0 0.0
  %1675 = vmatpush1.xpose.msra.mxu0 0.0
  %1676 = vmatprep.subr.mxu0 0.0
  %1677 = vmatpush1.xpose.msra.mxu0 0.0
  %1678 = vmatprep.subr.mxu0 0.0
  %1679 = vmatpush1.xpose.msra.mxu0 0.0
  %1680 = vmatprep.subr.mxu0 0.0
  %1681 = vmatpush1.xpose.msra.mxu0 0.0
  %1682 = vmatprep.subr.mxu0 0.0
  %1683 = vmatpush1.xpose.msra.mxu0 0.0
  %1684 = vmatprep.subr.mxu0 0.0
  %1685 = vmatpush1.xpose.msra.mxu0 0.0
  %1686 = vmatprep.subr.mxu0 0.0
  %1687 = vmatpush1.xpose.msra.mxu0 0.0
  %1688 = vmatprep.subr.mxu0 0.0
  %1689 = vmatpush1.xpose.msra.mxu0 0.0
  %1690 = vmatprep.subr.mxu0 0.0
  %1691 = vmatpush1.xpose.msra.mxu0 0.0
  %1692 = vmatprep.subr.mxu0 0.0
  %1693 = vmatpush1.xpose.msra.mxu0 0.0
  %1694 = vmatprep.subr.mxu0 0.0
  %1695 = vmatpush1.xpose.msra.mxu0 0.0
  %1696 = vmatprep.subr.mxu0 0.0
  %1697 = vmatpush1.xpose.msra.mxu0 0.0
  %1698 = vmatprep.subr.mxu0 0.0
  %1699 = vmatpush1.xpose.msra.mxu0 0.0
  %1700 = vmatprep.subr.mxu0 0.0
  %1701 = vmatpush1.xpose.msra.mxu0 0.0
  %1702 = vmatprep.subr.mxu0 0.0
  %1703 = vmatpush1.xpose.msra.mxu0 0.0
  %1704 = vmatprep.subr.mxu0 0.0
  %1705 = vmatpush1.xpose.msra.mxu0 0.0
  %1706 = vmatprep.subr.mxu0 0.0
  %1707 = vmatpush1.xpose.msra.mxu0 0.0
  %1708 = vmatprep.subr.mxu0 0.0
  %1709 = vmatpush1.xpose.msra.mxu0 0.0
  %1710 = vmatprep.subr.mxu0 0.0
  %1711 = vmatpush1.xpose.msra.mxu0 0.0
  %1712 = vmatprep.subr.mxu0 0.0
  %1713 = vmatpush1.xpose.msra.mxu0 0.0
  %1714 = vmatprep.subr.mxu0 0.0
  %1715 = vmatpush1.xpose.msra.mxu0 0.0
  %1716 = vmatprep.subr.mxu0 0.0
  %1717 = vmatpush1.xpose.msra.mxu0 0.0
  %1718 = vmatprep.subr.mxu0 0.0
  %1719 = vmatpush1.xpose.msra.mxu0 0.0
  %1720 = vmatprep.subr.mxu0 0.0
  %1721 = vmatpush1.xpose.msra.mxu0 0.0
  %1722 = vmatprep.subr.mxu0 0.0
  %1723 = vmatpush1.xpose.msra.mxu0 0.0
  %1724 = vmatprep.subr.mxu0 0.0
  %1725 = vmatpush1.xpose.msra.mxu0 0.0
  %1726 = vmatprep.subr.mxu0 0.0
  %1727 = vmatpush1.xpose.msra.mxu0 0.0
  %1728 = vmatprep.subr.mxu0 0.0
  %1729 = vmatpush1.xpose.msra.mxu0 0.0
  %1730 = vmatprep.mubr.f32.mxu0 0.0
  %1731 = vmatmul.mubr.f32.gmra.mrb[0].mxu0 %v1662
  %v1732 = vpop.f32.mrb[0].mxu0
  %v1733 = vadd.f32 0.0, %v1732
  %v1734 = vpop.f32.mrb[0].mxu0
  %1735 = vdwg.mxu0
  %v1736 = vmul.f32 %v1655, 0.35355338
  %v1737 = vmul.f32 %v1733, 0.35355338
  %v1738 = vsel %vm377, %v1736, -inf
  %1739 = vmax.xlane.f32.xlu0 %v1738
  %v1740 = vpop.xlane.xlu0 %1739
  %v1741 = vsel %vm377, %v1737, -inf
  %1742 = vmax.xlane.f32.xlu0 %v1741
  %v1743 = vpop.xlane.xlu0 %1742
  %v1744 = vsub.f32 %v1736, %v1740
  %v1745 = vsub.f32 %v1737, %v1743
  %v1746 = vmul.f32 %v1744, 1.442695
  %v1747 = vpow.pop %v1746
  %v1748 = vmul.f32 %v1745, 1.442695
  %v1749 = vpow.pop %v1748
  %v1750 = vsel %vm377, %v1747, 0.0
  %1751 = vadd.xlane.f32.xlu0 %v1750
  %v1752 = vpop.xlane.xlu0 %1751
  %v1753 = vsel %vm377, %v1749, 0.0
  %1754 = vadd.xlane.f32.xlu0 %v1753
  %v1755 = vpop.xlane.xlu0 %1754
  %v1756 = vrcp.pop %v1752
  %v1757 = vrcp.pop %v1755
  %v1758 = vmul.f32 %v1747, %v1756
  %v1759 = vmul.f32 %v1749, %v1757
  %1760 = vrot.lane.b32.xlu0 %v369, 72
  %v1761 = vpop.permute.xlu0 %1760
  %1763 = vxpose.xlu0.b32.start [1/16] %v1761, 128
  %1764 = vxpose.xlu0.b32.cont [2/16] 0.0, 128
  %1765 = vxpose.xlu0.b32.cont [3/16] 0.0, 128
  %1766 = vxpose.xlu0.b32.cont [4/16] 0.0, 128
  %1767 = vxpose.xlu0.b32.cont [5/16] 0.0, 128
  %1768 = vxpose.xlu0.b32.cont [6/16] 0.0, 128
  %1769 = vxpose.xlu0.b32.cont [7/16] 0.0, 128
  %1770 = vxpose.xlu0.b32.cont [8/16] 0.0, 128
  %1771 = vxpose.xlu0.b32.cont [9/16] 0.0, 128
  %1772 = vxpose.xlu0.b32.cont [10/16] 0.0, 128
  %1773 = vxpose.xlu0.b32.cont [11/16] 0.0, 128
  %1774 = vxpose.xlu0.b32.cont [12/16] 0.0, 128
  %1775 = vxpose.xlu0.b32.cont [13/16] 0.0, 128
  %1776 = vxpose.xlu0.b32.cont [14/16] 0.0, 128
  %1777 = vxpose.xlu0.b32.cont [15/16] 0.0, 128
  %1778 = vxpose.xlu0.b32.end [16/16] 0.0, 128
  %v1779 = vpop.trf.xlu0
  %v1780 = vpop.trf.xlu0
  %v1781 = vpop.trf.xlu0
  %v1782 = vpop.trf.xlu0
  %v1783 = vpop.trf.xlu0
  %v1784 = vpop.trf.xlu0
  %v1785 = vpop.trf.xlu0
  %v1786 = vpop.trf.xlu0
  %v1787 = vpop.trf.xlu0
  %v1788 = vpop.trf.xlu0
  %v1789 = vpop.trf.xlu0
  %v1790 = vpop.trf.xlu0
  %v1791 = vpop.trf.xlu0
  %v1792 = vpop.trf.xlu0
  %v1793 = vpop.trf.xlu0
  %v1794 = vpop.trf.xlu0
  %v1796 = vsel %vm377, %v1779, 0
  %v1799 = vsel %vm377, %v1758, 0
  %1801 = vmatprep.subr.mxu0 0.0
  %1802 = vmatpush1.xpose.msra.mxu0 %v1799
  %1803 = vmatprep.subr.mxu0 0.0
  %1804 = vmatpush1.xpose.msra.mxu0 0.0
  %1805 = vmatprep.subr.mxu0 0.0
  %1806 = vmatpush1.xpose.msra.mxu0 0.0
  %1807 = vmatprep.subr.mxu0 0.0
  %1808 = vmatpush1.xpose.msra.mxu0 0.0
  %1809 = vmatprep.subr.mxu0 0.0
  %1810 = vmatpush1.xpose.msra.mxu0 0.0
  %1811 = vmatprep.subr.mxu0 0.0
  %1812 = vmatpush1.xpose.msra.mxu0 0.0
  %1813 = vmatprep.subr.mxu0 0.0
  %1814 = vmatpush1.xpose.msra.mxu0 0.0
  %1815 = vmatprep.subr.mxu0 0.0
  %1816 = vmatpush1.xpose.msra.mxu0 0.0
  %1817 = vmatprep.subr.mxu0 0.0
  %1818 = vmatpush1.xpose.msra.mxu0 0.0
  %1819 = vmatprep.subr.mxu0 0.0
  %1820 = vmatpush1.xpose.msra.mxu0 0.0
  %1821 = vmatprep.subr.mxu0 0.0
  %1822 = vmatpush1.xpose.msra.mxu0 0.0
  %1823 = vmatprep.subr.mxu0 0.0
  %1824 = vmatpush1.xpose.msra.mxu0 0.0
  %1825 = vmatprep.subr.mxu0 0.0
  %1826 = vmatpush1.xpose.msra.mxu0 0.0
  %1827 = vmatprep.subr.mxu0 0.0
  %1828 = vmatpush1.xpose.msra.mxu0 0.0
  %1829 = vmatprep.subr.mxu0 0.0
  %1830 = vmatpush1.xpose.msra.mxu0 0.0
  %1831 = vmatprep.subr.mxu0 0.0
  %1832 = vmatpush1.xpose.msra.mxu0 0.0
  %1833 = vmatprep.subr.mxu0 0.0
  %1834 = vmatpush1.xpose.msra.mxu0 0.0
  %1835 = vmatprep.subr.mxu0 0.0
  %1836 = vmatpush1.xpose.msra.mxu0 0.0
  %1837 = vmatprep.subr.mxu0 0.0
  %1838 = vmatpush1.xpose.msra.mxu0 0.0
  %1839 = vmatprep.subr.mxu0 0.0
  %1840 = vmatpush1.xpose.msra.mxu0 0.0
  %1841 = vmatprep.subr.mxu0 0.0
  %1842 = vmatpush1.xpose.msra.mxu0 0.0
  %1843 = vmatprep.subr.mxu0 0.0
  %1844 = vmatpush1.xpose.msra.mxu0 0.0
  %1845 = vmatprep.subr.mxu0 0.0
  %1846 = vmatpush1.xpose.msra.mxu0 0.0
  %1847 = vmatprep.subr.mxu0 0.0
  %1848 = vmatpush1.xpose.msra.mxu0 0.0
  %1849 = vmatprep.subr.mxu0 0.0
  %1850 = vmatpush1.xpose.msra.mxu0 0.0
  %1851 = vmatprep.subr.mxu0 0.0
  %1852 = vmatpush1.xpose.msra.mxu0 0.0
  %1853 = vmatprep.subr.mxu0 0.0
  %1854 = vmatpush1.xpose.msra.mxu0 0.0
  %1855 = vmatprep.subr.mxu0 0.0
  %1856 = vmatpush1.xpose.msra.mxu0 0.0
  %1857 = vmatprep.subr.mxu0 0.0
  %1858 = vmatpush1.xpose.msra.mxu0 0.0
  %1859 = vmatprep.subr.mxu0 0.0
  %1860 = vmatpush1.xpose.msra.mxu0 0.0
  %1861 = vmatprep.subr.mxu0 0.0
  %1862 = vmatpush1.xpose.msra.mxu0 0.0
  %1863 = vmatprep.subr.mxu0 0.0
  %1864 = vmatpush1.xpose.msra.mxu0 0.0
  %1865 = vmatprep.mubr.f32.mxu0 0.0
  %1866 = vmatmul.mubr.f32.gmra.mrb[0].mxu0 %v1796
  %v1867 = vpop.f32.mrb[0].mxu0
  %v1868 = vadd.f32 0.0, %v1867
  %v1869 = vpop.f32.mrb[0].mxu0
  %1870 = vdwg.mxu0
  %1871 = vrot.lane.b32.xlu0 %v374, 72
  %v1872 = vpop.permute.xlu0 %1871
  %1874 = vxpose.xlu0.b32.start [1/16] %v1872, 128
  %1875 = vxpose.xlu0.b32.cont [2/16] 0.0, 128
  %1876 = vxpose.xlu0.b32.cont [3/16] 0.0, 128
  %1877 = vxpose.xlu0.b32.cont [4/16] 0.0, 128
  %1878 = vxpose.xlu0.b32.cont [5/16] 0.0, 128
  %1879 = vxpose.xlu0.b32.cont [6/16] 0.0, 128
  %1880 = vxpose.xlu0.b32.cont [7/16] 0.0, 128
  %1881 = vxpose.xlu0.b32.cont [8/16] 0.0, 128
  %1882 = vxpose.xlu0.b32.cont [9/16] 0.0, 128
  %1883 = vxpose.xlu0.b32.cont [10/16] 0.0, 128
  %1884 = vxpose.xlu0.b32.cont [11/16] 0.0, 128
  %1885 = vxpose.xlu0.b32.cont [12/16] 0.0, 128
  %1886 = vxpose.xlu0.b32.cont [13/16] 0.0, 128
  %1887 = vxpose.xlu0.b32.cont [14/16] 0.0, 128
  %1888 = vxpose.xlu0.b32.cont [15/16] 0.0, 128
  %1889 = vxpose.xlu0.b32.end [16/16] 0.0, 128
  %v1890 = vpop.trf.xlu0
  %v1891 = vpop.trf.xlu0
  %v1892 = vpop.trf.xlu0
  %v1893 = vpop.trf.xlu0
  %v1894 = vpop.trf.xlu0
  %v1895 = vpop.trf.xlu0
  %v1896 = vpop.trf.xlu0
  %v1897 = vpop.trf.xlu0
  %v1898 = vpop.trf.xlu0
  %v1899 = vpop.trf.xlu0
  %v1900 = vpop.trf.xlu0
  %v1901 = vpop.trf.xlu0
  %v1902 = vpop.trf.xlu0
  %v1903 = vpop.trf.xlu0
  %v1904 = vpop.trf.xlu0
  %v1905 = vpop.trf.xlu0
  %v1907 = vsel %vm377, %v1890, 0
  %v1910 = vsel %vm377, %v1759, 0
  %1912 = vmatprep.subr.mxu0 0.0
  %1913 = vmatpush1.xpose.msra.mxu0 %v1910
  %1914 = vmatprep.subr.mxu0 0.0
  %1915 = vmatpush1.xpose.msra.mxu0 0.0
  %1916 = vmatprep.subr.mxu0 0.0
  %1917 = vmatpush1.xpose.msra.mxu0 0.0
  %1918 = vmatprep.subr.mxu0 0.0
  %1919 = vmatpush1.xpose.msra.mxu0 0.0
  %1920 = vmatprep.subr.mxu0 0.0
  %1921 = vmatpush1.xpose.msra.mxu0 0.0
  %1922 = vmatprep.subr.mxu0 0.0
  %1923 = vmatpush1.xpose.msra.mxu0 0.0
  %1924 = vmatprep.subr.mxu0 0.0
  %1925 = vmatpush1.xpose.msra.mxu0 0.0
  %1926 = vmatprep.subr.mxu0 0.0
  %1927 = vmatpush1.xpose.msra.mxu0 0.0
  %1928 = vmatprep.subr.mxu0 0.0
  %1929 = vmatpush1.xpose.msra.mxu0 0.0
  %1930 = vmatprep.subr.mxu0 0.0
  %1931 = vmatpush1.xpose.msra.mxu0 0.0
  %1932 = vmatprep.subr.mxu0 0.0
  %1933 = vmatpush1.xpose.msra.mxu0 0.0
  %1934 = vmatprep.subr.mxu0 0.0
  %1935 = vmatpush1.xpose.msra.mxu0 0.0
  %1936 = vmatprep.subr.mxu0 0.0
  %1937 = vmatpush1.xpose.msra.mxu0 0.0
  %1938 = vmatprep.subr.mxu0 0.0
  %1939 = vmatpush1.xpose.msra.mxu0 0.0
  %1940 = vmatprep.subr.mxu0 0.0
  %1941 = vmatpush1.xpose.msra.mxu0 0.0
  %1942 = vmatprep.subr.mxu0 0.0
  %1943 = vmatpush1.xpose.msra.mxu0 0.0
  %1944 = vmatprep.subr.mxu0 0.0
  %1945 = vmatpush1.xpose.msra.mxu0 0.0
  %1946 = vmatprep.subr.mxu0 0.0
  %1947 = vmatpush1.xpose.msra.mxu0 0.0
  %1948 = vmatprep.subr.mxu0 0.0
  %1949 = vmatpush1.xpose.msra.mxu0 0.0
  %1950 = vmatprep.subr.mxu0 0.0
  %1951 = vmatpush1.xpose.msra.mxu0 0.0
  %1952 = vmatprep.subr.mxu0 0.0
  %1953 = vmatpush1.xpose.msra.mxu0 0.0
  %1954 = vmatprep.subr.mxu0 0.0
  %1955 = vmatpush1.xpose.msra.mxu0 0.0
  %1956 = vmatprep.subr.mxu0 0.0
  %1957 = vmatpush1.xpose.msra.mxu0 0.0
  %1958 = vmatprep.subr.mxu0 0.0
  %1959 = vmatpush1.xpose.msra.mxu0 0.0
  %1960 = vmatprep.subr.mxu0 0.0
  %1961 = vmatpush1.xpose.msra.mxu0 0.0
  %1962 = vmatprep.subr.mxu0 0.0
  %1963 = vmatpush1.xpose.msra.mxu0 0.0
  %1964 = vmatprep.subr.mxu0 0.0
  %1965 = vmatpush1.xpose.msra.mxu0 0.0
  %1966 = vmatprep.subr.mxu0 0.0
  %1967 = vmatpush1.xpose.msra.mxu0 0.0
  %1968 = vmatprep.subr.mxu0 0.0
  %1969 = vmatpush1.xpose.msra.mxu0 0.0
  %1970 = vmatprep.subr.mxu0 0.0
  %1971 = vmatpush1.xpose.msra.mxu0 0.0
  %1972 = vmatprep.subr.mxu0 0.0
  %1973 = vmatpush1.xpose.msra.mxu0 0.0
  %1974 = vmatprep.subr.mxu0 0.0
  %1975 = vmatpush1.xpose.msra.mxu0 0.0
  %1976 = vmatprep.mubr.f32.mxu0 0.0
  %1977 = vmatmul.mubr.f32.gmra.mrb[0].mxu0 %v1907
  %v1978 = vpop.f32.mrb[0].mxu0
  %v1979 = vadd.f32 0.0, %v1978
  %v1980 = vpop.f32.mrb[0].mxu0
  %1981 = vdwg.mxu0
  %1982 = vst.msk [vmem:[%s10] sm:$0xff] %vm377, %v662
  %1983 = vst.msk [vmem:[%s10 + $0x8] sm:$0xff] %vm377, %v1064
  %1984 = vst.msk [vmem:[%s10 + $0x10] sm:$0xff] %vm377, %v1466
  %1985 = vst.msk [vmem:[%s10 + $0x18] sm:$0xff] %vm377, %v1868
  %1986 = vst.msk [vmem:[%s10 + $0x20] sm:$0xff] %vm377, %v773
  %1987 = vst.msk [vmem:[%s10 + $0x28] sm:$0xff] %vm377, %v1175
  %1988 = vst.msk [vmem:[%s10 + $0x30] sm:$0xff] %vm377, %v1577
  %1989 = vst.msk [vmem:[%s10 + $0x38] sm:$0xff] %vm377, %v1979
  // Predicated region
  $region38: #{transformer_forward.16} parent=0 // pred_check
    _
  $region39: #{transformer_forward.16} parent=0 // pred_check_branch
    %1991 = sbr.rel (0) target = $region41
  $region40: #{transformer_forward.16} parent=0 // pred_region
    _
  $region41: #{transformer_forward.16} parent=0 // pred_fallthru
    _
  // Predicated region
  $region42: #{transformer_forward.16} parent=0 // pred_check
    _
  $region43: #{transformer_forward.16} parent=0 // pred_check_branch
    %1993 = sbr.rel (0) target = $region45
  $region44: #{transformer_forward.16} parent=0 // pred_region
    _
  $region45: #{transformer_forward.16} parent=0 // pred_fallthru
    _
  // Predicated region
  $region46: #{transformer_forward.16} parent=0 // pred_check
    _
  $region47: #{transformer_forward.16} parent=0 // pred_check_branch
    %1995 = sbr.rel (0) target = $region49
  $region48: #{transformer_forward.16} parent=0 // pred_region
    _
  $region49: #{transformer_forward.16} parent=0 // pred_fallthru
    _
  // Predicated region
  $region50: #{transformer_forward.16} parent=0 // pred_check
    _
  $region51: #{transformer_forward.16} parent=0 // pred_check_branch
    %1997 = sbr.rel (0) target = $region53
  $region52: #{transformer_forward.16} parent=0 // pred_region
    _
  $region53: #{transformer_forward.16} parent=0 // pred_fallthru
    _

</llo_original>
